<compile_context>
chip_gen: v7x
topology: tpu7x:2x2x1
jax: 0.10.0
libtpu: 0.0.40
codegen_flags: <defaults>
</compile_context>

<pallas_src>
import math
import functools

import jax
import jax.numpy as jnp
from jax.experimental import pallas as pl
from jax.experimental.pallas import tpu as pltpu

EPS = 1e-5            # LayerNorm default eps
LEAKY_SLOPE = 0.01    # LeakyReLU default negative_slope


# ---------------------------------------------------------------------------
# In-kernel helpers
# ---------------------------------------------------------------------------
def _layernorm(x, gamma, beta):
    # x: [rows, N], gamma/beta: [1, N]; biased variance (PyTorch LayerNorm). f32 math.
    mean = jnp.mean(x, axis=-1, keepdims=True)
    var = jnp.mean(jnp.square(x - mean), axis=-1, keepdims=True)
    inv = jax.lax.rsqrt(var + EPS)
    return (x - mean) * inv * gamma + beta


def _leaky_relu(x):
    return jnp.where(x >= 0.0, x, LEAKY_SLOPE * x)


# ---------------------------------------------------------------------------
# Fused kernel body: one grid step == one encoder layer.
#   grid = (num_layers,)  ["arbitrary": x scratch carries state across layers]
#   resident inputs : ids [BS,1] int32, emb [V,D] f32, pe [S,D] f32, meta-head params
#   streamed inputs : per-layer stacks with leading dim L, block (1, ...), all weights
#                     pre-transposed to [in,out] (bf16); biases / LN params f32.
#   output          : [B, n_meta] f32, resident block, written at the last layer.
#   scratch         : x [B*S, D] f32 activations, persistent across grid steps.
# ---------------------------------------------------------------------------
def fused_layer_kernel(ids_ref, emb_ref, pe_ref,
                       wqkv_ref, bqkv_ref, wo_ref, bo_ref,
                       ln1_w_ref, ln1_b_ref, w1_ref, b1_ref,
                       w2_ref, b2_ref, ln2_w_ref, ln2_b_ref,
                       hw1_ref, hb1_ref, hg1_ref, hbe1_ref,
                       hw2_ref, hb2_ref, hg2_ref, hbe2_ref,
                       hw3_ref, hb3_ref,
                       out_ref,
                       x_ref,
                       *, nhead, seq_len, batch, mxu_dtype):
    layer = pl.program_id(0)
    last_layer = pl.num_programs(0) - 1
    bs = batch * seq_len
    vocab, d = emb_ref.shape
    hd = d // nhead

    # ---- layer 0: embedding lookup (one-hot matmul at toy vocab) + PE add ---------
    @pl.when(layer == 0)
    def _embed():
        ids = ids_ref[...]                                           # [BS, 1] int32
        iota = jax.lax.broadcasted_iota(jnp.int32, (bs, vocab), 1)
        onehot = (iota == ids).astype(jnp.float32)                   # [BS, V]
        x0 = jnp.dot(onehot, emb_ref[...], preferred_element_type=jnp.float32)
        # PE is [S, D]; broadcast over batch in-kernel (no host-side tile).
        x0 = x0.reshape(batch, seq_len, d) + pe_ref[...][None, :, :]
        x_ref[...] = x0.reshape(bs, d)

    x = x_ref[...]                                                   # [BS, D] f32
    xm = x.astype(mxu_dtype)

    # ---- multi-head self-attention (post-norm encoder layer) ----------------------
    # Q columns of wqkv/bqkv carry the 1/sqrt(hd) scale (folded on the host).
    qkv = jnp.dot(xm, wqkv_ref[0], preferred_element_type=jnp.float32) + bqkv_ref[0]
    qkv_m = qkv.astype(mxu_dtype)                                    # [BS, 3D]

    head_ctx = []
    for h in range(nhead):                                           # static head loop
        q_h = qkv_m[:, h * hd:(h + 1) * hd].reshape(batch, seq_len, hd)
        k_h = qkv_m[:, d + h * hd:d + (h + 1) * hd].reshape(batch, seq_len, hd)
        v_h = qkv_m[:, 2 * d + h * hd:2 * d + (h + 1) * hd].reshape(batch, seq_len, hd)
        # batch-separated scores: [B, S, S] per head — no cross-batch mask needed.
        s = jnp.einsum('bqd,bkd->bqk', q_h, k_h,
                       preferred_element_type=jnp.float32)
        s = s - jnp.max(s, axis=-1, keepdims=True)
        p = jnp.exp(s)
        p = p * pl.reciprocal(jnp.sum(p, axis=-1, keepdims=True), approx=True)
        ctx = jnp.einsum('bqk,bkd->bqd', p.astype(mxu_dtype), v_h,
                         preferred_element_type=jnp.float32)         # [B, S, hd]
        head_ctx.append(ctx.reshape(bs, hd))
    attn = jnp.concatenate(head_ctx, axis=-1)                        # [BS, D]
    attn = jnp.dot(attn.astype(mxu_dtype), wo_ref[0],
                   preferred_element_type=jnp.float32) + bo_ref[0]

    x1 = _layernorm(x + attn, ln1_w_ref[0], ln1_b_ref[0])

    # ---- feed-forward (ReLU, PyTorch default activation) ---------------------------
    ff = jnp.dot(x1.astype(mxu_dtype), w1_ref[0],
                 preferred_element_type=jnp.float32) + b1_ref[0]
    ff = jnp.maximum(ff, 0.0)
    ff = jnp.dot(ff.astype(mxu_dtype), w2_ref[0],
                 preferred_element_type=jnp.float32) + b2_ref[0]
    x2 = _layernorm(x1 + ff, ln2_w_ref[0], ln2_b_ref[0])

    x_ref[...] = x2                                                  # carry to next layer

    # ---- last layer: encoder(...)[0] + meta MLP head -------------------------------
    @pl.when(layer == last_layer)
    def _meta_head():
        enc0 = x2.reshape(batch, seq_len, d)[:, 0, :]                # [B, D]
        h1 = jnp.dot(enc0.astype(mxu_dtype), hw1_ref[...],
                     preferred_element_type=jnp.float32) + hb1_ref[...]
        h1 = _leaky_relu(_layernorm(h1, hg1_ref[...], hbe1_ref[...]))
        h2 = jnp.dot(h1.astype(mxu_dtype), hw2_ref[...],
                     preferred_element_type=jnp.float32) + hb2_ref[...]
        h2 = _leaky_relu(_layernorm(h2, hg2_ref[...], hbe2_ref[...]))
        out_ref[...] = jnp.dot(h2.astype(mxu_dtype), hw3_ref[...],
                               preferred_element_type=jnp.float32) + hb3_ref[...]


# ---------------------------------------------------------------------------
# Host-side: parameter init (PyTorch conventions), packing, wrapper
# ---------------------------------------------------------------------------
def positional_encoding(seq_len, d):
    position = jnp.arange(seq_len, dtype=jnp.float32)[:, None]
    div_term = jnp.exp(jnp.arange(0, d, 2, dtype=jnp.float32)
                       * (-math.log(10000.0) / d))
    pe = jnp.zeros((seq_len, d), dtype=jnp.float32)
    pe = pe.at[:, 0::2].set(jnp.sin(position * div_term))
    pe = pe.at[:, 1::2].set(jnp.cos(position * div_term))
    return pe                                                         # [S, D]


def _linear_init(key, out_dim, in_dim):
    kw, kb = jax.random.split(key)
    bound = 1.0 / math.sqrt(in_dim)
    w = jax.random.uniform(kw, (out_dim, in_dim), jnp.float32, -bound, bound)
    b = jax.random.uniform(kb, (1, out_dim), jnp.float32, -bound, bound)
    return w, b


def init_params(key, embedding_dim, vocab_size, nhead, num_layers, n_meta,
                dim_feedforward=2048):
    d, f = embedding_dim, dim_feedforward
    keys = jax.random.split(key, 2 + num_layers)
    params = {"embedding": jax.random.normal(keys[0], (vocab_size, d), jnp.float32)}

    layers = []
    for li in range(num_layers):
        lk = jax.random.split(keys[1 + li], 4)
        wqkv, bqkv = _linear_init(lk[0], 3 * d, d)     # PyTorch layout: [out, in]
        wo, bo = _linear_init(lk[1], d, d)
        w1, b1 = _linear_init(lk[2], f, d)
        w2, b2 = _linear_init(lk[3], d, f)
        layers.append(dict(
            wqkv=wqkv, bqkv=bqkv, wo=wo, bo=bo,
            ln1_w=jnp.ones((1, d), jnp.float32), ln1_b=jnp.zeros((1, d), jnp.float32),
            w1=w1, b1=b1, w2=w2, b2=b2,
            ln2_w=jnp.ones((1, d), jnp.float32), ln2_b=jnp.zeros((1, d), jnp.float32)))
    params["layers"] = layers

    hk = jax.random.split(keys[1 + num_layers], 3)
    hw1, hb1 = _linear_init(hk[0], d // 2, d)
    hw2, hb2 = _linear_init(hk[1], n_meta * 2, d // 2)
    hw3, hb3 = _linear_init(hk[2], n_meta, n_meta * 2)
    params["head"] = dict(
        w1=hw1, b1=hb1,
        g1=jnp.ones((1, d // 2), jnp.float32), be1=jnp.zeros((1, d // 2), jnp.float32),
        w2=hw2, b2=hb2,
        g2=jnp.ones((1, n_meta * 2), jnp.float32), be2=jnp.zeros((1, n_meta * 2), jnp.float32),
        w3=hw3, b3=hb3)
    return params


def pack_params(params, nhead, mxu_dtype=jnp.bfloat16):
    """Pre-transpose to [in,out], fold attention scale, stack per-layer, cast weights
    (matmul operands only) to `mxu_dtype`; biases/LN params stay f32."""
    d = params["embedding"].shape[1]
    hd = d // nhead
    scale = 1.0 / math.sqrt(hd)
    qkv_scale = (jnp.ones((3 * d,), jnp.float32).at[:d].set(scale))[None, :]  # [1, 3D]

    layers = params["layers"]

    def stk(fn):
        return jnp.stack([fn(lp) for lp in layers])

    def wcast(a):
        return a.astype(mxu_dtype)

    packed = dict(
        emb=params["embedding"],                                   # [V, D]  f32
        wqkv=stk(lambda lp: wcast(lp["wqkv"].T * qkv_scale)),      # [L, D, 3D]
        bqkv=stk(lambda lp: lp["bqkv"] * qkv_scale),               # [L, 1, 3D] f32
        wo=stk(lambda lp: wcast(lp["wo"].T)),                      # [L, D, D]
        bo=stk(lambda lp: lp["bo"]),                               # [L, 1, D]
        ln1_w=stk(lambda lp: lp["ln1_w"]), ln1_b=stk(lambda lp: lp["ln1_b"]),
        w1=stk(lambda lp: wcast(lp["w1"].T)),                      # [L, D, F]
        b1=stk(lambda lp: lp["b1"]),                               # [L, 1, F]
        w2=stk(lambda lp: wcast(lp["w2"].T)),                      # [L, F, D]
        b2=stk(lambda lp: lp["b2"]),                               # [L, 1, D]
        ln2_w=stk(lambda lp: lp["ln2_w"]), ln2_b=stk(lambda lp: lp["ln2_b"]),
    )
    h = params["head"]
    packed.update(
        hw1=wcast(h["w1"].T), hb1=h["b1"], hg1=h["g1"], hbe1=h["be1"],
        hw2=wcast(h["w2"].T), hb2=h["b2"], hg2=h["g2"], hbe2=h["be2"],
        hw3=wcast(h["w3"].T), hb3=h["b3"])
    return packed


def basic_transformer_forward(token_ids, packed, nhead):
    """token_ids: [S, B] int32 (PyTorch seq-first). Returns [B, n_meta] float32."""
    seq_len, batch = token_ids.shape
    vocab, d = packed["emb"].shape
    num_layers = packed["wqkv"].shape[0]
    f = packed["w1"].shape[2]
    d_half = packed["hw1"].shape[1]
    n2 = packed["hw2"].shape[1]
    n_meta = packed["hw3"].shape[1]
    bs = batch * seq_len
    mxu_dtype = packed["wqkv"].dtype

    # batch-major flat ids: row = b*S + s (host-side glue, tiny)
    ids_flat = token_ids.T.reshape(bs, 1).astype(jnp.int32)
    pe = positional_encoding(seq_len, d)                               # [S, D]

    def full(shape):          # resident: full-array block, constant index
        return pl.BlockSpec(shape, lambda l, _n=len(shape): (0,) * _n)

    def per_layer(shape):     # streamed along the layer grid axis
        nd = len(shape)
        return pl.BlockSpec((1,) + shape, lambda l, _n=nd: (l,) + (0,) * _n)

    in_specs = [
        full((bs, 1)), full((vocab, d)), full((seq_len, d)),
        per_layer((d, 3 * d)), per_layer((1, 3 * d)),
        per_layer((d, d)), per_layer((1, d)),
        per_layer((1, d)), per_layer((1, d)),
        per_layer((d, f)), per_layer((1, f)),
        per_layer((f, d)), per_layer((1, d)),
        per_layer((1, d)), per_layer((1, d)),
        full((d, d_half)), full((1, d_half)), full((1, d_half)), full((1, d_half)),
        full((d_half, n2)), full((1, n2)), full((1, n2)), full((1, n2)),
        full((n2, n_meta)), full((1, n_meta)),
    ]
    out_specs = pl.BlockSpec((batch, n_meta), lambda l: (0, 0))

    args = (ids_flat, packed["emb"], pe,
            packed["wqkv"], packed["bqkv"], packed["wo"], packed["bo"],
            packed["ln1_w"], packed["ln1_b"], packed["w1"], packed["b1"],
            packed["w2"], packed["b2"], packed["ln2_w"], packed["ln2_b"],
            packed["hw1"], packed["hb1"], packed["hg1"], packed["hbe1"],
            packed["hw2"], packed["hb2"], packed["hg2"], packed["hbe2"],
            packed["hw3"], packed["hb3"])

    return pl.pallas_call(
        functools.partial(fused_layer_kernel, nhead=nhead, seq_len=seq_len,
                          batch=batch, mxu_dtype=mxu_dtype),
        out_shape=jax.ShapeDtypeStruct((batch, n_meta), jnp.float32),
        grid_spec=pltpu.PrefetchScalarGridSpec(
            num_scalar_prefetch=0,
            grid=(num_layers,),
            in_specs=in_specs,
            out_specs=out_specs,
            scratch_shapes=[pltpu.VMEM((bs, d), jnp.float32)]),
        compiler_params=pltpu.CompilerParams(
            dimension_semantics=("arbitrary",),          # layer axis carries x state
            # Re-derive for real model dims (D=512, F=2048, L=6) and v7x's 64 MiB VMEM;
            # layer streaming + bf16 weights already cap residency at ~2 layers.
            vmem_limit_bytes=48 * 1024 * 1024),
    )(*args)


# ---------------------------------------------------------------------------
if __name__ == "__main__":
    SEQ_LEN, BATCH = 8, 2
    EMBED_DIM, VOCAB, NHEAD, NUM_LAYERS, N_META = 32, 50, 4, 2, 6

    key = jax.random.PRNGKey(0)
    k_params, k_tokens = jax.random.split(key)
    params = init_params(k_params, EMBED_DIM, VOCAB, NHEAD, NUM_LAYERS, N_META)
    packed = pack_params(params, NHEAD)   # bf16 MXU feeds; pass mxu_dtype=jnp.float32 for exact-f32 parity

    # input_batch: token ids, shape [seq_len, batch]  (PyTorch seq-first)
    input_batch = jax.random.randint(k_tokens, (SEQ_LEN, BATCH), 0, VOCAB, jnp.int32)

    meta = basic_transformer_forward(input_batch, packed, NHEAD)
    meta = jax.block_until_ready(meta)
    assert meta.shape == (BATCH, N_META)
    assert bool(jnp.all(jnp.isfinite(meta)))
    print("KERNEL_OK")
</pallas_src>

<mosaic_0001>
module attributes {stable_mosaic.version = 11 : i64} {
  func.func @fused_layer_kernel(%arg0: i32, %arg1: memref<16x1xi32, #tpu.memory_space<vmem>>, %arg2: memref<50x32xf32, #tpu.memory_space<vmem>>, %arg3: memref<8x32xf32, #tpu.memory_space<vmem>>, %arg4: memref<1x32x96xbf16, #tpu.memory_space<vmem>>, %arg5: memref<1x1x96xf32, #tpu.memory_space<vmem>>, %arg6: memref<1x32x32xbf16, #tpu.memory_space<vmem>>, %arg7: memref<1x1x32xf32, #tpu.memory_space<vmem>>, %arg8: memref<1x1x32xf32, #tpu.memory_space<vmem>>, %arg9: memref<1x1x32xf32, #tpu.memory_space<vmem>>, %arg10: memref<1x32x2048xbf16, #tpu.memory_space<vmem>>, %arg11: memref<1x1x2048xf32, #tpu.memory_space<vmem>>, %arg12: memref<1x2048x32xbf16, #tpu.memory_space<vmem>>, %arg13: memref<1x1x32xf32, #tpu.memory_space<vmem>>, %arg14: memref<1x1x32xf32, #tpu.memory_space<vmem>>, %arg15: memref<1x1x32xf32, #tpu.memory_space<vmem>>, %arg16: memref<32x16xbf16, #tpu.memory_space<vmem>>, %arg17: memref<1x16xf32, #tpu.memory_space<vmem>>, %arg18: memref<1x16xf32, #tpu.memory_space<vmem>>, %arg19: memref<1x16xf32, #tpu.memory_space<vmem>>, %arg20: memref<16x12xbf16, #tpu.memory_space<vmem>>, %arg21: memref<1x12xf32, #tpu.memory_space<vmem>>, %arg22: memref<1x12xf32, #tpu.memory_space<vmem>>, %arg23: memref<1x12xf32, #tpu.memory_space<vmem>>, %arg24: memref<12x6xbf16, #tpu.memory_space<vmem>>, %arg25: memref<1x6xf32, #tpu.memory_space<vmem>>, %arg26: memref<2x6xf32, #tpu.memory_space<vmem>>, %arg27: memref<16x32xf32, #tpu.memory_space<vmem>>) attributes {dimension_semantics = [#tpu.dimension_semantics<arbitrary>], iteration_bounds = array<i64: 2>, scalar_prefetch = 0 : i64, scratch_operands = 1 : i64, tpu.core_type = #tpu.core_type<tc>, window_params = [{pipeline_mode = #tpu.pipeline_mode<synchronous>, transform_indices = @transform_0, window_bounds = array<i64: 16, 1>}, {pipeline_mode = #tpu.pipeline_mode<synchronous>, transform_indices = @transform_1, window_bounds = array<i64: 50, 32>}, {pipeline_mode = #tpu.pipeline_mode<synchronous>, transform_indices = @transform_2, window_bounds = array<i64: 8, 32>}, {transform_indices = @transform_3, window_bounds = array<i64: 1, 32, 96>}, {transform_indices = @transform_4, window_bounds = array<i64: 1, 1, 96>}, {transform_indices = @transform_5, window_bounds = array<i64: 1, 32, 32>}, {transform_indices = @transform_6, window_bounds = array<i64: 1, 1, 32>}, {transform_indices = @transform_7, window_bounds = array<i64: 1, 1, 32>}, {transform_indices = @transform_8, window_bounds = array<i64: 1, 1, 32>}, {transform_indices = @transform_9, window_bounds = array<i64: 1, 32, 2048>}, {transform_indices = @transform_10, window_bounds = array<i64: 1, 1, 2048>}, {transform_indices = @transform_11, window_bounds = array<i64: 1, 2048, 32>}, {transform_indices = @transform_12, window_bounds = array<i64: 1, 1, 32>}, {transform_indices = @transform_13, window_bounds = array<i64: 1, 1, 32>}, {transform_indices = @transform_14, window_bounds = array<i64: 1, 1, 32>}, {pipeline_mode = #tpu.pipeline_mode<synchronous>, transform_indices = @transform_15, window_bounds = array<i64: 32, 16>}, {pipeline_mode = #tpu.pipeline_mode<synchronous>, transform_indices = @transform_16, window_bounds = array<i64: 1, 16>}, {pipeline_mode = #tpu.pipeline_mode<synchronous>, transform_indices = @transform_17, window_bounds = array<i64: 1, 16>}, {pipeline_mode = #tpu.pipeline_mode<synchronous>, transform_indices = @transform_18, window_bounds = array<i64: 1, 16>}, {pipeline_mode = #tpu.pipeline_mode<synchronous>, transform_indices = @transform_19, window_bounds = array<i64: 16, 12>}, {pipeline_mode = #tpu.pipeline_mode<synchronous>, transform_indices = @transform_20, window_bounds = array<i64: 1, 12>}, {pipeline_mode = #tpu.pipeline_mode<synchronous>, transform_indices = @transform_21, window_bounds = array<i64: 1, 12>}, {pipeline_mode = #tpu.pipeline_mode<synchronous>, transform_indices = @transform_22, window_bounds = array<i64: 1, 12>}, {pipeline_mode = #tpu.pipeline_mode<synchronous>, transform_indices = @transform_23, window_bounds = array<i64: 12, 6>}, {pipeline_mode = #tpu.pipeline_mode<synchronous>, transform_indices = @transform_24, window_bounds = array<i64: 1, 6>}, {pipeline_mode = #tpu.pipeline_mode<synchronous>, transform_indices = @transform_25, window_bounds = array<i64: 2, 6>}]} {
    %c0_i32 = arith.constant 0 : i32
    %0 = arith.cmpi eq, %arg0, %c0_i32 : i32
    %1 = arith.extui %0 : i1 to i32
    %c0_i32_0 = arith.constant 0 : i32
    %2 = arith.cmpi ne, %1, %c0_i32_0 : i32
    scf.if %2 {
      %c0_71 = arith.constant 0 : index
      %c0_72 = arith.constant 0 : index
      %178 = vector.load %arg1[%c0_71, %c0_72] : memref<16x1xi32, #tpu.memory_space<vmem>>, vector<16x1xi32>
      %179 = tpu.iota {dimensions = array<i32: 1>} : vector<16x50xi32>
      %180 = vector.broadcast %178 : vector<16x1xi32> to vector<16x50xi32>
      %181 = arith.cmpi eq, %179, %180 : vector<16x50xi32>
      %182 = arith.extui %181 : vector<16x50xi1> to vector<16x50xi32>
      %183 = arith.sitofp %182 : vector<16x50xi32> to vector<16x50xf32>
      %c0_73 = arith.constant 0 : index
      %c0_74 = arith.constant 0 : index
      %184 = vector.load %arg2[%c0_73, %c0_74] : memref<50x32xf32, #tpu.memory_space<vmem>>, vector<50x32xf32>
      %cst_75 = arith.constant dense<0.000000e+00> : vector<16x32xf32>
      %185 = tpu.matmul %183, %184, %cst_75 {dimension_numbers = #tpu.dot_dimension_numbers<[1], [0], [0], [1], [0, 0, 1, 1], [], []>} : vector<16x50xf32>, vector<50x32xf32>, vector<16x32xf32> -> vector<16x32xf32>
      %186 = vector.shape_cast %185 : vector<16x32xf32> to vector<2x8x32xf32>
      %c0_76 = arith.constant 0 : index
      %c0_77 = arith.constant 0 : index
      %187 = vector.load %arg3[%c0_76, %c0_77] : memref<8x32xf32, #tpu.memory_space<vmem>>, vector<8x32xf32>
      %188 = vector.shape_cast %187 : vector<8x32xf32> to vector<1x8x32xf32>
      %189 = vector.broadcast %188 : vector<1x8x32xf32> to vector<2x8x32xf32>
      %190 = arith.addf %186, %189 : vector<2x8x32xf32>
      %191 = vector.shape_cast %190 : vector<2x8x32xf32> to vector<16x32xf32>
      %c0_78 = arith.constant 0 : index
      %c0_79 = arith.constant 0 : index
      %192 = vector.load %arg27[%c0_78, %c0_79] : memref<16x32xf32, #tpu.memory_space<vmem>>, vector<16x32xf32>
      tpu.vector_store %arg27[%c0_78, %c0_79], %191 {strides = array<i32>} : memref<16x32xf32, #tpu.memory_space<vmem>>, vector<16x32xf32>,
    } else {
    }
    %c0 = arith.constant 0 : index
    %c0_1 = arith.constant 0 : index
    %3 = vector.load %arg27[%c0, %c0_1] : memref<16x32xf32, #tpu.memory_space<vmem>>, vector<16x32xf32>
    %4 = arith.truncf %3 : vector<16x32xf32> to vector<16x32xbf16>
    %c0_2 = arith.constant 0 : index
    %c0_3 = arith.constant 0 : index
    %c0_4 = arith.constant 0 : index
    %5 = vector.load %arg4[%c0_2, %c0_3, %c0_4] : memref<1x32x96xbf16, #tpu.memory_space<vmem>>, vector<1x32x96xbf16>
    %6 = vector.shape_cast %5 : vector<1x32x96xbf16> to vector<32x96xbf16>
    %cst = arith.constant dense<0.000000e+00> : vector<16x96xf32>
    %7 = tpu.matmul %4, %6, %cst {dimension_numbers = #tpu.dot_dimension_numbers<[1], [0], [0], [1], [0, 0, 1, 1], [], []>} : vector<16x32xbf16>, vector<32x96xbf16>, vector<16x96xf32> -> vector<16x96xf32>
    %c0_5 = arith.constant 0 : index
    %c0_6 = arith.constant 0 : index
    %c0_7 = arith.constant 0 : index
    %8 = vector.load %arg5[%c0_5, %c0_6, %c0_7] : memref<1x1x96xf32, #tpu.memory_space<vmem>>, vector<1x1x96xf32>
    %9 = vector.shape_cast %8 : vector<1x1x96xf32> to vector<1x96xf32>
    %10 = vector.broadcast %9 : vector<1x96xf32> to vector<16x96xf32>
    %11 = arith.addf %7, %10 : vector<16x96xf32>
    %12 = arith.truncf %11 : vector<16x96xf32> to vector<16x96xbf16>
    %13 = vector.extract_strided_slice %12 {offsets = [0, 0], sizes = [16, 8], strides = [1, 1]} : vector<16x96xbf16> to vector<16x8xbf16>
    %14 = vector.shape_cast %13 : vector<16x8xbf16> to vector<2x8x8xbf16>
    %15 = vector.extract_strided_slice %12 {offsets = [0, 32], sizes = [16, 8], strides = [1, 1]} : vector<16x96xbf16> to vector<16x8xbf16>
    %16 = vector.shape_cast %15 : vector<16x8xbf16> to vector<2x8x8xbf16>
    %17 = vector.extract_strided_slice %12 {offsets = [0, 64], sizes = [16, 8], strides = [1, 1]} : vector<16x96xbf16> to vector<16x8xbf16>
    %18 = vector.shape_cast %17 : vector<16x8xbf16> to vector<2x8x8xbf16>
    "tpu.trace_start"() <{level = 10 : i32, message = "bqd,bkd->bqk"}> : () -> ()
    %cst_8 = arith.constant dense<0.000000e+00> : vector<2x8x8xf32>
    %19 = tpu.matmul %14, %16, %cst_8 {dimension_numbers = #tpu.dot_dimension_numbers<[2], [2], [1], [1], [0, 0, 0, 1, 1, 1], [0], [0]>} : vector<2x8x8xbf16>, vector<2x8x8xbf16>, vector<2x8x8xf32> -> vector<2x8x8xf32>
    "tpu.trace_stop"() : () -> ()
    %cst_9 = arith.constant dense<0xFF800000> : vector<2x8xf32>
    %20 = vector.multi_reduction <maximumf>, %19, %cst_9 [2] : vector<2x8x8xf32> to vector<2x8xf32>
    %21 = vector.shape_cast %20 : vector<2x8xf32> to vector<2x8x1xf32>
    %22 = vector.broadcast %21 : vector<2x8x1xf32> to vector<2x8x8xf32>
    %23 = arith.subf %19, %22 : vector<2x8x8xf32>
    %24 = math.exp %23 : vector<2x8x8xf32>
    %cst_10 = arith.constant dense<0.000000e+00> : vector<2x8xf32>
    %25 = vector.multi_reduction <add>, %24, %cst_10 [2] : vector<2x8x8xf32> to vector<2x8xf32>
    %26 = vector.shape_cast %25 : vector<2x8xf32> to vector<2x8x1xf32>
    %27 = tpu.reciprocal %26 {approx = true} : vector<2x8x1xf32> -> vector<2x8x1xf32>
    %28 = vector.broadcast %27 : vector<2x8x1xf32> to vector<2x8x8xf32>
    %29 = arith.mulf %24, %28 : vector<2x8x8xf32>
    %30 = arith.truncf %29 : vector<2x8x8xf32> to vector<2x8x8xbf16>
    "tpu.trace_start"() <{level = 10 : i32, message = "bqk,bkd->bqd"}> : () -> ()
    %cst_11 = arith.constant dense<0.000000e+00> : vector<2x8x8xf32>
    %31 = tpu.matmul %30, %18, %cst_11 {dimension_numbers = #tpu.dot_dimension_numbers<[2], [1], [1], [2], [0, 0, 0, 1, 1, 2], [0], [0]>} : vector<2x8x8xbf16>, vector<2x8x8xbf16>, vector<2x8x8xf32> -> vector<2x8x8xf32>
    "tpu.trace_stop"() : () -> ()
    %32 = vector.shape_cast %31 : vector<2x8x8xf32> to vector<16x8xf32>
    %33 = vector.extract_strided_slice %12 {offsets = [0, 8], sizes = [16, 8], strides = [1, 1]} : vector<16x96xbf16> to vector<16x8xbf16>
    %34 = vector.shape_cast %33 : vector<16x8xbf16> to vector<2x8x8xbf16>
    %35 = vector.extract_strided_slice %12 {offsets = [0, 40], sizes = [16, 8], strides = [1, 1]} : vector<16x96xbf16> to vector<16x8xbf16>
    %36 = vector.shape_cast %35 : vector<16x8xbf16> to vector<2x8x8xbf16>
    %37 = vector.extract_strided_slice %12 {offsets = [0, 72], sizes = [16, 8], strides = [1, 1]} : vector<16x96xbf16> to vector<16x8xbf16>
    %38 = vector.shape_cast %37 : vector<16x8xbf16> to vector<2x8x8xbf16>
    "tpu.trace_start"() <{level = 10 : i32, message = "bqd,bkd->bqk"}> : () -> ()
    %cst_12 = arith.constant dense<0.000000e+00> : vector<2x8x8xf32>
    %39 = tpu.matmul %34, %36, %cst_12 {dimension_numbers = #tpu.dot_dimension_numbers<[2], [2], [1], [1], [0, 0, 0, 1, 1, 1], [0], [0]>} : vector<2x8x8xbf16>, vector<2x8x8xbf16>, vector<2x8x8xf32> -> vector<2x8x8xf32>
    "tpu.trace_stop"() : () -> ()
    %cst_13 = arith.constant dense<0xFF800000> : vector<2x8xf32>
    %40 = vector.multi_reduction <maximumf>, %39, %cst_13 [2] : vector<2x8x8xf32> to vector<2x8xf32>
    %41 = vector.shape_cast %40 : vector<2x8xf32> to vector<2x8x1xf32>
    %42 = vector.broadcast %41 : vector<2x8x1xf32> to vector<2x8x8xf32>
    %43 = arith.subf %39, %42 : vector<2x8x8xf32>
    %44 = math.exp %43 : vector<2x8x8xf32>
    %cst_14 = arith.constant dense<0.000000e+00> : vector<2x8xf32>
    %45 = vector.multi_reduction <add>, %44, %cst_14 [2] : vector<2x8x8xf32> to vector<2x8xf32>
    %46 = vector.shape_cast %45 : vector<2x8xf32> to vector<2x8x1xf32>
    %47 = tpu.reciprocal %46 {approx = true} : vector<2x8x1xf32> -> vector<2x8x1xf32>
    %48 = vector.broadcast %47 : vector<2x8x1xf32> to vector<2x8x8xf32>
    %49 = arith.mulf %44, %48 : vector<2x8x8xf32>
    %50 = arith.truncf %49 : vector<2x8x8xf32> to vector<2x8x8xbf16>
    "tpu.trace_start"() <{level = 10 : i32, message = "bqk,bkd->bqd"}> : () -> ()
    %cst_15 = arith.constant dense<0.000000e+00> : vector<2x8x8xf32>
    %51 = tpu.matmul %50, %38, %cst_15 {dimension_numbers = #tpu.dot_dimension_numbers<[2], [1], [1], [2], [0, 0, 0, 1, 1, 2], [0], [0]>} : vector<2x8x8xbf16>, vector<2x8x8xbf16>, vector<2x8x8xf32> -> vector<2x8x8xf32>
    "tpu.trace_stop"() : () -> ()
    %52 = vector.shape_cast %51 : vector<2x8x8xf32> to vector<16x8xf32>
    %53 = vector.extract_strided_slice %12 {offsets = [0, 16], sizes = [16, 8], strides = [1, 1]} : vector<16x96xbf16> to vector<16x8xbf16>
    %54 = vector.shape_cast %53 : vector<16x8xbf16> to vector<2x8x8xbf16>
    %55 = vector.extract_strided_slice %12 {offsets = [0, 48], sizes = [16, 8], strides = [1, 1]} : vector<16x96xbf16> to vector<16x8xbf16>
    %56 = vector.shape_cast %55 : vector<16x8xbf16> to vector<2x8x8xbf16>
    %57 = vector.extract_strided_slice %12 {offsets = [0, 80], sizes = [16, 8], strides = [1, 1]} : vector<16x96xbf16> to vector<16x8xbf16>
    %58 = vector.shape_cast %57 : vector<16x8xbf16> to vector<2x8x8xbf16>
    "tpu.trace_start"() <{level = 10 : i32, message = "bqd,bkd->bqk"}> : () -> ()
    %cst_16 = arith.constant dense<0.000000e+00> : vector<2x8x8xf32>
    %59 = tpu.matmul %54, %56, %cst_16 {dimension_numbers = #tpu.dot_dimension_numbers<[2], [2], [1], [1], [0, 0, 0, 1, 1, 1], [0], [0]>} : vector<2x8x8xbf16>, vector<2x8x8xbf16>, vector<2x8x8xf32> -> vector<2x8x8xf32>
    "tpu.trace_stop"() : () -> ()
    %cst_17 = arith.constant dense<0xFF800000> : vector<2x8xf32>
    %60 = vector.multi_reduction <maximumf>, %59, %cst_17 [2] : vector<2x8x8xf32> to vector<2x8xf32>
    %61 = vector.shape_cast %60 : vector<2x8xf32> to vector<2x8x1xf32>
    %62 = vector.broadcast %61 : vector<2x8x1xf32> to vector<2x8x8xf32>
    %63 = arith.subf %59, %62 : vector<2x8x8xf32>
    %64 = math.exp %63 : vector<2x8x8xf32>
    %cst_18 = arith.constant dense<0.000000e+00> : vector<2x8xf32>
    %65 = vector.multi_reduction <add>, %64, %cst_18 [2] : vector<2x8x8xf32> to vector<2x8xf32>
    %66 = vector.shape_cast %65 : vector<2x8xf32> to vector<2x8x1xf32>
    %67 = tpu.reciprocal %66 {approx = true} : vector<2x8x1xf32> -> vector<2x8x1xf32>
    %68 = vector.broadcast %67 : vector<2x8x1xf32> to vector<2x8x8xf32>
    %69 = arith.mulf %64, %68 : vector<2x8x8xf32>
    %70 = arith.truncf %69 : vector<2x8x8xf32> to vector<2x8x8xbf16>
    "tpu.trace_start"() <{level = 10 : i32, message = "bqk,bkd->bqd"}> : () -> ()
    %cst_19 = arith.constant dense<0.000000e+00> : vector<2x8x8xf32>
    %71 = tpu.matmul %70, %58, %cst_19 {dimension_numbers = #tpu.dot_dimension_numbers<[2], [1], [1], [2], [0, 0, 0, 1, 1, 2], [0], [0]>} : vector<2x8x8xbf16>, vector<2x8x8xbf16>, vector<2x8x8xf32> -> vector<2x8x8xf32>
    "tpu.trace_stop"() : () -> ()
    %72 = vector.shape_cast %71 : vector<2x8x8xf32> to vector<16x8xf32>
    %73 = vector.extract_strided_slice %12 {offsets = [0, 24], sizes = [16, 8], strides = [1, 1]} : vector<16x96xbf16> to vector<16x8xbf16>
    %74 = vector.shape_cast %73 : vector<16x8xbf16> to vector<2x8x8xbf16>
    %75 = vector.extract_strided_slice %12 {offsets = [0, 56], sizes = [16, 8], strides = [1, 1]} : vector<16x96xbf16> to vector<16x8xbf16>
    %76 = vector.shape_cast %75 : vector<16x8xbf16> to vector<2x8x8xbf16>
    %77 = vector.extract_strided_slice %12 {offsets = [0, 88], sizes = [16, 8], strides = [1, 1]} : vector<16x96xbf16> to vector<16x8xbf16>
    %78 = vector.shape_cast %77 : vector<16x8xbf16> to vector<2x8x8xbf16>
    "tpu.trace_start"() <{level = 10 : i32, message = "bqd,bkd->bqk"}> : () -> ()
    %cst_20 = arith.constant dense<0.000000e+00> : vector<2x8x8xf32>
    %79 = tpu.matmul %74, %76, %cst_20 {dimension_numbers = #tpu.dot_dimension_numbers<[2], [2], [1], [1], [0, 0, 0, 1, 1, 1], [0], [0]>} : vector<2x8x8xbf16>, vector<2x8x8xbf16>, vector<2x8x8xf32> -> vector<2x8x8xf32>
    "tpu.trace_stop"() : () -> ()
    %cst_21 = arith.constant dense<0xFF800000> : vector<2x8xf32>
    %80 = vector.multi_reduction <maximumf>, %79, %cst_21 [2] : vector<2x8x8xf32> to vector<2x8xf32>
    %81 = vector.shape_cast %80 : vector<2x8xf32> to vector<2x8x1xf32>
    %82 = vector.broadcast %81 : vector<2x8x1xf32> to vector<2x8x8xf32>
    %83 = arith.subf %79, %82 : vector<2x8x8xf32>
    %84 = math.exp %83 : vector<2x8x8xf32>
    %cst_22 = arith.constant dense<0.000000e+00> : vector<2x8xf32>
    %85 = vector.multi_reduction <add>, %84, %cst_22 [2] : vector<2x8x8xf32> to vector<2x8xf32>
    %86 = vector.shape_cast %85 : vector<2x8xf32> to vector<2x8x1xf32>
    %87 = tpu.reciprocal %86 {approx = true} : vector<2x8x1xf32> -> vector<2x8x1xf32>
    %88 = vector.broadcast %87 : vector<2x8x1xf32> to vector<2x8x8xf32>
    %89 = arith.mulf %84, %88 : vector<2x8x8xf32>
    %90 = arith.truncf %89 : vector<2x8x8xf32> to vector<2x8x8xbf16>
    "tpu.trace_start"() <{level = 10 : i32, message = "bqk,bkd->bqd"}> : () -> ()
    %cst_23 = arith.constant dense<0.000000e+00> : vector<2x8x8xf32>
    %91 = tpu.matmul %90, %78, %cst_23 {dimension_numbers = #tpu.dot_dimension_numbers<[2], [1], [1], [2], [0, 0, 0, 1, 1, 2], [0], [0]>} : vector<2x8x8xbf16>, vector<2x8x8xbf16>, vector<2x8x8xf32> -> vector<2x8x8xf32>
    "tpu.trace_stop"() : () -> ()
    %92 = vector.shape_cast %91 : vector<2x8x8xf32> to vector<16x8xf32>
    %93 = tpu.concatenate %32, %52, %72, %92 in 1 : vector<16x8xf32>, vector<16x8xf32>, vector<16x8xf32>, vector<16x8xf32> -> vector<16x32xf32>
    %94 = arith.truncf %93 : vector<16x32xf32> to vector<16x32xbf16>
    %c0_24 = arith.constant 0 : index
    %c0_25 = arith.constant 0 : index
    %c0_26 = arith.constant 0 : index
    %95 = vector.load %arg6[%c0_24, %c0_25, %c0_26] : memref<1x32x32xbf16, #tpu.memory_space<vmem>>, vector<1x32x32xbf16>
    %96 = vector.shape_cast %95 : vector<1x32x32xbf16> to vector<32x32xbf16>
    %cst_27 = arith.constant dense<0.000000e+00> : vector<16x32xf32>
    %97 = tpu.matmul %94, %96, %cst_27 {dimension_numbers = #tpu.dot_dimension_numbers<[1], [0], [0], [1], [0, 0, 1, 1], [], []>} : vector<16x32xbf16>, vector<32x32xbf16>, vector<16x32xf32> -> vector<16x32xf32>
    %c0_28 = arith.constant 0 : index
    %c0_29 = arith.constant 0 : index
    %c0_30 = arith.constant 0 : index
    %98 = vector.load %arg7[%c0_28, %c0_29, %c0_30] : memref<1x1x32xf32, #tpu.memory_space<vmem>>, vector<1x1x32xf32>
    %99 = vector.shape_cast %98 : vector<1x1x32xf32> to vector<1x32xf32>
    %100 = vector.broadcast %99 : vector<1x32xf32> to vector<16x32xf32>
    %101 = arith.addf %97, %100 : vector<16x32xf32>
    %102 = arith.addf %3, %101 : vector<16x32xf32>
    %c0_31 = arith.constant 0 : index
    %c0_32 = arith.constant 0 : index
    %c0_33 = arith.constant 0 : index
    %103 = vector.load %arg8[%c0_31, %c0_32, %c0_33] : memref<1x1x32xf32, #tpu.memory_space<vmem>>, vector<1x1x32xf32>
    %104 = vector.shape_cast %103 : vector<1x1x32xf32> to vector<1x32xf32>
    %c0_34 = arith.constant 0 : index
    %c0_35 = arith.constant 0 : index
    %c0_36 = arith.constant 0 : index
    %105 = vector.load %arg9[%c0_34, %c0_35, %c0_36] : memref<1x1x32xf32, #tpu.memory_space<vmem>>, vector<1x1x32xf32>
    %106 = vector.shape_cast %105 : vector<1x1x32xf32> to vector<1x32xf32>
    %cst_37 = arith.constant dense<0.000000e+00> : vector<16xf32>
    %107 = vector.multi_reduction <add>, %102, %cst_37 [1] : vector<16x32xf32> to vector<16xf32>
    %108 = vector.shape_cast %107 : vector<16xf32> to vector<16x1xf32>
    %cst_38 = arith.constant 3.200000e+01 : f32
    %109 = vector.broadcast %cst_38 : f32 to vector<16x1xf32>
    %110 = arith.divf %108, %109 : vector<16x1xf32>
    %111 = vector.broadcast %110 : vector<16x1xf32> to vector<16x32xf32>
    %112 = arith.subf %102, %111 : vector<16x32xf32>
    %113 = arith.mulf %112, %112 : vector<16x32xf32>
    %cst_39 = arith.constant dense<0.000000e+00> : vector<16xf32>
    %114 = vector.multi_reduction <add>, %113, %cst_39 [1] : vector<16x32xf32> to vector<16xf32>
    %115 = vector.shape_cast %114 : vector<16xf32> to vector<16x1xf32>
    %cst_40 = arith.constant 3.200000e+01 : f32
    %116 = vector.broadcast %cst_40 : f32 to vector<16x1xf32>
    %117 = arith.divf %115, %116 : vector<16x1xf32>
    %cst_41 = arith.constant 9.99999974E-6 : f32
    %118 = vector.broadcast %cst_41 : f32 to vector<16x1xf32>
    %119 = arith.addf %117, %118 : vector<16x1xf32>
    %120 = math.rsqrt %119 : vector<16x1xf32>
    %121 = vector.broadcast %110 : vector<16x1xf32> to vector<16x32xf32>
    %122 = arith.subf %102, %121 : vector<16x32xf32>
    %123 = vector.broadcast %120 : vector<16x1xf32> to vector<16x32xf32>
    %124 = arith.mulf %122, %123 : vector<16x32xf32>
    %125 = vector.broadcast %104 : vector<1x32xf32> to vector<16x32xf32>
    %126 = arith.mulf %124, %125 : vector<16x32xf32>
    %127 = vector.broadcast %106 : vector<1x32xf32> to vector<16x32xf32>
    %128 = arith.addf %126, %127 : vector<16x32xf32>
    %129 = arith.truncf %128 : vector<16x32xf32> to vector<16x32xbf16>
    %c0_42 = arith.constant 0 : index
    %c0_43 = arith.constant 0 : index
    %c0_44 = arith.constant 0 : index
    %130 = vector.load %arg10[%c0_42, %c0_43, %c0_44] : memref<1x32x2048xbf16, #tpu.memory_space<vmem>>, vector<1x32x2048xbf16>
    %131 = vector.shape_cast %130 : vector<1x32x2048xbf16> to vector<32x2048xbf16>
    %cst_45 = arith.constant dense<0.000000e+00> : vector<16x2048xf32>
    %132 = tpu.matmul %129, %131, %cst_45 {dimension_numbers = #tpu.dot_dimension_numbers<[1], [0], [0], [1], [0, 0, 1, 1], [], []>} : vector<16x32xbf16>, vector<32x2048xbf16>, vector<16x2048xf32> -> vector<16x2048xf32>
    %c0_46 = arith.constant 0 : index
    %c0_47 = arith.constant 0 : index
    %c0_48 = arith.constant 0 : index
    %133 = vector.load %arg11[%c0_46, %c0_47, %c0_48] : memref<1x1x2048xf32, #tpu.memory_space<vmem>>, vector<1x1x2048xf32>
    %134 = vector.shape_cast %133 : vector<1x1x2048xf32> to vector<1x2048xf32>
    %135 = vector.broadcast %134 : vector<1x2048xf32> to vector<16x2048xf32>
    %136 = arith.addf %132, %135 : vector<16x2048xf32>
    %cst_49 = arith.constant 0.000000e+00 : f32
    %137 = vector.broadcast %cst_49 : f32 to vector<16x2048xf32>
    %138 = arith.maximumf %136, %137 : vector<16x2048xf32>
    %139 = arith.truncf %138 : vector<16x2048xf32> to vector<16x2048xbf16>
    %c0_50 = arith.constant 0 : index
    %c0_51 = arith.constant 0 : index
    %c0_52 = arith.constant 0 : index
    %140 = vector.load %arg12[%c0_50, %c0_51, %c0_52] : memref<1x2048x32xbf16, #tpu.memory_space<vmem>>, vector<1x2048x32xbf16>
    %141 = vector.shape_cast %140 : vector<1x2048x32xbf16> to vector<2048x32xbf16>
    %cst_53 = arith.constant dense<0.000000e+00> : vector<16x32xf32>
    %142 = tpu.matmul %139, %141, %cst_53 {dimension_numbers = #tpu.dot_dimension_numbers<[1], [0], [0], [1], [0, 0, 1, 1], [], []>} : vector<16x2048xbf16>, vector<2048x32xbf16>, vector<16x32xf32> -> vector<16x32xf32>
    %c0_54 = arith.constant 0 : index
    %c0_55 = arith.constant 0 : index
    %c0_56 = arith.constant 0 : index
    %143 = vector.load %arg13[%c0_54, %c0_55, %c0_56] : memref<1x1x32xf32, #tpu.memory_space<vmem>>, vector<1x1x32xf32>
    %144 = vector.shape_cast %143 : vector<1x1x32xf32> to vector<1x32xf32>
    %145 = vector.broadcast %144 : vector<1x32xf32> to vector<16x32xf32>
    %146 = arith.addf %142, %145 : vector<16x32xf32>
    %147 = arith.addf %128, %146 : vector<16x32xf32>
    %c0_57 = arith.constant 0 : index
    %c0_58 = arith.constant 0 : index
    %c0_59 = arith.constant 0 : index
    %148 = vector.load %arg14[%c0_57, %c0_58, %c0_59] : memref<1x1x32xf32, #tpu.memory_space<vmem>>, vector<1x1x32xf32>
    %149 = vector.shape_cast %148 : vector<1x1x32xf32> to vector<1x32xf32>
    %c0_60 = arith.constant 0 : index
    %c0_61 = arith.constant 0 : index
    %c0_62 = arith.constant 0 : index
    %150 = vector.load %arg15[%c0_60, %c0_61, %c0_62] : memref<1x1x32xf32, #tpu.memory_space<vmem>>, vector<1x1x32xf32>
    %151 = vector.shape_cast %150 : vector<1x1x32xf32> to vector<1x32xf32>
    %cst_63 = arith.constant dense<0.000000e+00> : vector<16xf32>
    %152 = vector.multi_reduction <add>, %147, %cst_63 [1] : vector<16x32xf32> to vector<16xf32>
    %153 = vector.shape_cast %152 : vector<16xf32> to vector<16x1xf32>
    %cst_64 = arith.constant 3.200000e+01 : f32
    %154 = vector.broadcast %cst_64 : f32 to vector<16x1xf32>
    %155 = arith.divf %153, %154 : vector<16x1xf32>
    %156 = vector.broadcast %155 : vector<16x1xf32> to vector<16x32xf32>
    %157 = arith.subf %147, %156 : vector<16x32xf32>
    %158 = arith.mulf %157, %157 : vector<16x32xf32>
    %cst_65 = arith.constant dense<0.000000e+00> : vector<16xf32>
    %159 = vector.multi_reduction <add>, %158, %cst_65 [1] : vector<16x32xf32> to vector<16xf32>
    %160 = vector.shape_cast %159 : vector<16xf32> to vector<16x1xf32>
    %cst_66 = arith.constant 3.200000e+01 : f32
    %161 = vector.broadcast %cst_66 : f32 to vector<16x1xf32>
    %162 = arith.divf %160, %161 : vector<16x1xf32>
    %cst_67 = arith.constant 9.99999974E-6 : f32
    %163 = vector.broadcast %cst_67 : f32 to vector<16x1xf32>
    %164 = arith.addf %162, %163 : vector<16x1xf32>
    %165 = math.rsqrt %164 : vector<16x1xf32>
    %166 = vector.broadcast %155 : vector<16x1xf32> to vector<16x32xf32>
    %167 = arith.subf %147, %166 : vector<16x32xf32>
    %168 = vector.broadcast %165 : vector<16x1xf32> to vector<16x32xf32>
    %169 = arith.mulf %167, %168 : vector<16x32xf32>
    %170 = vector.broadcast %149 : vector<1x32xf32> to vector<16x32xf32>
    %171 = arith.mulf %169, %170 : vector<16x32xf32>
    %172 = vector.broadcast %151 : vector<1x32xf32> to vector<16x32xf32>
    %173 = arith.addf %171, %172 : vector<16x32xf32>
    %c0_68 = arith.constant 0 : index
    %c0_69 = arith.constant 0 : index
    %174 = vector.load %arg27[%c0_68, %c0_69] : memref<16x32xf32, #tpu.memory_space<vmem>>, vector<16x32xf32>
    tpu.vector_store %arg27[%c0_68, %c0_69], %173 {strides = array<i32>} : memref<16x32xf32, #tpu.memory_space<vmem>>, vector<16x32xf32>,
    %c1_i32 = arith.constant 1 : i32
    %175 = arith.cmpi eq, %arg0, %c1_i32 : i32
    %176 = arith.extui %175 : i1 to i32
    %c0_i32_70 = arith.constant 0 : i32
    %177 = arith.cmpi ne, %176, %c0_i32_70 : i32
    scf.if %177 {
      %178 = vector.shape_cast %173 : vector<16x32xf32> to vector<2x8x32xf32>
      %179 = vector.extract_strided_slice %178 {offsets = [0, 0, 0], sizes = [2, 1, 32], strides = [1, 1, 1]} : vector<2x8x32xf32> to vector<2x1x32xf32>
      %180 = vector.shape_cast %179 : vector<2x1x32xf32> to vector<2x32xf32>
      %181 = arith.truncf %180 : vector<2x32xf32> to vector<2x32xbf16>
      %c0_71 = arith.constant 0 : index
      %c0_72 = arith.constant 0 : index
      %182 = vector.load %arg16[%c0_71, %c0_72] : memref<32x16xbf16, #tpu.memory_space<vmem>>, vector<32x16xbf16>
      %cst_73 = arith.constant dense<0.000000e+00> : vector<2x16xf32>
      %183 = tpu.matmul %181, %182, %cst_73 {dimension_numbers = #tpu.dot_dimension_numbers<[1], [0], [0], [1], [0, 0, 1, 1], [], []>} : vector<2x32xbf16>, vector<32x16xbf16>, vector<2x16xf32> -> vector<2x16xf32>
      %c0_74 = arith.constant 0 : index
      %c0_75 = arith.constant 0 : index
      %184 = vector.load %arg17[%c0_74, %c0_75] : memref<1x16xf32, #tpu.memory_space<vmem>>, vector<1x16xf32>
      %185 = vector.broadcast %184 : vector<1x16xf32> to vector<2x16xf32>
      %186 = arith.addf %183, %185 : vector<2x16xf32>
      %c0_76 = arith.constant 0 : index
      %c0_77 = arith.constant 0 : index
      %187 = vector.load %arg18[%c0_76, %c0_77] : memref<1x16xf32, #tpu.memory_space<vmem>>, vector<1x16xf32>
      %c0_78 = arith.constant 0 : index
      %c0_79 = arith.constant 0 : index
      %188 = vector.load %arg19[%c0_78, %c0_79] : memref<1x16xf32, #tpu.memory_space<vmem>>, vector<1x16xf32>
      %cst_80 = arith.constant dense<0.000000e+00> : vector<2xf32>
      %189 = vector.multi_reduction <add>, %186, %cst_80 [1] : vector<2x16xf32> to vector<2xf32>
      %190 = vector.shape_cast %189 : vector<2xf32> to vector<2x1xf32>
      %cst_81 = arith.constant 1.600000e+01 : f32
      %191 = vector.broadcast %cst_81 : f32 to vector<2x1xf32>
      %192 = arith.divf %190, %191 : vector<2x1xf32>
      %193 = vector.broadcast %192 : vector<2x1xf32> to vector<2x16xf32>
      %194 = arith.subf %186, %193 : vector<2x16xf32>
      %195 = arith.mulf %194, %194 : vector<2x16xf32>
      %cst_82 = arith.constant dense<0.000000e+00> : vector<2xf32>
      %196 = vector.multi_reduction <add>, %195, %cst_82 [1] : vector<2x16xf32> to vector<2xf32>
      %197 = vector.shape_cast %196 : vector<2xf32> to vector<2x1xf32>
      %cst_83 = arith.constant 1.600000e+01 : f32
      %198 = vector.broadcast %cst_83 : f32 to vector<2x1xf32>
      %199 = arith.divf %197, %198 : vector<2x1xf32>
      %cst_84 = arith.constant 9.99999974E-6 : f32
      %200 = vector.broadcast %cst_84 : f32 to vector<2x1xf32>
      %201 = arith.addf %199, %200 : vector<2x1xf32>
      %202 = math.rsqrt %201 : vector<2x1xf32>
      %203 = vector.broadcast %192 : vector<2x1xf32> to vector<2x16xf32>
      %204 = arith.subf %186, %203 : vector<2x16xf32>
      %205 = vector.broadcast %202 : vector<2x1xf32> to vector<2x16xf32>
      %206 = arith.mulf %204, %205 : vector<2x16xf32>
      %207 = vector.broadcast %187 : vector<1x16xf32> to vector<2x16xf32>
      %208 = arith.mulf %206, %207 : vector<2x16xf32>
      %209 = vector.broadcast %188 : vector<1x16xf32> to vector<2x16xf32>
      %210 = arith.addf %208, %209 : vector<2x16xf32>
      %cst_85 = arith.constant 0.000000e+00 : f32
      %211 = vector.broadcast %cst_85 : f32 to vector<2x16xf32>
      %212 = arith.cmpf oge, %210, %211 : vector<2x16xf32>
      %cst_86 = arith.constant 0.00999999977 : f32
      %213 = vector.broadcast %cst_86 : f32 to vector<2x16xf32>
      %214 = arith.mulf %213, %210 : vector<2x16xf32>
      %215 = arith.select %212, %210, %214 : vector<2x16xi1>, vector<2x16xf32>
      %216 = arith.truncf %215 : vector<2x16xf32> to vector<2x16xbf16>
      %c0_87 = arith.constant 0 : index
      %c0_88 = arith.constant 0 : index
      %217 = vector.load %arg20[%c0_87, %c0_88] : memref<16x12xbf16, #tpu.memory_space<vmem>>, vector<16x12xbf16>
      %cst_89 = arith.constant dense<0.000000e+00> : vector<2x12xf32>
      %218 = tpu.matmul %216, %217, %cst_89 {dimension_numbers = #tpu.dot_dimension_numbers<[1], [0], [0], [1], [0, 0, 1, 1], [], []>} : vector<2x16xbf16>, vector<16x12xbf16>, vector<2x12xf32> -> vector<2x12xf32>
      %c0_90 = arith.constant 0 : index
      %c0_91 = arith.constant 0 : index
      %219 = vector.load %arg21[%c0_90, %c0_91] : memref<1x12xf32, #tpu.memory_space<vmem>>, vector<1x12xf32>
      %220 = vector.broadcast %219 : vector<1x12xf32> to vector<2x12xf32>
      %221 = arith.addf %218, %220 : vector<2x12xf32>
      %c0_92 = arith.constant 0 : index
      %c0_93 = arith.constant 0 : index
      %222 = vector.load %arg22[%c0_92, %c0_93] : memref<1x12xf32, #tpu.memory_space<vmem>>, vector<1x12xf32>
      %c0_94 = arith.constant 0 : index
      %c0_95 = arith.constant 0 : index
      %223 = vector.load %arg23[%c0_94, %c0_95] : memref<1x12xf32, #tpu.memory_space<vmem>>, vector<1x12xf32>
      %cst_96 = arith.constant dense<0.000000e+00> : vector<2xf32>
      %224 = vector.multi_reduction <add>, %221, %cst_96 [1] : vector<2x12xf32> to vector<2xf32>
      %225 = vector.shape_cast %224 : vector<2xf32> to vector<2x1xf32>
      %cst_97 = arith.constant 1.200000e+01 : f32
      %226 = vector.broadcast %cst_97 : f32 to vector<2x1xf32>
      %227 = arith.divf %225, %226 : vector<2x1xf32>
      %228 = vector.broadcast %227 : vector<2x1xf32> to vector<2x12xf32>
      %229 = arith.subf %221, %228 : vector<2x12xf32>
      %230 = arith.mulf %229, %229 : vector<2x12xf32>
      %cst_98 = arith.constant dense<0.000000e+00> : vector<2xf32>
      %231 = vector.multi_reduction <add>, %230, %cst_98 [1] : vector<2x12xf32> to vector<2xf32>
      %232 = vector.shape_cast %231 : vector<2xf32> to vector<2x1xf32>
      %cst_99 = arith.constant 1.200000e+01 : f32
      %233 = vector.broadcast %cst_99 : f32 to vector<2x1xf32>
      %234 = arith.divf %232, %233 : vector<2x1xf32>
      %cst_100 = arith.constant 9.99999974E-6 : f32
      %235 = vector.broadcast %cst_100 : f32 to vector<2x1xf32>
      %236 = arith.addf %234, %235 : vector<2x1xf32>
      %237 = math.rsqrt %236 : vector<2x1xf32>
      %238 = vector.broadcast %227 : vector<2x1xf32> to vector<2x12xf32>
      %239 = arith.subf %221, %238 : vector<2x12xf32>
      %240 = vector.broadcast %237 : vector<2x1xf32> to vector<2x12xf32>
      %241 = arith.mulf %239, %240 : vector<2x12xf32>
      %242 = vector.broadcast %222 : vector<1x12xf32> to vector<2x12xf32>
      %243 = arith.mulf %241, %242 : vector<2x12xf32>
      %244 = vector.broadcast %223 : vector<1x12xf32> to vector<2x12xf32>
      %245 = arith.addf %243, %244 : vector<2x12xf32>
      %cst_101 = arith.constant 0.000000e+00 : f32
      %246 = vector.broadcast %cst_101 : f32 to vector<2x12xf32>
      %247 = arith.cmpf oge, %245, %246 : vector<2x12xf32>
      %cst_102 = arith.constant 0.00999999977 : f32
      %248 = vector.broadcast %cst_102 : f32 to vector<2x12xf32>
      %249 = arith.mulf %248, %245 : vector<2x12xf32>
      %250 = arith.select %247, %245, %249 : vector<2x12xi1>, vector<2x12xf32>
      %251 = arith.truncf %250 : vector<2x12xf32> to vector<2x12xbf16>
      %c0_103 = arith.constant 0 : index
      %c0_104 = arith.constant 0 : index
      %252 = vector.load %arg24[%c0_103, %c0_104] : memref<12x6xbf16, #tpu.memory_space<vmem>>, vector<12x6xbf16>
      %cst_105 = arith.constant dense<0.000000e+00> : vector<2x6xf32>
      %253 = tpu.matmul %251, %252, %cst_105 {dimension_numbers = #tpu.dot_dimension_numbers<[1], [0], [0], [1], [0, 0, 1, 1], [], []>} : vector<2x12xbf16>, vector<12x6xbf16>, vector<2x6xf32> -> vector<2x6xf32>
      %c0_106 = arith.constant 0 : index
      %c0_107 = arith.constant 0 : index
      %254 = vector.load %arg25[%c0_106, %c0_107] : memref<1x6xf32, #tpu.memory_space<vmem>>, vector<1x6xf32>
      %255 = vector.broadcast %254 : vector<1x6xf32> to vector<2x6xf32>
      %256 = arith.addf %253, %255 : vector<2x6xf32>
      %c0_108 = arith.constant 0 : index
      %c0_109 = arith.constant 0 : index
      %257 = vector.load %arg26[%c0_108, %c0_109] : memref<2x6xf32, #tpu.memory_space<vmem>>, vector<2x6xf32>
      tpu.vector_store %arg26[%c0_108, %c0_109], %256 {strides = array<i32>} : memref<2x6xf32, #tpu.memory_space<vmem>>, vector<2x6xf32>,
    } else {
    }
    return
  }
  func.func @transform_0(%arg0: i32) -> (i32, i32) {
    %c0_i32 = arith.constant 0 : i32
    %c0_i32_0 = arith.constant 0 : i32
    %c0_i32_1 = arith.constant 0 : i32
    return %c0_i32, %c0_i32_0 : i32, i32
  }
  func.func @transform_1(%arg0: i32) -> (i32, i32) {
    %c0_i32 = arith.constant 0 : i32
    %c0_i32_0 = arith.constant 0 : i32
    %c0_i32_1 = arith.constant 0 : i32
    return %c0_i32, %c0_i32_0 : i32, i32
  }
  func.func @transform_2(%arg0: i32) -> (i32, i32) {
    %c0_i32 = arith.constant 0 : i32
    %c0_i32_0 = arith.constant 0 : i32
    %c0_i32_1 = arith.constant 0 : i32
    return %c0_i32, %c0_i32_0 : i32, i32
  }
  func.func @transform_3(%arg0: i32) -> (i32, i32, i32) {
    %c0_i32 = arith.constant 0 : i32
    %c0_i32_0 = arith.constant 0 : i32
    %c0_i32_1 = arith.constant 0 : i32
    return %arg0, %c0_i32, %c0_i32_0 : i32, i32, i32
  }
  func.func @transform_4(%arg0: i32) -> (i32, i32, i32) {
    %c0_i32 = arith.constant 0 : i32
    %c0_i32_0 = arith.constant 0 : i32
    %c0_i32_1 = arith.constant 0 : i32
    return %arg0, %c0_i32, %c0_i32_0 : i32, i32, i32
  }
  func.func @transform_5(%arg0: i32) -> (i32, i32, i32) {
    %c0_i32 = arith.constant 0 : i32
    %c0_i32_0 = arith.constant 0 : i32
    %c0_i32_1 = arith.constant 0 : i32
    return %arg0, %c0_i32, %c0_i32_0 : i32, i32, i32
  }
  func.func @transform_6(%arg0: i32) -> (i32, i32, i32) {
    %c0_i32 = arith.constant 0 : i32
    %c0_i32_0 = arith.constant 0 : i32
    %c0_i32_1 = arith.constant 0 : i32
    return %arg0, %c0_i32, %c0_i32_0 : i32, i32, i32
  }
  func.func @transform_7(%arg0: i32) -> (i32, i32, i32) {
    %c0_i32 = arith.constant 0 : i32
    %c0_i32_0 = arith.constant 0 : i32
    %c0_i32_1 = arith.constant 0 : i32
    return %arg0, %c0_i32, %c0_i32_0 : i32, i32, i32
  }
  func.func @transform_8(%arg0: i32) -> (i32, i32, i32) {
    %c0_i32 = arith.constant 0 : i32
    %c0_i32_0 = arith.constant 0 : i32
    %c0_i32_1 = arith.constant 0 : i32
    return %arg0, %c0_i32, %c0_i32_0 : i32, i32, i32
  }
  func.func @transform_9(%arg0: i32) -> (i32, i32, i32) {
    %c0_i32 = arith.constant 0 : i32
    %c0_i32_0 = arith.constant 0 : i32
    %c0_i32_1 = arith.constant 0 : i32
    return %arg0, %c0_i32, %c0_i32_0 : i32, i32, i32
  }
  func.func @transform_10(%arg0: i32) -> (i32, i32, i32) {
    %c0_i32 = arith.constant 0 : i32
    %c0_i32_0 = arith.constant 0 : i32
    %c0_i32_1 = arith.constant 0 : i32
    return %arg0, %c0_i32, %c0_i32_0 : i32, i32, i32
  }
  func.func @transform_11(%arg0: i32) -> (i32, i32, i32) {
    %c0_i32 = arith.constant 0 : i32
    %c0_i32_0 = arith.constant 0 : i32
    %c0_i32_1 = arith.constant 0 : i32
    return %arg0, %c0_i32, %c0_i32_0 : i32, i32, i32
  }
  func.func @transform_12(%arg0: i32) -> (i32, i32, i32) {
    %c0_i32 = arith.constant 0 : i32
    %c0_i32_0 = arith.constant 0 : i32
    %c0_i32_1 = arith.constant 0 : i32
    return %arg0, %c0_i32, %c0_i32_0 : i32, i32, i32
  }
  func.func @transform_13(%arg0: i32) -> (i32, i32, i32) {
    %c0_i32 = arith.constant 0 : i32
    %c0_i32_0 = arith.constant 0 : i32
    %c0_i32_1 = arith.constant 0 : i32
    return %arg0, %c0_i32, %c0_i32_0 : i32, i32, i32
  }
  func.func @transform_14(%arg0: i32) -> (i32, i32, i32) {
    %c0_i32 = arith.constant 0 : i32
    %c0_i32_0 = arith.constant 0 : i32
    %c0_i32_1 = arith.constant 0 : i32
    return %arg0, %c0_i32, %c0_i32_0 : i32, i32, i32
  }
  func.func @transform_15(%arg0: i32) -> (i32, i32) {
    %c0_i32 = arith.constant 0 : i32
    %c0_i32_0 = arith.constant 0 : i32
    %c0_i32_1 = arith.constant 0 : i32
    return %c0_i32, %c0_i32_0 : i32, i32
  }
  func.func @transform_16(%arg0: i32) -> (i32, i32) {
    %c0_i32 = arith.constant 0 : i32
    %c0_i32_0 = arith.constant 0 : i32
    %c0_i32_1 = arith.constant 0 : i32
    return %c0_i32, %c0_i32_0 : i32, i32
  }
  func.func @transform_17(%arg0: i32) -> (i32, i32) {
    %c0_i32 = arith.constant 0 : i32
    %c0_i32_0 = arith.constant 0 : i32
    %c0_i32_1 = arith.constant 0 : i32
    return %c0_i32, %c0_i32_0 : i32, i32
  }
  func.func @transform_18(%arg0: i32) -> (i32, i32) {
    %c0_i32 = arith.constant 0 : i32
    %c0_i32_0 = arith.constant 0 : i32
    %c0_i32_1 = arith.constant 0 : i32
    return %c0_i32, %c0_i32_0 : i32, i32
  }
  func.func @transform_19(%arg0: i32) -> (i32, i32) {
    %c0_i32 = arith.constant 0 : i32
    %c0_i32_0 = arith.constant 0 : i32
    %c0_i32_1 = arith.constant 0 : i32
    return %c0_i32, %c0_i32_0 : i32, i32
  }
  func.func @transform_20(%arg0: i32) -> (i32, i32) {
    %c0_i32 = arith.constant 0 : i32
    %c0_i32_0 = arith.constant 0 : i32
    %c0_i32_1 = arith.constant 0 : i32
    return %c0_i32, %c0_i32_0 : i32, i32
  }
  func.func @transform_21(%arg0: i32) -> (i32, i32) {
    %c0_i32 = arith.constant 0 : i32
    %c0_i32_0 = arith.constant 0 : i32
    %c0_i32_1 = arith.constant 0 : i32
    return %c0_i32, %c0_i32_0 : i32, i32
  }
  func.func @transform_22(%arg0: i32) -> (i32, i32) {
    %c0_i32 = arith.constant 0 : i32
    %c0_i32_0 = arith.constant 0 : i32
    %c0_i32_1 = arith.constant 0 : i32
    return %c0_i32, %c0_i32_0 : i32, i32
  }
  func.func @transform_23(%arg0: i32) -> (i32, i32) {
    %c0_i32 = arith.constant 0 : i32
    %c0_i32_0 = arith.constant 0 : i32
    %c0_i32_1 = arith.constant 0 : i32
    return %c0_i32, %c0_i32_0 : i32, i32
  }
  func.func @transform_24(%arg0: i32) -> (i32, i32) {
    %c0_i32 = arith.constant 0 : i32
    %c0_i32_0 = arith.constant 0 : i32
    %c0_i32_1 = arith.constant 0 : i32
    return %c0_i32, %c0_i32_0 : i32, i32
  }
  func.func @transform_25(%arg0: i32) -> (i32, i32) {
    %c0_i32 = arith.constant 0 : i32
    %c0_i32_0 = arith.constant 0 : i32
    %c0_i32_1 = arith.constant 0 : i32
    return %c0_i32, %c0_i32_0 : i32, i32
  }
}

</mosaic_0001>

<llo_original>
// kernel: tpu_custom_call.1
$region0: #{tpu_custom_call.1}
  #allocation0 [shape = 'u32[]', space=smem, size = 0x4, offset = 0x4, fixed_abs, tag = 'smem constant byte address 0x4 - core index']
  #allocation1 [shape = 'u32[144,128]{1,0:T(1,128)}', space=vmem, size = 0x12000, scoped, tag = 'internal scratch']
  #allocation2 [shape = 'f32[16,32]{1,0:T(8,128)}', space=vmem, size = 0x2000, scoped, tag = 'scratch operand']
  %s0 = inlined_call_operand.vmem [shape: s32[16,1], index: 0, kind: input, shape index: {}]
  %s1 = inlined_call_operand.vmem [shape: f32[50,32], index: 1, kind: input, shape index: {}]
  %s2 = inlined_call_operand.vmem [shape: f32[8,32], index: 2, kind: input, shape index: {}]
  %s3 = inlined_call_operand.vmem [shape: bf16[2,32,96], index: 3, kind: input, shape index: {}]
  %s4 = inlined_call_operand.vmem [shape: f32[2,1,96], index: 4, kind: input, shape index: {}]
  %s5 = inlined_call_operand.vmem [shape: bf16[2,32,32], index: 5, kind: input, shape index: {}]
  %s6 = inlined_call_operand.vmem [shape: f32[2,1,32], index: 6, kind: input, shape index: {}]
  %s7 = inlined_call_operand.vmem [shape: f32[2,1,32], index: 7, kind: input, shape index: {}]
  %s8 = inlined_call_operand.vmem [shape: f32[2,1,32], index: 8, kind: input, shape index: {}]
  %s9 = inlined_call_operand.vmem [shape: bf16[2,32,2048], index: 9, kind: input, shape index: {}]
  %s10 = inlined_call_operand.vmem [shape: f32[2,1,2048], index: 10, kind: input, shape index: {}]
  %s11 = inlined_call_operand.vmem [shape: bf16[2,2048,32], index: 11, kind: input, shape index: {}]
  %s12 = inlined_call_operand.vmem [shape: f32[2,1,32], index: 12, kind: input, shape index: {}]
  %s13 = inlined_call_operand.vmem [shape: f32[2,1,32], index: 13, kind: input, shape index: {}]
  %s14 = inlined_call_operand.vmem [shape: f32[2,1,32], index: 14, kind: input, shape index: {}]
  %s15 = inlined_call_operand.vmem [shape: bf16[32,16], index: 15, kind: input, shape index: {}]
  %s16 = inlined_call_operand.vmem [shape: f32[1,16], index: 16, kind: input, shape index: {}]
  %s17 = inlined_call_operand.vmem [shape: f32[1,16], index: 17, kind: input, shape index: {}]
  %s18 = inlined_call_operand.vmem [shape: f32[1,16], index: 18, kind: input, shape index: {}]
  %s19 = inlined_call_operand.vmem [shape: bf16[16,12], index: 19, kind: input, shape index: {}]
  %s20 = inlined_call_operand.vmem [shape: f32[1,12], index: 20, kind: input, shape index: {}]
  %s21 = inlined_call_operand.vmem [shape: f32[1,12], index: 21, kind: input, shape index: {}]
  %s22 = inlined_call_operand.vmem [shape: f32[1,12], index: 22, kind: input, shape index: {}]
  %s23 = inlined_call_operand.vmem [shape: bf16[12,6], index: 23, kind: input, shape index: {}]
  %s24 = inlined_call_operand.vmem [shape: f32[1,6], index: 24, kind: input, shape index: {}]
  %s25 = inlined_call_operand.hbm [shape: f32[2,6], index: 25, kind: output, shape index: {}]
  %s26 = sld [smem:[#allocation0]]
  $region141: #{tpu_custom_call.1} parent=0
    _
  %s28 = ssub.s32 1, %s26
  %s29 = scalar_select 0, %s28, %s26
  $region1: #{tpu_custom_call.1} parent=0
    #allocation3 [shape = 'u8[1024]{0}', space=vmem, size = 0x400, scoped, tag = 'output window, operand 0, single buffered']
    #allocation4 [shape = 's32[2]{0}', space=sflag, size = 0x8, scoped, tag = 'scoped memory for tpu_custom_call.1']
    %30 = vsyncpa [#allocation4], 0
    loop: start=0, step=1, limit=4
    $region2: #{tpu_custom_call.1} parent=1 // loop_pre_header
      _
    $region3: #{tpu_custom_call.1} parent=1 // loop_header
      %s32 = sphi 0, %s36
      %p33 = scmp.ge.s32.totalorder %s32, 4
      %s40 = sphi 0, %s40
      %s42 = sphi 0, %s40
      %s43 = sphi 0, %s42
      %s57 = sphi 0, %s43
      %s61 = sphi 0, %s61
      %s63 = sphi 0, %s61
      %s64 = sphi 0, %s63
      %s78 = sphi 0, %s64
      %s82 = sphi 0, %s82
      %s84 = sphi 0, %s82
      %s85 = sphi 0, %s84
      %s99 = sphi 0, %s85
      %s105 = sphi 0, %s107
      %s108 = sphi 0, %s105
      %s109 = sphi 0, %s108
      %s125 = sphi 0, %s109
      %s131 = sphi 0, %s133
      %s134 = sphi 0, %s131
      %s135 = sphi 0, %s134
      %s151 = sphi 0, %s135
      %s157 = sphi 0, %s159
      %s160 = sphi 0, %s157
      %s161 = sphi 0, %s160
      %s177 = sphi 0, %s161
      %s183 = sphi 0, %s185
      %s186 = sphi 0, %s183
      %s187 = sphi 0, %s186
      %s203 = sphi 0, %s187
      %s209 = sphi 0, %s211
      %s212 = sphi 0, %s209
      %s213 = sphi 0, %s212
      %s229 = sphi 0, %s213
      %s235 = sphi 0, %s237
      %s238 = sphi 0, %s235
      %s239 = sphi 0, %s238
      %s255 = sphi 0, %s239
      %s261 = sphi 0, %s263
      %s264 = sphi 0, %s261
      %s265 = sphi 0, %s264
      %s281 = sphi 0, %s265
      %s287 = sphi 0, %s289
      %s290 = sphi 0, %s287
      %s291 = sphi 0, %s290
      %s307 = sphi 0, %s291
      %s313 = sphi 0, %s315
      %s316 = sphi 0, %s313
      %s317 = sphi 0, %s316
      %s333 = sphi 0, %s317
      %s339 = sphi 0, %s341
      %s342 = sphi 0, %s339
      %s343 = sphi 0, %s342
      %s359 = sphi 0, %s343
      %s365 = sphi 0, %s367
      %s368 = sphi 0, %s365
      %s369 = sphi 0, %s368
      %s385 = sphi 0, %s369
      %s391 = sphi 0, %s393
      %s394 = sphi 0, %s391
      %s395 = sphi 0, %s394
      %s411 = sphi 0, %s395
      %s415 = sphi 0, %s415
      %s417 = sphi 0, %s415
      %s418 = sphi 0, %s417
      %s432 = sphi 0, %s418
      %s436 = sphi 0, %s436
      %s438 = sphi 0, %s436
      %s439 = sphi 0, %s438
      %s453 = sphi 0, %s439
      %s457 = sphi 0, %s457
      %s459 = sphi 0, %s457
      %s460 = sphi 0, %s459
      %s474 = sphi 0, %s460
      %s478 = sphi 0, %s478
      %s480 = sphi 0, %s478
      %s481 = sphi 0, %s480
      %s495 = sphi 0, %s481
      %s499 = sphi 0, %s499
      %s501 = sphi 0, %s499
      %s502 = sphi 0, %s501
      %s516 = sphi 0, %s502
      %s520 = sphi 0, %s520
      %s522 = sphi 0, %s520
      %s523 = sphi 0, %s522
      %s537 = sphi 0, %s523
      %s541 = sphi 0, %s541
      %s543 = sphi 0, %s541
      %s544 = sphi 0, %s543
      %s558 = sphi 0, %s544
      %s562 = sphi 0, %s562
      %s564 = sphi 0, %s562
      %s565 = sphi 0, %s564
      %s579 = sphi 0, %s565
      %s583 = sphi 0, %s583
      %s585 = sphi 0, %s583
      %s586 = sphi 0, %s585
      %s600 = sphi 0, %s586
      %s604 = sphi 0, %s604
      %s606 = sphi 0, %s604
      %s607 = sphi 0, %s606
      %s621 = sphi 0, %s607
      %s625 = sphi 0, %s625
      %s627 = sphi 0, %s625
      %s628 = sphi 0, %s627
      %s642 = sphi 0, %s628
    $region4: #{tpu_custom_call.1} parent=1 // loop_header_branch
      %35 = sbr.rel (%p33) target = $region8
    $region5: #{tpu_custom_call.1} parent=1 // loop_body
      %s37 = ssub.s32 %s32, 1
      %s38 = ssub.s32 %s32, 2
      %s39 = sadd.s32 %s32, 1
      %s41 = sadd.s32 %s40, 1
      %p44 = scmp.eq.s32.totalorder %s32, 1
      %p45 = scmp.ne.s32.totalorder %s40, %s42
      %p46 = scmp.eq.s32.totalorder %s32, 0
      %p47 = por %p45, %p46
      %p48 = scmp.ne.s32.totalorder %s40, %s42
      %p49 = scmp.eq.s32.totalorder %s37, 1
      %p50 = por %p48, %p49
      %p51 = scmp.ne.s32.totalorder %s42, %s43
      %p52 = scmp.eq.s32.totalorder %s37, 0
      %p53 = por %p51, %p52
      %p54 = scmp.ne.s32.totalorder %s42, %s43
      %p55 = scmp.eq.s32.totalorder %s38, 1
      %p56 = por %p54, %p55
      %p58 = scmp.ne.s32.totalorder %s43, %s57
      %p59 = scmp.eq.s32.totalorder %s38, 0
      %p60 = por %p58, %p59
      %s62 = sadd.s32 %s61, 1
      %p65 = scmp.eq.s32.totalorder %s32, 1
      %p66 = scmp.ne.s32.totalorder %s61, %s63
      %p67 = scmp.eq.s32.totalorder %s32, 0
      %p68 = por %p66, %p67
      %p69 = scmp.ne.s32.totalorder %s61, %s63
      %p70 = scmp.eq.s32.totalorder %s37, 1
      %p71 = por %p69, %p70
      %p72 = scmp.ne.s32.totalorder %s63, %s64
      %p73 = scmp.eq.s32.totalorder %s37, 0
      %p74 = por %p72, %p73
      %p75 = scmp.ne.s32.totalorder %s63, %s64
      %p76 = scmp.eq.s32.totalorder %s38, 1
      %p77 = por %p75, %p76
      %p79 = scmp.ne.s32.totalorder %s64, %s78
      %p80 = scmp.eq.s32.totalorder %s38, 0
      %p81 = por %p79, %p80
      %s83 = sadd.s32 %s82, 1
      %p86 = scmp.eq.s32.totalorder %s32, 1
      %p87 = scmp.ne.s32.totalorder %s82, %s84
      %p88 = scmp.eq.s32.totalorder %s32, 0
      %p89 = por %p87, %p88
      %p90 = scmp.ne.s32.totalorder %s82, %s84
      %p91 = scmp.eq.s32.totalorder %s37, 1
      %p92 = por %p90, %p91
      %p93 = scmp.ne.s32.totalorder %s84, %s85
      %p94 = scmp.eq.s32.totalorder %s37, 0
      %p95 = por %p93, %p94
      %p96 = scmp.ne.s32.totalorder %s84, %s85
      %p97 = scmp.eq.s32.totalorder %s38, 1
      %p98 = por %p96, %p97
      %p100 = scmp.ne.s32.totalorder %s85, %s99
      %p101 = scmp.eq.s32.totalorder %s38, 0
      %p102 = por %p100, %p101
      %s103 = ssub.s32 %s32, %s39
      %p104 = scmp.eq.s32.totalorder %s103, 0
      %s106 = sadd.s32 %s105, 1
      %s107 = scalar_select %p104, %s105, %s106
      %p110 = pneg %p104
      %p111 = scmp.eq.s32.totalorder %s32, 1
      %p112 = por %p110, %p111
      %p113 = scmp.ne.s32.totalorder %s105, %s108
      %p114 = scmp.eq.s32.totalorder %s32, 0
      %p115 = por %p113, %p114
      %p116 = scmp.ne.s32.totalorder %s105, %s108
      %p117 = scmp.eq.s32.totalorder %s37, 1
      %p118 = por %p116, %p117
      %p119 = scmp.ne.s32.totalorder %s108, %s109
      %p120 = scmp.eq.s32.totalorder %s37, 0
      %p121 = por %p119, %p120
      %p122 = scmp.ne.s32.totalorder %s108, %s109
      %p123 = scmp.eq.s32.totalorder %s38, 1
      %p124 = por %p122, %p123
      %p126 = scmp.ne.s32.totalorder %s109, %s125
      %p127 = scmp.eq.s32.totalorder %s38, 0
      %p128 = por %p126, %p127
      %s129 = ssub.s32 %s32, %s39
      %p130 = scmp.eq.s32.totalorder %s129, 0
      %s132 = sadd.s32 %s131, 1
      %s133 = scalar_select %p130, %s131, %s132
      %p136 = pneg %p130
      %p137 = scmp.eq.s32.totalorder %s32, 1
      %p138 = por %p136, %p137
      %p139 = scmp.ne.s32.totalorder %s131, %s134
      %p140 = scmp.eq.s32.totalorder %s32, 0
      %p141 = por %p139, %p140
      %p142 = scmp.ne.s32.totalorder %s131, %s134
      %p143 = scmp.eq.s32.totalorder %s37, 1
      %p144 = por %p142, %p143
      %p145 = scmp.ne.s32.totalorder %s134, %s135
      %p146 = scmp.eq.s32.totalorder %s37, 0
      %p147 = por %p145, %p146
      %p148 = scmp.ne.s32.totalorder %s134, %s135
      %p149 = scmp.eq.s32.totalorder %s38, 1
      %p150 = por %p148, %p149
      %p152 = scmp.ne.s32.totalorder %s135, %s151
      %p153 = scmp.eq.s32.totalorder %s38, 0
      %p154 = por %p152, %p153
      %s155 = ssub.s32 %s32, %s39
      %p156 = scmp.eq.s32.totalorder %s155, 0
      %s158 = sadd.s32 %s157, 1
      %s159 = scalar_select %p156, %s157, %s158
      %p162 = pneg %p156
      %p163 = scmp.eq.s32.totalorder %s32, 1
      %p164 = por %p162, %p163
      %p165 = scmp.ne.s32.totalorder %s157, %s160
      %p166 = scmp.eq.s32.totalorder %s32, 0
      %p167 = por %p165, %p166
      %p168 = scmp.ne.s32.totalorder %s157, %s160
      %p169 = scmp.eq.s32.totalorder %s37, 1
      %p170 = por %p168, %p169
      %p171 = scmp.ne.s32.totalorder %s160, %s161
      %p172 = scmp.eq.s32.totalorder %s37, 0
      %p173 = por %p171, %p172
      %p174 = scmp.ne.s32.totalorder %s160, %s161
      %p175 = scmp.eq.s32.totalorder %s38, 1
      %p176 = por %p174, %p175
      %p178 = scmp.ne.s32.totalorder %s161, %s177
      %p179 = scmp.eq.s32.totalorder %s38, 0
      %p180 = por %p178, %p179
      %s181 = ssub.s32 %s32, %s39
      %p182 = scmp.eq.s32.totalorder %s181, 0
      %s184 = sadd.s32 %s183, 1
      %s185 = scalar_select %p182, %s183, %s184
      %p188 = pneg %p182
      %p189 = scmp.eq.s32.totalorder %s32, 1
      %p190 = por %p188, %p189
      %p191 = scmp.ne.s32.totalorder %s183, %s186
      %p192 = scmp.eq.s32.totalorder %s32, 0
      %p193 = por %p191, %p192
      %p194 = scmp.ne.s32.totalorder %s183, %s186
      %p195 = scmp.eq.s32.totalorder %s37, 1
      %p196 = por %p194, %p195
      %p197 = scmp.ne.s32.totalorder %s186, %s187
      %p198 = scmp.eq.s32.totalorder %s37, 0
      %p199 = por %p197, %p198
      %p200 = scmp.ne.s32.totalorder %s186, %s187
      %p201 = scmp.eq.s32.totalorder %s38, 1
      %p202 = por %p200, %p201
      %p204 = scmp.ne.s32.totalorder %s187, %s203
      %p205 = scmp.eq.s32.totalorder %s38, 0
      %p206 = por %p204, %p205
      %s207 = ssub.s32 %s32, %s39
      %p208 = scmp.eq.s32.totalorder %s207, 0
      %s210 = sadd.s32 %s209, 1
      %s211 = scalar_select %p208, %s209, %s210
      %p214 = pneg %p208
      %p215 = scmp.eq.s32.totalorder %s32, 1
      %p216 = por %p214, %p215
      %p217 = scmp.ne.s32.totalorder %s209, %s212
      %p218 = scmp.eq.s32.totalorder %s32, 0
      %p219 = por %p217, %p218
      %p220 = scmp.ne.s32.totalorder %s209, %s212
      %p221 = scmp.eq.s32.totalorder %s37, 1
      %p222 = por %p220, %p221
      %p223 = scmp.ne.s32.totalorder %s212, %s213
      %p224 = scmp.eq.s32.totalorder %s37, 0
      %p225 = por %p223, %p224
      %p226 = scmp.ne.s32.totalorder %s212, %s213
      %p227 = scmp.eq.s32.totalorder %s38, 1
      %p228 = por %p226, %p227
      %p230 = scmp.ne.s32.totalorder %s213, %s229
      %p231 = scmp.eq.s32.totalorder %s38, 0
      %p232 = por %p230, %p231
      %s233 = ssub.s32 %s32, %s39
      %p234 = scmp.eq.s32.totalorder %s233, 0
      %s236 = sadd.s32 %s235, 1
      %s237 = scalar_select %p234, %s235, %s236
      %p240 = pneg %p234
      %p241 = scmp.eq.s32.totalorder %s32, 1
      %p242 = por %p240, %p241
      %p243 = scmp.ne.s32.totalorder %s235, %s238
      %p244 = scmp.eq.s32.totalorder %s32, 0
      %p245 = por %p243, %p244
      %p246 = scmp.ne.s32.totalorder %s235, %s238
      %p247 = scmp.eq.s32.totalorder %s37, 1
      %p248 = por %p246, %p247
      %p249 = scmp.ne.s32.totalorder %s238, %s239
      %p250 = scmp.eq.s32.totalorder %s37, 0
      %p251 = por %p249, %p250
      %p252 = scmp.ne.s32.totalorder %s238, %s239
      %p253 = scmp.eq.s32.totalorder %s38, 1
      %p254 = por %p252, %p253
      %p256 = scmp.ne.s32.totalorder %s239, %s255
      %p257 = scmp.eq.s32.totalorder %s38, 0
      %p258 = por %p256, %p257
      %s259 = ssub.s32 %s32, %s39
      %p260 = scmp.eq.s32.totalorder %s259, 0
      %s262 = sadd.s32 %s261, 1
      %s263 = scalar_select %p260, %s261, %s262
      %p266 = pneg %p260
      %p267 = scmp.eq.s32.totalorder %s32, 1
      %p268 = por %p266, %p267
      %p269 = scmp.ne.s32.totalorder %s261, %s264
      %p270 = scmp.eq.s32.totalorder %s32, 0
      %p271 = por %p269, %p270
      %p272 = scmp.ne.s32.totalorder %s261, %s264
      %p273 = scmp.eq.s32.totalorder %s37, 1
      %p274 = por %p272, %p273
      %p275 = scmp.ne.s32.totalorder %s264, %s265
      %p276 = scmp.eq.s32.totalorder %s37, 0
      %p277 = por %p275, %p276
      %p278 = scmp.ne.s32.totalorder %s264, %s265
      %p279 = scmp.eq.s32.totalorder %s38, 1
      %p280 = por %p278, %p279
      %p282 = scmp.ne.s32.totalorder %s265, %s281
      %p283 = scmp.eq.s32.totalorder %s38, 0
      %p284 = por %p282, %p283
      %s285 = ssub.s32 %s32, %s39
      %p286 = scmp.eq.s32.totalorder %s285, 0
      %s288 = sadd.s32 %s287, 1
      %s289 = scalar_select %p286, %s287, %s288
      %p292 = pneg %p286
      %p293 = scmp.eq.s32.totalorder %s32, 1
      %p294 = por %p292, %p293
      %p295 = scmp.ne.s32.totalorder %s287, %s290
      %p296 = scmp.eq.s32.totalorder %s32, 0
      %p297 = por %p295, %p296
      %p298 = scmp.ne.s32.totalorder %s287, %s290
      %p299 = scmp.eq.s32.totalorder %s37, 1
      %p300 = por %p298, %p299
      %p301 = scmp.ne.s32.totalorder %s290, %s291
      %p302 = scmp.eq.s32.totalorder %s37, 0
      %p303 = por %p301, %p302
      %p304 = scmp.ne.s32.totalorder %s290, %s291
      %p305 = scmp.eq.s32.totalorder %s38, 1
      %p306 = por %p304, %p305
      %p308 = scmp.ne.s32.totalorder %s291, %s307
      %p309 = scmp.eq.s32.totalorder %s38, 0
      %p310 = por %p308, %p309
      %s311 = ssub.s32 %s32, %s39
      %p312 = scmp.eq.s32.totalorder %s311, 0
      %s314 = sadd.s32 %s313, 1
      %s315 = scalar_select %p312, %s313, %s314
      %p318 = pneg %p312
      %p319 = scmp.eq.s32.totalorder %s32, 1
      %p320 = por %p318, %p319
      %p321 = scmp.ne.s32.totalorder %s313, %s316
      %p322 = scmp.eq.s32.totalorder %s32, 0
      %p323 = por %p321, %p322
      %p324 = scmp.ne.s32.totalorder %s313, %s316
      %p325 = scmp.eq.s32.totalorder %s37, 1
      %p326 = por %p324, %p325
      %p327 = scmp.ne.s32.totalorder %s316, %s317
      %p328 = scmp.eq.s32.totalorder %s37, 0
      %p329 = por %p327, %p328
      %p330 = scmp.ne.s32.totalorder %s316, %s317
      %p331 = scmp.eq.s32.totalorder %s38, 1
      %p332 = por %p330, %p331
      %p334 = scmp.ne.s32.totalorder %s317, %s333
      %p335 = scmp.eq.s32.totalorder %s38, 0
      %p336 = por %p334, %p335
      %s337 = ssub.s32 %s32, %s39
      %p338 = scmp.eq.s32.totalorder %s337, 0
      %s340 = sadd.s32 %s339, 1
      %s341 = scalar_select %p338, %s339, %s340
      %p344 = pneg %p338
      %p345 = scmp.eq.s32.totalorder %s32, 1
      %p346 = por %p344, %p345
      %p347 = scmp.ne.s32.totalorder %s339, %s342
      %p348 = scmp.eq.s32.totalorder %s32, 0
      %p349 = por %p347, %p348
      %p350 = scmp.ne.s32.totalorder %s339, %s342
      %p351 = scmp.eq.s32.totalorder %s37, 1
      %p352 = por %p350, %p351
      %p353 = scmp.ne.s32.totalorder %s342, %s343
      %p354 = scmp.eq.s32.totalorder %s37, 0
      %p355 = por %p353, %p354
      %p356 = scmp.ne.s32.totalorder %s342, %s343
      %p357 = scmp.eq.s32.totalorder %s38, 1
      %p358 = por %p356, %p357
      %p360 = scmp.ne.s32.totalorder %s343, %s359
      %p361 = scmp.eq.s32.totalorder %s38, 0
      %p362 = por %p360, %p361
      %s363 = ssub.s32 %s32, %s39
      %p364 = scmp.eq.s32.totalorder %s363, 0
      %s366 = sadd.s32 %s365, 1
      %s367 = scalar_select %p364, %s365, %s366
      %p370 = pneg %p364
      %p371 = scmp.eq.s32.totalorder %s32, 1
      %p372 = por %p370, %p371
      %p373 = scmp.ne.s32.totalorder %s365, %s368
      %p374 = scmp.eq.s32.totalorder %s32, 0
      %p375 = por %p373, %p374
      %p376 = scmp.ne.s32.totalorder %s365, %s368
      %p377 = scmp.eq.s32.totalorder %s37, 1
      %p378 = por %p376, %p377
      %p379 = scmp.ne.s32.totalorder %s368, %s369
      %p380 = scmp.eq.s32.totalorder %s37, 0
      %p381 = por %p379, %p380
      %p382 = scmp.ne.s32.totalorder %s368, %s369
      %p383 = scmp.eq.s32.totalorder %s38, 1
      %p384 = por %p382, %p383
      %p386 = scmp.ne.s32.totalorder %s369, %s385
      %p387 = scmp.eq.s32.totalorder %s38, 0
      %p388 = por %p386, %p387
      %s389 = ssub.s32 %s32, %s39
      %p390 = scmp.eq.s32.totalorder %s389, 0
      %s392 = sadd.s32 %s391, 1
      %s393 = scalar_select %p390, %s391, %s392
      %p396 = pneg %p390
      %p397 = scmp.eq.s32.totalorder %s32, 1
      %p398 = por %p396, %p397
      %p399 = scmp.ne.s32.totalorder %s391, %s394
      %p400 = scmp.eq.s32.totalorder %s32, 0
      %p401 = por %p399, %p400
      %p402 = scmp.ne.s32.totalorder %s391, %s394
      %p403 = scmp.eq.s32.totalorder %s37, 1
      %p404 = por %p402, %p403
      %p405 = scmp.ne.s32.totalorder %s394, %s395
      %p406 = scmp.eq.s32.totalorder %s37, 0
      %p407 = por %p405, %p406
      %p408 = scmp.ne.s32.totalorder %s394, %s395
      %p409 = scmp.eq.s32.totalorder %s38, 1
      %p410 = por %p408, %p409
      %p412 = scmp.ne.s32.totalorder %s395, %s411
      %p413 = scmp.eq.s32.totalorder %s38, 0
      %p414 = por %p412, %p413
      %s416 = sadd.s32 %s415, 1
      %p419 = scmp.eq.s32.totalorder %s32, 1
      %p420 = scmp.ne.s32.totalorder %s415, %s417
      %p421 = scmp.eq.s32.totalorder %s32, 0
      %p422 = por %p420, %p421
      %p423 = scmp.ne.s32.totalorder %s415, %s417
      %p424 = scmp.eq.s32.totalorder %s37, 1
      %p425 = por %p423, %p424
      %p426 = scmp.ne.s32.totalorder %s417, %s418
      %p427 = scmp.eq.s32.totalorder %s37, 0
      %p428 = por %p426, %p427
      %p429 = scmp.ne.s32.totalorder %s417, %s418
      %p430 = scmp.eq.s32.totalorder %s38, 1
      %p431 = por %p429, %p430
      %p433 = scmp.ne.s32.totalorder %s418, %s432
      %p434 = scmp.eq.s32.totalorder %s38, 0
      %p435 = por %p433, %p434
      %s437 = sadd.s32 %s436, 1
      %p440 = scmp.eq.s32.totalorder %s32, 1
      %p441 = scmp.ne.s32.totalorder %s436, %s438
      %p442 = scmp.eq.s32.totalorder %s32, 0
      %p443 = por %p441, %p442
      %p444 = scmp.ne.s32.totalorder %s436, %s438
      %p445 = scmp.eq.s32.totalorder %s37, 1
      %p446 = por %p444, %p445
      %p447 = scmp.ne.s32.totalorder %s438, %s439
      %p448 = scmp.eq.s32.totalorder %s37, 0
      %p449 = por %p447, %p448
      %p450 = scmp.ne.s32.totalorder %s438, %s439
      %p451 = scmp.eq.s32.totalorder %s38, 1
      %p452 = por %p450, %p451
      %p454 = scmp.ne.s32.totalorder %s439, %s453
      %p455 = scmp.eq.s32.totalorder %s38, 0
      %p456 = por %p454, %p455
      %s458 = sadd.s32 %s457, 1
      %p461 = scmp.eq.s32.totalorder %s32, 1
      %p462 = scmp.ne.s32.totalorder %s457, %s459
      %p463 = scmp.eq.s32.totalorder %s32, 0
      %p464 = por %p462, %p463
      %p465 = scmp.ne.s32.totalorder %s457, %s459
      %p466 = scmp.eq.s32.totalorder %s37, 1
      %p467 = por %p465, %p466
      %p468 = scmp.ne.s32.totalorder %s459, %s460
      %p469 = scmp.eq.s32.totalorder %s37, 0
      %p470 = por %p468, %p469
      %p471 = scmp.ne.s32.totalorder %s459, %s460
      %p472 = scmp.eq.s32.totalorder %s38, 1
      %p473 = por %p471, %p472
      %p475 = scmp.ne.s32.totalorder %s460, %s474
      %p476 = scmp.eq.s32.totalorder %s38, 0
      %p477 = por %p475, %p476
      %s479 = sadd.s32 %s478, 1
      %p482 = scmp.eq.s32.totalorder %s32, 1
      %p483 = scmp.ne.s32.totalorder %s478, %s480
      %p484 = scmp.eq.s32.totalorder %s32, 0
      %p485 = por %p483, %p484
      %p486 = scmp.ne.s32.totalorder %s478, %s480
      %p487 = scmp.eq.s32.totalorder %s37, 1
      %p488 = por %p486, %p487
      %p489 = scmp.ne.s32.totalorder %s480, %s481
      %p490 = scmp.eq.s32.totalorder %s37, 0
      %p491 = por %p489, %p490
      %p492 = scmp.ne.s32.totalorder %s480, %s481
      %p493 = scmp.eq.s32.totalorder %s38, 1
      %p494 = por %p492, %p493
      %p496 = scmp.ne.s32.totalorder %s481, %s495
      %p497 = scmp.eq.s32.totalorder %s38, 0
      %p498 = por %p496, %p497
      %s500 = sadd.s32 %s499, 1
      %p503 = scmp.eq.s32.totalorder %s32, 1
      %p504 = scmp.ne.s32.totalorder %s499, %s501
      %p505 = scmp.eq.s32.totalorder %s32, 0
      %p506 = por %p504, %p505
      %p507 = scmp.ne.s32.totalorder %s499, %s501
      %p508 = scmp.eq.s32.totalorder %s37, 1
      %p509 = por %p507, %p508
      %p510 = scmp.ne.s32.totalorder %s501, %s502
      %p511 = scmp.eq.s32.totalorder %s37, 0
      %p512 = por %p510, %p511
      %p513 = scmp.ne.s32.totalorder %s501, %s502
      %p514 = scmp.eq.s32.totalorder %s38, 1
      %p515 = por %p513, %p514
      %p517 = scmp.ne.s32.totalorder %s502, %s516
      %p518 = scmp.eq.s32.totalorder %s38, 0
      %p519 = por %p517, %p518
      %s521 = sadd.s32 %s520, 1
      %p524 = scmp.eq.s32.totalorder %s32, 1
      %p525 = scmp.ne.s32.totalorder %s520, %s522
      %p526 = scmp.eq.s32.totalorder %s32, 0
      %p527 = por %p525, %p526
      %p528 = scmp.ne.s32.totalorder %s520, %s522
      %p529 = scmp.eq.s32.totalorder %s37, 1
      %p530 = por %p528, %p529
      %p531 = scmp.ne.s32.totalorder %s522, %s523
      %p532 = scmp.eq.s32.totalorder %s37, 0
      %p533 = por %p531, %p532
      %p534 = scmp.ne.s32.totalorder %s522, %s523
      %p535 = scmp.eq.s32.totalorder %s38, 1
      %p536 = por %p534, %p535
      %p538 = scmp.ne.s32.totalorder %s523, %s537
      %p539 = scmp.eq.s32.totalorder %s38, 0
      %p540 = por %p538, %p539
      %s542 = sadd.s32 %s541, 1
      %p545 = scmp.eq.s32.totalorder %s32, 1
      %p546 = scmp.ne.s32.totalorder %s541, %s543
      %p547 = scmp.eq.s32.totalorder %s32, 0
      %p548 = por %p546, %p547
      %p549 = scmp.ne.s32.totalorder %s541, %s543
      %p550 = scmp.eq.s32.totalorder %s37, 1
      %p551 = por %p549, %p550
      %p552 = scmp.ne.s32.totalorder %s543, %s544
      %p553 = scmp.eq.s32.totalorder %s37, 0
      %p554 = por %p552, %p553
      %p555 = scmp.ne.s32.totalorder %s543, %s544
      %p556 = scmp.eq.s32.totalorder %s38, 1
      %p557 = por %p555, %p556
      %p559 = scmp.ne.s32.totalorder %s544, %s558
      %p560 = scmp.eq.s32.totalorder %s38, 0
      %p561 = por %p559, %p560
      %s563 = sadd.s32 %s562, 1
      %p566 = scmp.eq.s32.totalorder %s32, 1
      %p567 = scmp.ne.s32.totalorder %s562, %s564
      %p568 = scmp.eq.s32.totalorder %s32, 0
      %p569 = por %p567, %p568
      %p570 = scmp.ne.s32.totalorder %s562, %s564
      %p571 = scmp.eq.s32.totalorder %s37, 1
      %p572 = por %p570, %p571
      %p573 = scmp.ne.s32.totalorder %s564, %s565
      %p574 = scmp.eq.s32.totalorder %s37, 0
      %p575 = por %p573, %p574
      %p576 = scmp.ne.s32.totalorder %s564, %s565
      %p577 = scmp.eq.s32.totalorder %s38, 1
      %p578 = por %p576, %p577
      %p580 = scmp.ne.s32.totalorder %s565, %s579
      %p581 = scmp.eq.s32.totalorder %s38, 0
      %p582 = por %p580, %p581
      %s584 = sadd.s32 %s583, 1
      %p587 = scmp.eq.s32.totalorder %s32, 1
      %p588 = scmp.ne.s32.totalorder %s583, %s585
      %p589 = scmp.eq.s32.totalorder %s32, 0
      %p590 = por %p588, %p589
      %p591 = scmp.ne.s32.totalorder %s583, %s585
      %p592 = scmp.eq.s32.totalorder %s37, 1
      %p593 = por %p591, %p592
      %p594 = scmp.ne.s32.totalorder %s585, %s586
      %p595 = scmp.eq.s32.totalorder %s37, 0
      %p596 = por %p594, %p595
      %p597 = scmp.ne.s32.totalorder %s585, %s586
      %p598 = scmp.eq.s32.totalorder %s38, 1
      %p599 = por %p597, %p598
      %p601 = scmp.ne.s32.totalorder %s586, %s600
      %p602 = scmp.eq.s32.totalorder %s38, 0
      %p603 = por %p601, %p602
      %s605 = sadd.s32 %s604, 1
      %p608 = scmp.eq.s32.totalorder %s32, 1
      %p609 = scmp.ne.s32.totalorder %s604, %s606
      %p610 = scmp.eq.s32.totalorder %s32, 0
      %p611 = por %p609, %p610
      %p612 = scmp.ne.s32.totalorder %s604, %s606
      %p613 = scmp.eq.s32.totalorder %s37, 1
      %p614 = por %p612, %p613
      %p615 = scmp.ne.s32.totalorder %s606, %s607
      %p616 = scmp.eq.s32.totalorder %s37, 0
      %p617 = por %p615, %p616
      %p618 = scmp.ne.s32.totalorder %s606, %s607
      %p619 = scmp.eq.s32.totalorder %s38, 1
      %p620 = por %p618, %p619
      %p622 = scmp.ne.s32.totalorder %s607, %s621
      %p623 = scmp.eq.s32.totalorder %s38, 0
      %p624 = por %p622, %p623
      %s626 = sadd.s32 %s625, 1
      %p629 = scmp.eq.s32.totalorder %s32, 1
      %p630 = scmp.ne.s32.totalorder %s625, %s627
      %p631 = scmp.eq.s32.totalorder %s32, 0
      %p632 = por %p630, %p631
      %p633 = scmp.ne.s32.totalorder %s625, %s627
      %p634 = scmp.eq.s32.totalorder %s37, 1
      %p635 = por %p633, %p634
      %p636 = scmp.ne.s32.totalorder %s627, %s628
      %p637 = scmp.eq.s32.totalorder %s37, 0
      %p638 = por %p636, %p637
      %p639 = scmp.ne.s32.totalorder %s627, %s628
      %p640 = scmp.eq.s32.totalorder %s38, 1
      %p641 = por %p639, %p640
      %p643 = scmp.ne.s32.totalorder %s628, %s642
      %p644 = scmp.eq.s32.totalorder %s38, 0
      %p645 = por %p643, %p644
      %p646 = scmp.le.s32.totalorder 1, %s32
      %p647 = scmp.lt.s32.totalorder %s32, 3
      %p648 = pnand %p646, %p647
      %p649 = pneg %p648
      // Predicated region
      $region9: #{tpu_custom_call.1} parent=5 // pred_check
        _
      $region10: #{tpu_custom_call.1} parent=5 // pred_check_branch
        %651 = sbr.rel (%p648) target = $region12
      $region11: #{tpu_custom_call.1} parent=5 // pred_region
        %s652 = ssub.s32 %s32, 1
        // Predicated region
        $region13: #{tpu_custom_call.1} parent=11 // pred_check
          %p653 = pneg %p53
        $region14: #{tpu_custom_call.1} parent=11 // pred_check_branch
          %655 = sbr.rel (%p653) target = $region16
        $region15: #{tpu_custom_call.1} parent=11 // pred_region
          _
        $region16: #{tpu_custom_call.1} parent=11 // pred_fallthru
          _
        // Predicated region
        $region17: #{tpu_custom_call.1} parent=11 // pred_check
          %p656 = pneg %p74
        $region18: #{tpu_custom_call.1} parent=11 // pred_check_branch
          %658 = sbr.rel (%p656) target = $region20
        $region19: #{tpu_custom_call.1} parent=11 // pred_region
          _
        $region20: #{tpu_custom_call.1} parent=11 // pred_fallthru
          _
        // Predicated region
        $region21: #{tpu_custom_call.1} parent=11 // pred_check
          %p659 = pneg %p95
        $region22: #{tpu_custom_call.1} parent=11 // pred_check_branch
          %661 = sbr.rel (%p659) target = $region24
        $region23: #{tpu_custom_call.1} parent=11 // pred_region
          _
        $region24: #{tpu_custom_call.1} parent=11 // pred_fallthru
          _
        // Predicated region
        $region25: #{tpu_custom_call.1} parent=11 // pred_check
          %p662 = pneg %p428
        $region26: #{tpu_custom_call.1} parent=11 // pred_check_branch
          %664 = sbr.rel (%p662) target = $region28
        $region27: #{tpu_custom_call.1} parent=11 // pred_region
          _
        $region28: #{tpu_custom_call.1} parent=11 // pred_fallthru
          _
        // Predicated region
        $region29: #{tpu_custom_call.1} parent=11 // pred_check
          %p665 = pneg %p449
        $region30: #{tpu_custom_call.1} parent=11 // pred_check_branch
          %667 = sbr.rel (%p665) target = $region32
        $region31: #{tpu_custom_call.1} parent=11 // pred_region
          _
        $region32: #{tpu_custom_call.1} parent=11 // pred_fallthru
          _
        // Predicated region
        $region33: #{tpu_custom_call.1} parent=11 // pred_check
          %p668 = pneg %p470
        $region34: #{tpu_custom_call.1} parent=11 // pred_check_branch
          %670 = sbr.rel (%p668) target = $region36
        $region35: #{tpu_custom_call.1} parent=11 // pred_region
          _
        $region36: #{tpu_custom_call.1} parent=11 // pred_fallthru
          _
        // Predicated region
        $region37: #{tpu_custom_call.1} parent=11 // pred_check
          %p671 = pneg %p491
        $region38: #{tpu_custom_call.1} parent=11 // pred_check_branch
          %673 = sbr.rel (%p671) target = $region40
        $region39: #{tpu_custom_call.1} parent=11 // pred_region
          _
        $region40: #{tpu_custom_call.1} parent=11 // pred_fallthru
          _
        // Predicated region
        $region41: #{tpu_custom_call.1} parent=11 // pred_check
          %p674 = pneg %p512
        $region42: #{tpu_custom_call.1} parent=11 // pred_check_branch
          %676 = sbr.rel (%p674) target = $region44
        $region43: #{tpu_custom_call.1} parent=11 // pred_region
          _
        $region44: #{tpu_custom_call.1} parent=11 // pred_fallthru
          _
        // Predicated region
        $region45: #{tpu_custom_call.1} parent=11 // pred_check
          %p677 = pneg %p533
        $region46: #{tpu_custom_call.1} parent=11 // pred_check_branch
          %679 = sbr.rel (%p677) target = $region48
        $region47: #{tpu_custom_call.1} parent=11 // pred_region
          _
        $region48: #{tpu_custom_call.1} parent=11 // pred_fallthru
          _
        // Predicated region
        $region49: #{tpu_custom_call.1} parent=11 // pred_check
          %p680 = pneg %p554
        $region50: #{tpu_custom_call.1} parent=11 // pred_check_branch
          %682 = sbr.rel (%p680) target = $region52
        $region51: #{tpu_custom_call.1} parent=11 // pred_region
          _
        $region52: #{tpu_custom_call.1} parent=11 // pred_fallthru
          _
        // Predicated region
        $region53: #{tpu_custom_call.1} parent=11 // pred_check
          %p683 = pneg %p575
        $region54: #{tpu_custom_call.1} parent=11 // pred_check_branch
          %685 = sbr.rel (%p683) target = $region56
        $region55: #{tpu_custom_call.1} parent=11 // pred_region
          _
        $region56: #{tpu_custom_call.1} parent=11 // pred_fallthru
          _
        // Predicated region
        $region57: #{tpu_custom_call.1} parent=11 // pred_check
          %p686 = pneg %p596
        $region58: #{tpu_custom_call.1} parent=11 // pred_check_branch
          %688 = sbr.rel (%p686) target = $region60
        $region59: #{tpu_custom_call.1} parent=11 // pred_region
          _
        $region60: #{tpu_custom_call.1} parent=11 // pred_fallthru
          _
        // Predicated region
        $region61: #{tpu_custom_call.1} parent=11 // pred_check
          %p689 = pneg %p617
        $region62: #{tpu_custom_call.1} parent=11 // pred_check_branch
          %691 = sbr.rel (%p689) target = $region64
        $region63: #{tpu_custom_call.1} parent=11 // pred_region
          _
        $region64: #{tpu_custom_call.1} parent=11 // pred_fallthru
          _
      $region12: #{tpu_custom_call.1} parent=5 // pred_fallthru
        _
      %p692 = scmp.lt.s32.totalorder %s32, 2
      // Predicated region
      $region65: #{tpu_custom_call.1} parent=5 // pred_check
        %p693 = pneg %p692
      $region66: #{tpu_custom_call.1} parent=5 // pred_check_branch
        %695 = sbr.rel (%p693) target = $region68
      $region67: #{tpu_custom_call.1} parent=5 // pred_region
        // Predicated region
        $region69: #{tpu_custom_call.1} parent=67 // pred_check
          %p696 = pneg %p115
        $region70: #{tpu_custom_call.1} parent=67 // pred_check_branch
          %698 = sbr.rel (%p696) target = $region72
        $region71: #{tpu_custom_call.1} parent=67 // pred_region
          %p699 = scmp.lt.s32.totalorder %s32, 1
          %s700 = scalar_select %p699, %s32, 1
          %s701 = smul.addr %s700, 4
          %s702 = smul.addr %s701, 4
          %s703 = scalar_lea.vmem %s3, %s702
        $region72: #{tpu_custom_call.1} parent=67 // pred_fallthru
          _
        // Predicated region
        $region73: #{tpu_custom_call.1} parent=67 // pred_check
          %p704 = pneg %p141
        $region74: #{tpu_custom_call.1} parent=67 // pred_check_branch
          %706 = sbr.rel (%p704) target = $region76
        $region75: #{tpu_custom_call.1} parent=67 // pred_region
          %p707 = scmp.lt.s32.totalorder %s32, 1
          %s708 = scalar_select %p707, %s32, 1
          %s709 = scalar_lea.vmem %s4, %s708
        $region76: #{tpu_custom_call.1} parent=67 // pred_fallthru
          _
        // Predicated region
        $region77: #{tpu_custom_call.1} parent=67 // pred_check
          %p710 = pneg %p167
        $region78: #{tpu_custom_call.1} parent=67 // pred_check_branch
          %712 = sbr.rel (%p710) target = $region80
        $region79: #{tpu_custom_call.1} parent=67 // pred_region
          %p713 = scmp.lt.s32.totalorder %s32, 1
          %s714 = scalar_select %p713, %s32, 1
          %s715 = smul.addr %s714, 4
          %s716 = smul.addr %s715, 4
          %s717 = scalar_lea.vmem %s5, %s716
        $region80: #{tpu_custom_call.1} parent=67 // pred_fallthru
          _
        // Predicated region
        $region81: #{tpu_custom_call.1} parent=67 // pred_check
          %p718 = pneg %p193
        $region82: #{tpu_custom_call.1} parent=67 // pred_check_branch
          %720 = sbr.rel (%p718) target = $region84
        $region83: #{tpu_custom_call.1} parent=67 // pred_region
          %p721 = scmp.lt.s32.totalorder %s32, 1
          %s722 = scalar_select %p721, %s32, 1
          %s723 = scalar_lea.vmem %s6, %s722
        $region84: #{tpu_custom_call.1} parent=67 // pred_fallthru
          _
        // Predicated region
        $region85: #{tpu_custom_call.1} parent=67 // pred_check
          %p724 = pneg %p219
        $region86: #{tpu_custom_call.1} parent=67 // pred_check_branch
          %726 = sbr.rel (%p724) target = $region88
        $region87: #{tpu_custom_call.1} parent=67 // pred_region
          %p727 = scmp.lt.s32.totalorder %s32, 1
          %s728 = scalar_select %p727, %s32, 1
          %s729 = scalar_lea.vmem %s7, %s728
        $region88: #{tpu_custom_call.1} parent=67 // pred_fallthru
          _
        // Predicated region
        $region89: #{tpu_custom_call.1} parent=67 // pred_check
          %p730 = pneg %p245
        $region90: #{tpu_custom_call.1} parent=67 // pred_check_branch
          %732 = sbr.rel (%p730) target = $region92
        $region91: #{tpu_custom_call.1} parent=67 // pred_region
          %p733 = scmp.lt.s32.totalorder %s32, 1
          %s734 = scalar_select %p733, %s32, 1
          %s735 = scalar_lea.vmem %s8, %s734
        $region92: #{tpu_custom_call.1} parent=67 // pred_fallthru
          _
        // Predicated region
        $region93: #{tpu_custom_call.1} parent=67 // pred_check
          %p736 = pneg %p271
        $region94: #{tpu_custom_call.1} parent=67 // pred_check_branch
          %738 = sbr.rel (%p736) target = $region96
        $region95: #{tpu_custom_call.1} parent=67 // pred_region
          %p739 = scmp.lt.s32.totalorder %s32, 1
          %s740 = scalar_select %p739, %s32, 1
          %s741 = smul.addr %s740, 64
          %s742 = smul.addr %s741, 4
          %s743 = scalar_lea.vmem %s9, %s742
        $region96: #{tpu_custom_call.1} parent=67 // pred_fallthru
          _
        // Predicated region
        $region97: #{tpu_custom_call.1} parent=67 // pred_check
          %p744 = pneg %p297
        $region98: #{tpu_custom_call.1} parent=67 // pred_check_branch
          %746 = sbr.rel (%p744) target = $region100
        $region99: #{tpu_custom_call.1} parent=67 // pred_region
          %p747 = scmp.lt.s32.totalorder %s32, 1
          %s748 = scalar_select %p747, %s32, 1
          %s749 = smul.addr %s748, 16
          %s750 = scalar_lea.vmem %s10, %s749
        $region100: #{tpu_custom_call.1} parent=67 // pred_fallthru
          _
        // Predicated region
        $region101: #{tpu_custom_call.1} parent=67 // pred_check
          %p751 = pneg %p323
        $region102: #{tpu_custom_call.1} parent=67 // pred_check_branch
          %753 = sbr.rel (%p751) target = $region104
        $region103: #{tpu_custom_call.1} parent=67 // pred_region
          %p754 = scmp.lt.s32.totalorder %s32, 1
          %s755 = scalar_select %p754, %s32, 1
          %s756 = smul.addr %s755, 256
          %s757 = smul.addr %s756, 4
          %s758 = scalar_lea.vmem %s11, %s757
        $region104: #{tpu_custom_call.1} parent=67 // pred_fallthru
          _
        // Predicated region
        $region105: #{tpu_custom_call.1} parent=67 // pred_check
          %p759 = pneg %p349
        $region106: #{tpu_custom_call.1} parent=67 // pred_check_branch
          %761 = sbr.rel (%p759) target = $region108
        $region107: #{tpu_custom_call.1} parent=67 // pred_region
          %p762 = scmp.lt.s32.totalorder %s32, 1
          %s763 = scalar_select %p762, %s32, 1
          %s764 = scalar_lea.vmem %s12, %s763
        $region108: #{tpu_custom_call.1} parent=67 // pred_fallthru
          _
        // Predicated region
        $region109: #{tpu_custom_call.1} parent=67 // pred_check
          %p765 = pneg %p375
        $region110: #{tpu_custom_call.1} parent=67 // pred_check_branch
          %767 = sbr.rel (%p765) target = $region112
        $region111: #{tpu_custom_call.1} parent=67 // pred_region
          %p768 = scmp.lt.s32.totalorder %s32, 1
          %s769 = scalar_select %p768, %s32, 1
          %s770 = scalar_lea.vmem %s13, %s769
        $region112: #{tpu_custom_call.1} parent=67 // pred_fallthru
          _
        // Predicated region
        $region113: #{tpu_custom_call.1} parent=67 // pred_check
          %p771 = pneg %p401
        $region114: #{tpu_custom_call.1} parent=67 // pred_check_branch
          %773 = sbr.rel (%p771) target = $region116
        $region115: #{tpu_custom_call.1} parent=67 // pred_region
          %p774 = scmp.lt.s32.totalorder %s32, 1
          %s775 = scalar_select %p774, %s32, 1
          %s776 = scalar_lea.vmem %s14, %s775
        $region116: #{tpu_custom_call.1} parent=67 // pred_fallthru
          _
      $region68: #{tpu_custom_call.1} parent=5 // pred_fallthru
        _
      %p777 = scmp.le.s32.totalorder 1, %s32
      %p778 = scmp.lt.s32.totalorder %s32, 3
      %p779 = pnand %p777, %p778
      %p780 = pneg %p779
      // Predicated region
      $region117: #{tpu_custom_call.1} parent=5 // pred_check
        _
      $region118: #{tpu_custom_call.1} parent=5 // pred_check_branch
        %782 = sbr.rel (%p779) target = $region120
      $region119: #{tpu_custom_call.1} parent=5 // pred_region
        %s783 = ssub.s32 %s32, 1
        %p784 = pneg %p53
        %p785 = pneg %p50
        %p786 = pneg %p74
        %p787 = pneg %p71
        %p788 = pneg %p95
        %p789 = pneg %p92
        %p790 = scmp.lt.s32.totalorder %s37, 1
        %s791 = scalar_select %p790, %s37, 1
        %s792 = smul.addr %s791, 4
        %s793 = smul.addr %s792, 4
        %s794 = scalar_lea.vmem %s3, %s793
        %p795 = pneg %p121
        %p796 = pneg %p118
        %p797 = scmp.lt.s32.totalorder %s37, 1
        %s798 = scalar_select %p797, %s37, 1
        %s799 = scalar_lea.vmem %s4, %s798
        %p800 = pneg %p147
        %p801 = pneg %p144
        %p802 = scmp.lt.s32.totalorder %s37, 1
        %s803 = scalar_select %p802, %s37, 1
        %s804 = smul.addr %s803, 4
        %s805 = smul.addr %s804, 4
        %s806 = scalar_lea.vmem %s5, %s805
        %p807 = pneg %p173
        %p808 = pneg %p170
        %p809 = scmp.lt.s32.totalorder %s37, 1
        %s810 = scalar_select %p809, %s37, 1
        %s811 = scalar_lea.vmem %s6, %s810
        %p812 = pneg %p199
        %p813 = pneg %p196
        %p814 = scmp.lt.s32.totalorder %s37, 1
        %s815 = scalar_select %p814, %s37, 1
        %s816 = scalar_lea.vmem %s7, %s815
        %p817 = pneg %p225
        %p818 = pneg %p222
        %p819 = scmp.lt.s32.totalorder %s37, 1
        %s820 = scalar_select %p819, %s37, 1
        %s821 = scalar_lea.vmem %s8, %s820
        %p822 = pneg %p251
        %p823 = pneg %p248
        %p824 = scmp.lt.s32.totalorder %s37, 1
        %s825 = scalar_select %p824, %s37, 1
        %s826 = smul.addr %s825, 64
        %s827 = smul.addr %s826, 4
        %s828 = scalar_lea.vmem %s9, %s827
        %p829 = pneg %p277
        %p830 = pneg %p274
        %p831 = scmp.lt.s32.totalorder %s37, 1
        %s832 = scalar_select %p831, %s37, 1
        %s833 = smul.addr %s832, 16
        %s834 = scalar_lea.vmem %s10, %s833
        %p835 = pneg %p303
        %p836 = pneg %p300
        %p837 = scmp.lt.s32.totalorder %s37, 1
        %s838 = scalar_select %p837, %s37, 1
        %s839 = smul.addr %s838, 256
        %s840 = smul.addr %s839, 4
        %s841 = scalar_lea.vmem %s11, %s840
        %p842 = pneg %p329
        %p843 = pneg %p326
        %p844 = scmp.lt.s32.totalorder %s37, 1
        %s845 = scalar_select %p844, %s37, 1
        %s846 = scalar_lea.vmem %s12, %s845
        %p847 = pneg %p355
        %p848 = pneg %p352
        %p849 = scmp.lt.s32.totalorder %s37, 1
        %s850 = scalar_select %p849, %s37, 1
        %s851 = scalar_lea.vmem %s13, %s850
        %p852 = pneg %p381
        %p853 = pneg %p378
        %p854 = scmp.lt.s32.totalorder %s37, 1
        %s855 = scalar_select %p854, %s37, 1
        %s856 = scalar_lea.vmem %s14, %s855
        %p857 = pneg %p407
        %p858 = pneg %p404
        %p859 = pneg %p428
        %p860 = pneg %p425
        %p861 = pneg %p449
        %p862 = pneg %p446
        %p863 = pneg %p470
        %p864 = pneg %p467
        %p865 = pneg %p491
        %p866 = pneg %p488
        %p867 = pneg %p512
        %p868 = pneg %p509
        %p869 = pneg %p533
        %p870 = pneg %p530
        %p871 = pneg %p554
        %p872 = pneg %p551
        %p873 = pneg %p575
        %p874 = pneg %p572
        %p875 = pneg %p596
        %p876 = pneg %p593
        %p877 = pneg %p617
        %p878 = pneg %p614
        %p879 = pneg %p638
        %p880 = pneg %p635
        %p881 = scmp.lt.s32.totalorder %s37, 1
        %s882 = scalar_select %p881, %s37, 1
        %s883 = smul.addr %s882, 4
        %s884 = smul.addr %s883, 4
        %s885 = scalar_lea.vmem %s3, %s884
        %p886 = scmp.lt.s32.totalorder %s37, 1
        %s887 = scalar_select %p886, %s37, 1
        %s888 = scalar_lea.vmem %s4, %s887
        %p889 = scmp.lt.s32.totalorder %s37, 1
        %s890 = scalar_select %p889, %s37, 1
        %s891 = smul.addr %s890, 4
        %s892 = smul.addr %s891, 4
        %s893 = scalar_lea.vmem %s5, %s892
        %p894 = scmp.lt.s32.totalorder %s37, 1
        %s895 = scalar_select %p894, %s37, 1
        %s896 = scalar_lea.vmem %s6, %s895
        %p897 = scmp.lt.s32.totalorder %s37, 1
        %s898 = scalar_select %p897, %s37, 1
        %s899 = scalar_lea.vmem %s7, %s898
        %p900 = scmp.lt.s32.totalorder %s37, 1
        %s901 = scalar_select %p900, %s37, 1
        %s902 = scalar_lea.vmem %s8, %s901
        %p903 = scmp.lt.s32.totalorder %s37, 1
        %s904 = scalar_select %p903, %s37, 1
        %s905 = smul.addr %s904, 64
        %s906 = smul.addr %s905, 4
        %s907 = scalar_lea.vmem %s9, %s906
        %p908 = scmp.lt.s32.totalorder %s37, 1
        %s909 = scalar_select %p908, %s37, 1
        %s910 = smul.addr %s909, 16
        %s911 = scalar_lea.vmem %s10, %s910
        %p912 = scmp.lt.s32.totalorder %s37, 1
        %s913 = scalar_select %p912, %s37, 1
        %s914 = smul.addr %s913, 256
        %s915 = smul.addr %s914, 4
        %s916 = scalar_lea.vmem %s11, %s915
        %p917 = scmp.lt.s32.totalorder %s37, 1
        %s918 = scalar_select %p917, %s37, 1
        %s919 = scalar_lea.vmem %s12, %s918
        %p920 = scmp.lt.s32.totalorder %s37, 1
        %s921 = scalar_select %p920, %s37, 1
        %s922 = scalar_lea.vmem %s13, %s921
        %p923 = scmp.lt.s32.totalorder %s37, 1
        %s924 = scalar_select %p923, %s37, 1
        %s925 = scalar_lea.vmem %s14, %s924
        %p927 = scmp.eq.s32.totalorder %s37, 0
        // Predicated region
        $region121: #{tpu_custom_call.1} parent=119 // pred_check
          %p928 = pneg %p927
        $region122: #{tpu_custom_call.1} parent=119 // pred_check_branch
          %930 = sbr.rel (%p928) target = $region124
        $region123: #{tpu_custom_call.1} parent=119 // pred_region
          %v931 = vld [vmem:[%s0] sm:$0xff]
          %v932 = vld [vmem:[%s0 + $0x8] sm:$0xff]
          %v933 = vlaneseq
          %v934 = vand.u32 %v933, 127
          %935 = vset.pattern.permute.xlu0 0
          %936 = vperm.xlu0 %935, %v931
          %v937 = vpop.permute.xlu0 %936
          %938 = vset.pattern.permute.xlu0 0
          %939 = vperm.xlu0 %938, %v932
          %v940 = vpop.permute.xlu0 %939
          %vm941 = vcmp.eq.s32.totalorder %v934, %v937
          %vm942 = vcmp.eq.s32.totalorder %v934, %v940
          %v943 = vsel %vm941, 1, 0
          %v944 = vsel %vm942, 1, 0
          %v945 = vcvt.s32.f32 %v943
          %v946 = vcvt.s32.f32 %v944
          %v947 = vld [vmem:[%s1] sm:$0xff]
          %v948 = vld [vmem:[%s1 + $0x8] sm:$0xff]
          %v949 = vld [vmem:[%s1 + $0x10] sm:$0xff]
          %v950 = vld [vmem:[%s1 + $0x18] sm:$0xff]
          %v951 = vld [vmem:[%s1 + $0x20] sm:$0xff]
          %v952 = vld [vmem:[%s1 + $0x28] sm:$0xff]
          %v953 = vld [vmem:[%s1 + $0x30] sm:$0x3]
          %vm954 = vcmask 408576
          %v956 = vsel %vm954, %v945, 0
          %v959 = vsel %vm954, %v946, 0
          %vm961 = vcmask 1041408
          %v963 = vsel %vm961, %v953, 0
          %965 = vmatprep.subr.mxu0 0.0
          %966 = vmatpush1.msra.mxu0 %v947
          %967 = vmatprep.subr.mxu0 0.0
          %968 = vmatpush1.msra.mxu0 %v948
          %969 = vmatprep.subr.mxu0 0.0
          %970 = vmatpush1.msra.mxu0 %v949
          %971 = vmatprep.subr.mxu0 0.0
          %972 = vmatpush1.msra.mxu0 %v950
          %973 = vmatprep.subr.mxu0 0.0
          %974 = vmatpush1.msra.mxu0 %v951
          %975 = vmatprep.subr.mxu0 0.0
          %976 = vmatpush1.msra.mxu0 %v952
          %977 = vmatprep.subr.mxu0 0.0
          %978 = vmatpush1.msra.mxu0 %v963
          %979 = vmatprep.subr.mxu0 0.0
          %980 = vmatpush1.msra.mxu0 0.0
          %981 = vmatprep.subr.mxu0 0.0
          %982 = vmatpush1.msra.mxu0 0.0
          %983 = vmatprep.subr.mxu0 0.0
          %984 = vmatpush1.msra.mxu0 0.0
          %985 = vmatprep.subr.mxu0 0.0
          %986 = vmatpush1.msra.mxu0 0.0
          %987 = vmatprep.subr.mxu0 0.0
          %988 = vmatpush1.msra.mxu0 0.0
          %989 = vmatprep.subr.mxu0 0.0
          %990 = vmatpush1.msra.mxu0 0.0
          %991 = vmatprep.subr.mxu0 0.0
          %992 = vmatpush1.msra.mxu0 0.0
          %993 = vmatprep.subr.mxu0 0.0
          %994 = vmatpush1.msra.mxu0 0.0
          %995 = vmatprep.subr.mxu0 0.0
          %996 = vmatpush1.msra.mxu0 0.0
          %997 = vmatprep.subr.mxu0 0.0
          %998 = vmatpush1.msra.mxu0 0.0
          %999 = vmatprep.subr.mxu0 0.0
          %1000 = vmatpush1.msra.mxu0 0.0
          %1001 = vmatprep.subr.mxu0 0.0
          %1002 = vmatpush1.msra.mxu0 0.0
          %1003 = vmatprep.subr.mxu0 0.0
          %1004 = vmatpush1.msra.mxu0 0.0
          %1005 = vmatprep.subr.mxu0 0.0
          %1006 = vmatpush1.msra.mxu0 0.0
          %1007 = vmatprep.subr.mxu0 0.0
          %1008 = vmatpush1.msra.mxu0 0.0
          %1009 = vmatprep.subr.mxu0 0.0
          %1010 = vmatpush1.msra.mxu0 0.0
          %1011 = vmatprep.subr.mxu0 0.0
          %1012 = vmatpush1.msra.mxu0 0.0
          %1013 = vmatprep.subr.mxu0 0.0
          %1014 = vmatpush1.msra.mxu0 0.0
          %1015 = vmatprep.subr.mxu0 0.0
          %1016 = vmatpush1.msra.mxu0 0.0
          %1017 = vmatprep.subr.mxu0 0.0
          %1018 = vmatpush1.msra.mxu0 0.0
          %1019 = vmatprep.subr.mxu0 0.0
          %1020 = vmatpush1.msra.mxu0 0.0
          %1021 = vmatprep.subr.mxu0 0.0
          %1022 = vmatpush1.msra.mxu0 0.0
          %1023 = vmatprep.subr.mxu0 0.0
          %1024 = vmatpush1.msra.mxu0 0.0
          %1025 = vmatprep.subr.mxu0 0.0
          %1026 = vmatpush1.msra.mxu0 0.0
          %1027 = vmatprep.subr.mxu0 0.0
          %1028 = vmatpush1.msra.mxu0 0.0
          %1029 = vmatprep.mubr.f32.mxu0 0.0
          %1030 = vmatmul.mubr.f32.gmra.mrb[0].mxu0 %v956
          %v1031 = vpop.f32.mrb[0].mxu0
          %v1032 = vadd.f32 0.0, %v1031
          %v1033 = vpop.f32.mrb[0].mxu0
          %1034 = vmatprep.mubr.f32.mxu0 0.0
          %1035 = vmatmul.mubr.f32.gmra.mrb[0].mxu0 %v959
          %v1036 = vpop.f32.mrb[0].mxu0
          %v1037 = vadd.f32 0.0, %v1036
          %v1038 = vpop.f32.mrb[0].mxu0
          %1039 = vdwg.mxu0
          %v1040 = vld [vmem:[%s2] sm:$0xff]
          %v1041 = vadd.f32 %v1032, %v1040
          %v1042 = vadd.f32 %v1037, %v1040
          %vm1043 = vcmask 261120
          %1044 = vst.msk [vmem:[#allocation2] sm:$0xff] %vm1043, %v1041
          %1045 = vst.msk [vmem:[#allocation2 + $0x8] sm:$0xff] %vm1043, %v1042
        $region124: #{tpu_custom_call.1} parent=119 // pred_fallthru
          _
        %v1046 = vld [vmem:[#allocation2] sm:$0xff]
        %v1047 = vld [vmem:[#allocation2 + $0x8] sm:$0xff]
        %v1048 = vpack.c.bf16 %v1047, %v1046
        %v1049 = vld [vmem:[%s885] sm:$0xf]
        %v1050 = vld [vmem:[%s885 + $0x4] sm:$0xf]
        %v1051 = vld [vmem:[%s885 + $0x8] sm:$0xf]
        %v1052 = vld [vmem:[%s885 + $0xc] sm:$0xf]
        %v1053 = vld [vmem:[%s888] sm:$0x1]
        %v1055 = vlaneseq
        %v1056 = vshrl.u32 %v1055, 7
        %v1057 = vsub.s32 0, %v1056
        %v1058 = vrot.slane %v1053, %v1057
        %v1064 = vunpack.c.l.b16 %v1049
        %v1065 = vunpack.c.l.b16 %v1050
        %v1066 = vunpack.c.l.b16 %v1051
        %v1067 = vunpack.c.l.b16 %v1052
        %v1068 = vpack.c.b16 %v1065, %v1064
        %v1069 = vpack.c.b16 %v1067, %v1066
        %vm1072 = vcmask 261120
        %v1074 = vsel %vm1072, %v1048, 0
        %1076 = vmatprep.subr.bf16.mxu0 0
        %1077 = vmatpush1.bf16.msra.mxu0 %v1068
        %1078 = vmatprep.subr.bf16.mxu0 0
        %1079 = vmatpush1.bf16.msra.mxu0 %v1069
        %1080 = vmatprep.subr.bf16.mxu0 0
        %1081 = vmatpush1.bf16.msra.mxu0 0
        %1082 = vmatprep.subr.bf16.mxu0 0
        %1083 = vmatpush1.bf16.msra.mxu0 0
        %1084 = vmatprep.subr.bf16.mxu0 0
        %1085 = vmatpush1.bf16.msra.mxu0 0
        %1086 = vmatprep.subr.bf16.mxu0 0
        %1087 = vmatpush1.bf16.msra.mxu0 0
        %1088 = vmatprep.subr.bf16.mxu0 0
        %1089 = vmatpush1.bf16.msra.mxu0 0
        %1090 = vmatprep.subr.bf16.mxu0 0
        %1091 = vmatpush1.bf16.msra.mxu0 0
        %1092 = vmatprep.subr.bf16.mxu0 0
        %1093 = vmatpush1.bf16.msra.mxu0 0
        %1094 = vmatprep.subr.bf16.mxu0 0
        %1095 = vmatpush1.bf16.msra.mxu0 0
        %1096 = vmatprep.subr.bf16.mxu0 0
        %1097 = vmatpush1.bf16.msra.mxu0 0
        %1098 = vmatprep.subr.bf16.mxu0 0
        %1099 = vmatpush1.bf16.msra.mxu0 0
        %1100 = vmatprep.subr.bf16.mxu0 0
        %1101 = vmatpush1.bf16.msra.mxu0 0
        %1102 = vmatprep.subr.bf16.mxu0 0
        %1103 = vmatpush1.bf16.msra.mxu0 0
        %1104 = vmatprep.subr.bf16.mxu0 0
        %1105 = vmatpush1.bf16.msra.mxu0 0
        %1106 = vmatprep.subr.bf16.mxu0 0
        %1107 = vmatpush1.bf16.msra.mxu0 0
        %1108 = vmatprep.mubr.bf16.mxu0 0
        %1109 = vmatmul.mubr.bf16.gmra.mrb[0].mxu0 %v1074
        %v1110 = vpop.f32.mrb[0].mxu0
        %v1111 = vadd.f32 %v1058, %v1110
        %v1112 = vpop.f32.mrb[0].mxu0
        %v1113 = vpop.f32.mrb[0].mxu0
        %v1114 = vadd.f32 %v1058, %v1113
        %v1115 = vpop.f32.mrb[0].mxu0
        %1116 = vdwg.mxu0
        %v1117 = vpack.c.bf16 %v1114, %v1111
        %v1119 = vunpack.c.l.b16 %v1117
        %v1120 = vunpack.c.h.b16 %v1117
        %v1121 = vpack.c.b16 %v1119, %v1119
        %v1122 = vpack.c.b16 %v1120, %v1120
        %1123 = vrot.lane.b32.xlu0 %v1121, 96
        %v1124 = vpop.permute.xlu0 %1123
        %vm1125 = vcmask 64512
        %v1127 = vsel %vm1125, %v1121, 0
        %v1130 = vsel %vm1125, %v1124, 0
        %1132 = vmatprep.subr.bf16.mxu0 0
        %1133 = vmatpush1.bf16.xpose.msra.mxu0 %v1130
        %1134 = vmatprep.subr.bf16.mxu0 0
        %1135 = vmatpush1.bf16.xpose.msra.mxu0 0
        %1136 = vmatprep.subr.bf16.mxu0 0
        %1137 = vmatpush1.bf16.xpose.msra.mxu0 0
        %1138 = vmatprep.subr.bf16.mxu0 0
        %1139 = vmatpush1.bf16.xpose.msra.mxu0 0
        %1140 = vmatprep.subr.bf16.mxu0 0
        %1141 = vmatpush1.bf16.xpose.msra.mxu0 0
        %1142 = vmatprep.subr.bf16.mxu0 0
        %1143 = vmatpush1.bf16.xpose.msra.mxu0 0
        %1144 = vmatprep.subr.bf16.mxu0 0
        %1145 = vmatpush1.bf16.xpose.msra.mxu0 0
        %1146 = vmatprep.subr.bf16.mxu0 0
        %1147 = vmatpush1.bf16.xpose.msra.mxu0 0
        %1148 = vmatprep.subr.bf16.mxu0 0
        %1149 = vmatpush1.bf16.xpose.msra.mxu0 0
        %1150 = vmatprep.subr.bf16.mxu0 0
        %1151 = vmatpush1.bf16.xpose.msra.mxu0 0
        %1152 = vmatprep.subr.bf16.mxu0 0
        %1153 = vmatpush1.bf16.xpose.msra.mxu0 0
        %1154 = vmatprep.subr.bf16.mxu0 0
        %1155 = vmatpush1.bf16.xpose.msra.mxu0 0
        %1156 = vmatprep.subr.bf16.mxu0 0
        %1157 = vmatpush1.bf16.xpose.msra.mxu0 0
        %1158 = vmatprep.subr.bf16.mxu0 0
        %1159 = vmatpush1.bf16.xpose.msra.mxu0 0
        %1160 = vmatprep.subr.bf16.mxu0 0
        %1161 = vmatpush1.bf16.xpose.msra.mxu0 0
        %1162 = vmatprep.subr.bf16.mxu0 0
        %1163 = vmatpush1.bf16.xpose.msra.mxu0 0
        %1164 = vmatprep.mubr.bf16.mxu0 0
        %1165 = vmatmul.mubr.bf16.gmra.mrb[0].mxu0 %v1127
        %v1166 = vpop.f32.mrb[0].mxu0
        %v1167 = vadd.f32 0.0, %v1166
        %v1168 = vpop.f32.mrb[0].mxu0
        %v1169 = vpop.f32.mrb[0].mxu0
        %v1170 = vpop.f32.mrb[0].mxu0
        %1171 = vdwg.mxu0
        %1172 = vrot.lane.b32.xlu0 %v1122, 96
        %v1173 = vpop.permute.xlu0 %1172
        %v1175 = vsel %vm1125, %v1122, 0
        %v1178 = vsel %vm1125, %v1173, 0
        %1180 = vmatprep.subr.bf16.mxu0 0
        %1181 = vmatpush1.bf16.xpose.msra.mxu0 %v1178
        %1182 = vmatprep.subr.bf16.mxu0 0
        %1183 = vmatpush1.bf16.xpose.msra.mxu0 0
        %1184 = vmatprep.subr.bf16.mxu0 0
        %1185 = vmatpush1.bf16.xpose.msra.mxu0 0
        %1186 = vmatprep.subr.bf16.mxu0 0
        %1187 = vmatpush1.bf16.xpose.msra.mxu0 0
        %1188 = vmatprep.subr.bf16.mxu0 0
        %1189 = vmatpush1.bf16.xpose.msra.mxu0 0
        %1190 = vmatprep.subr.bf16.mxu0 0
        %1191 = vmatpush1.bf16.xpose.msra.mxu0 0
        %1192 = vmatprep.subr.bf16.mxu0 0
        %1193 = vmatpush1.bf16.xpose.msra.mxu0 0
        %1194 = vmatprep.subr.bf16.mxu0 0
        %1195 = vmatpush1.bf16.xpose.msra.mxu0 0
        %1196 = vmatprep.subr.bf16.mxu0 0
        %1197 = vmatpush1.bf16.xpose.msra.mxu0 0
        %1198 = vmatprep.subr.bf16.mxu0 0
        %1199 = vmatpush1.bf16.xpose.msra.mxu0 0
        %1200 = vmatprep.subr.bf16.mxu0 0
        %1201 = vmatpush1.bf16.xpose.msra.mxu0 0
        %1202 = vmatprep.subr.bf16.mxu0 0
        %1203 = vmatpush1.bf16.xpose.msra.mxu0 0
        %1204 = vmatprep.subr.bf16.mxu0 0
        %1205 = vmatpush1.bf16.xpose.msra.mxu0 0
        %1206 = vmatprep.subr.bf16.mxu0 0
        %1207 = vmatpush1.bf16.xpose.msra.mxu0 0
        %1208 = vmatprep.subr.bf16.mxu0 0
        %1209 = vmatpush1.bf16.xpose.msra.mxu0 0
        %1210 = vmatprep.subr.bf16.mxu0 0
        %1211 = vmatpush1.bf16.xpose.msra.mxu0 0
        %1212 = vmatprep.mubr.bf16.mxu0 0
        %1213 = vmatmul.mubr.bf16.gmra.mrb[0].mxu0 %v1175
        %v1214 = vpop.f32.mrb[0].mxu0
        %v1215 = vadd.f32 0.0, %v1214
        %v1216 = vpop.f32.mrb[0].mxu0
        %v1217 = vpop.f32.mrb[0].mxu0
        %v1218 = vpop.f32.mrb[0].mxu0
        %1219 = vdwg.mxu0
        %v1220 = vsel %vm1125, %v1167, -inf
        %1221 = vmax.xlane.f32.xlu0 %v1220
        %v1222 = vpop.xlane.xlu0 %1221
        %v1223 = vsel %vm1125, %v1215, -inf
        %1224 = vmax.xlane.f32.xlu0 %v1223
        %v1225 = vpop.xlane.xlu0 %1224
        %v1226 = vsub.f32 %v1167, %v1222
        %v1227 = vsub.f32 %v1215, %v1225
        %v1228 = vmul.f32 %v1226, 1.442695
        %v1229 = vpow.pop %v1228
        %v1230 = vmul.f32 %v1227, 1.442695
        %v1231 = vpow.pop %v1230
        %v1232 = vsel %vm1125, %v1229, 0.0
        %1233 = vadd.xlane.f32.xlu0 %v1232
        %v1234 = vpop.xlane.xlu0 %1233
        %v1235 = vsel %vm1125, %v1231, 0.0
        %1236 = vadd.xlane.f32.xlu0 %v1235
        %v1237 = vpop.xlane.xlu0 %1236
        %v1238 = vrcp.pop %v1234
        %v1239 = vrcp.pop %v1237
        %v1240 = vmul.f32 %v1229, %v1238
        %v1241 = vmul.f32 %v1231, %v1239
        %v1242 = vpack.c.bf16 %v1240, %v1240
        %v1243 = vpack.c.bf16 %v1241, %v1241
        %1244 = vrot.lane.b32.xlu0 %v1121, 64
        %v1245 = vpop.permute.xlu0 %1244
        %v1247 = vsel %vm1125, %v1242, 0
        %vm1249 = vcmask 1043456
        %v1251 = vsel %vm1249, %v1245, 0
        %1253 = vmatprep.subr.bf16.mxu0 0
        %1254 = vmatpush1.bf16.msra.mxu0 %v1251
        %1255 = vmatprep.subr.bf16.mxu0 0
        %1256 = vmatpush1.bf16.msra.mxu0 0
        %1257 = vmatprep.subr.bf16.mxu0 0
        %1258 = vmatpush1.bf16.msra.mxu0 0
        %1259 = vmatprep.subr.bf16.mxu0 0
        %1260 = vmatpush1.bf16.msra.mxu0 0
        %1261 = vmatprep.subr.bf16.mxu0 0
        %1262 = vmatpush1.bf16.msra.mxu0 0
        %1263 = vmatprep.subr.bf16.mxu0 0
        %1264 = vmatpush1.bf16.msra.mxu0 0
        %1265 = vmatprep.subr.bf16.mxu0 0
        %1266 = vmatpush1.bf16.msra.mxu0 0
        %1267 = vmatprep.subr.bf16.mxu0 0
        %1268 = vmatpush1.bf16.msra.mxu0 0
        %1269 = vmatprep.subr.bf16.mxu0 0
        %1270 = vmatpush1.bf16.msra.mxu0 0
        %1271 = vmatprep.subr.bf16.mxu0 0
        %1272 = vmatpush1.bf16.msra.mxu0 0
        %1273 = vmatprep.subr.bf16.mxu0 0
        %1274 = vmatpush1.bf16.msra.mxu0 0
        %1275 = vmatprep.subr.bf16.mxu0 0
        %1276 = vmatpush1.bf16.msra.mxu0 0
        %1277 = vmatprep.subr.bf16.mxu0 0
        %1278 = vmatpush1.bf16.msra.mxu0 0
        %1279 = vmatprep.subr.bf16.mxu0 0
        %1280 = vmatpush1.bf16.msra.mxu0 0
        %1281 = vmatprep.subr.bf16.mxu0 0
        %1282 = vmatpush1.bf16.msra.mxu0 0
        %1283 = vmatprep.subr.bf16.mxu0 0
        %1284 = vmatpush1.bf16.msra.mxu0 0
        %1285 = vmatprep.mubr.bf16.mxu0 0
        %1286 = vmatmul.mubr.bf16.gmra.mrb[0].mxu0 %v1247
        %v1287 = vpop.f32.mrb[0].mxu0
        %v1288 = vadd.f32 0.0, %v1287
        %v1289 = vpop.f32.mrb[0].mxu0
        %v1290 = vpop.f32.mrb[0].mxu0
        %v1291 = vpop.f32.mrb[0].mxu0
        %1292 = vdwg.mxu0
        %1293 = vrot.lane.b32.xlu0 %v1122, 64
        %v1294 = vpop.permute.xlu0 %1293
        %v1296 = vsel %vm1125, %v1243, 0
        %v1299 = vsel %vm1249, %v1294, 0
        %1301 = vmatprep.subr.bf16.mxu0 0
        %1302 = vmatpush1.bf16.msra.mxu0 %v1299
        %1303 = vmatprep.subr.bf16.mxu0 0
        %1304 = vmatpush1.bf16.msra.mxu0 0
        %1305 = vmatprep.subr.bf16.mxu0 0
        %1306 = vmatpush1.bf16.msra.mxu0 0
        %1307 = vmatprep.subr.bf16.mxu0 0
        %1308 = vmatpush1.bf16.msra.mxu0 0
        %1309 = vmatprep.subr.bf16.mxu0 0
        %1310 = vmatpush1.bf16.msra.mxu0 0
        %1311 = vmatprep.subr.bf16.mxu0 0
        %1312 = vmatpush1.bf16.msra.mxu0 0
        %1313 = vmatprep.subr.bf16.mxu0 0
        %1314 = vmatpush1.bf16.msra.mxu0 0
        %1315 = vmatprep.subr.bf16.mxu0 0
        %1316 = vmatpush1.bf16.msra.mxu0 0
        %1317 = vmatprep.subr.bf16.mxu0 0
        %1318 = vmatpush1.bf16.msra.mxu0 0
        %1319 = vmatprep.subr.bf16.mxu0 0
        %1320 = vmatpush1.bf16.msra.mxu0 0
        %1321 = vmatprep.subr.bf16.mxu0 0
        %1322 = vmatpush1.bf16.msra.mxu0 0
        %1323 = vmatprep.subr.bf16.mxu0 0
        %1324 = vmatpush1.bf16.msra.mxu0 0
        %1325 = vmatprep.subr.bf16.mxu0 0
        %1326 = vmatpush1.bf16.msra.mxu0 0
        %1327 = vmatprep.subr.bf16.mxu0 0
        %1328 = vmatpush1.bf16.msra.mxu0 0
        %1329 = vmatprep.subr.bf16.mxu0 0
        %1330 = vmatpush1.bf16.msra.mxu0 0
        %1331 = vmatprep.subr.bf16.mxu0 0
        %1332 = vmatpush1.bf16.msra.mxu0 0
        %1333 = vmatprep.mubr.bf16.mxu0 0
        %1334 = vmatmul.mubr.bf16.gmra.mrb[0].mxu0 %v1296
        %v1335 = vpop.f32.mrb[0].mxu0
        %v1336 = vadd.f32 0.0, %v1335
        %v1337 = vpop.f32.mrb[0].mxu0
        %v1338 = vpop.f32.mrb[0].mxu0
        %v1339 = vpop.f32.mrb[0].mxu0
        %1340 = vdwg.mxu0
        %1341 = vrot.lane.b32.xlu0 %v1121, 120
        %v1342 = vpop.permute.xlu0 %1341
        %1343 = vrot.lane.b32.xlu0 %v1121, 88
        %v1344 = vpop.permute.xlu0 %1343
        %v1346 = vsel %vm1125, %v1342, 0
        %v1349 = vsel %vm1125, %v1344, 0
        %1351 = vmatprep.subr.bf16.mxu0 0
        %1352 = vmatpush1.bf16.xpose.msra.mxu0 %v1349
        %1353 = vmatprep.subr.bf16.mxu0 0
        %1354 = vmatpush1.bf16.xpose.msra.mxu0 0
        %1355 = vmatprep.subr.bf16.mxu0 0
        %1356 = vmatpush1.bf16.xpose.msra.mxu0 0
        %1357 = vmatprep.subr.bf16.mxu0 0
        %1358 = vmatpush1.bf16.xpose.msra.mxu0 0
        %1359 = vmatprep.subr.bf16.mxu0 0
        %1360 = vmatpush1.bf16.xpose.msra.mxu0 0
        %1361 = vmatprep.subr.bf16.mxu0 0
        %1362 = vmatpush1.bf16.xpose.msra.mxu0 0
        %1363 = vmatprep.subr.bf16.mxu0 0
        %1364 = vmatpush1.bf16.xpose.msra.mxu0 0
        %1365 = vmatprep.subr.bf16.mxu0 0
        %1366 = vmatpush1.bf16.xpose.msra.mxu0 0
        %1367 = vmatprep.subr.bf16.mxu0 0
        %1368 = vmatpush1.bf16.xpose.msra.mxu0 0
        %1369 = vmatprep.subr.bf16.mxu0 0
        %1370 = vmatpush1.bf16.xpose.msra.mxu0 0
        %1371 = vmatprep.subr.bf16.mxu0 0
        %1372 = vmatpush1.bf16.xpose.msra.mxu0 0
        %1373 = vmatprep.subr.bf16.mxu0 0
        %1374 = vmatpush1.bf16.xpose.msra.mxu0 0
        %1375 = vmatprep.subr.bf16.mxu0 0
        %1376 = vmatpush1.bf16.xpose.msra.mxu0 0
        %1377 = vmatprep.subr.bf16.mxu0 0
        %1378 = vmatpush1.bf16.xpose.msra.mxu0 0
        %1379 = vmatprep.subr.bf16.mxu0 0
        %1380 = vmatpush1.bf16.xpose.msra.mxu0 0
        %1381 = vmatprep.subr.bf16.mxu0 0
        %1382 = vmatpush1.bf16.xpose.msra.mxu0 0
        %1383 = vmatprep.mubr.bf16.mxu0 0
        %1384 = vmatmul.mubr.bf16.gmra.mrb[0].mxu0 %v1346
        %v1385 = vpop.f32.mrb[0].mxu0
        %v1386 = vadd.f32 0.0, %v1385
        %v1387 = vpop.f32.mrb[0].mxu0
        %v1388 = vpop.f32.mrb[0].mxu0
        %v1389 = vpop.f32.mrb[0].mxu0
        %1390 = vdwg.mxu0
        %1391 = vrot.lane.b32.xlu0 %v1122, 120
        %v1392 = vpop.permute.xlu0 %1391
        %1393 = vrot.lane.b32.xlu0 %v1122, 88
        %v1394 = vpop.permute.xlu0 %1393
        %v1396 = vsel %vm1125, %v1392, 0
        %v1399 = vsel %vm1125, %v1394, 0
        %1401 = vmatprep.subr.bf16.mxu0 0
        %1402 = vmatpush1.bf16.xpose.msra.mxu0 %v1399
        %1403 = vmatprep.subr.bf16.mxu0 0
        %1404 = vmatpush1.bf16.xpose.msra.mxu0 0
        %1405 = vmatprep.subr.bf16.mxu0 0
        %1406 = vmatpush1.bf16.xpose.msra.mxu0 0
        %1407 = vmatprep.subr.bf16.mxu0 0
        %1408 = vmatpush1.bf16.xpose.msra.mxu0 0
        %1409 = vmatprep.subr.bf16.mxu0 0
        %1410 = vmatpush1.bf16.xpose.msra.mxu0 0
        %1411 = vmatprep.subr.bf16.mxu0 0
        %1412 = vmatpush1.bf16.xpose.msra.mxu0 0
        %1413 = vmatprep.subr.bf16.mxu0 0
        %1414 = vmatpush1.bf16.xpose.msra.mxu0 0
        %1415 = vmatprep.subr.bf16.mxu0 0
        %1416 = vmatpush1.bf16.xpose.msra.mxu0 0
        %1417 = vmatprep.subr.bf16.mxu0 0
        %1418 = vmatpush1.bf16.xpose.msra.mxu0 0
        %1419 = vmatprep.subr.bf16.mxu0 0
        %1420 = vmatpush1.bf16.xpose.msra.mxu0 0
        %1421 = vmatprep.subr.bf16.mxu0 0
        %1422 = vmatpush1.bf16.xpose.msra.mxu0 0
        %1423 = vmatprep.subr.bf16.mxu0 0
        %1424 = vmatpush1.bf16.xpose.msra.mxu0 0
        %1425 = vmatprep.subr.bf16.mxu0 0
        %1426 = vmatpush1.bf16.xpose.msra.mxu0 0
        %1427 = vmatprep.subr.bf16.mxu0 0
        %1428 = vmatpush1.bf16.xpose.msra.mxu0 0
        %1429 = vmatprep.subr.bf16.mxu0 0
        %1430 = vmatpush1.bf16.xpose.msra.mxu0 0
        %1431 = vmatprep.subr.bf16.mxu0 0
        %1432 = vmatpush1.bf16.xpose.msra.mxu0 0
        %1433 = vmatprep.mubr.bf16.mxu0 0
        %1434 = vmatmul.mubr.bf16.gmra.mrb[0].mxu0 %v1396
        %v1435 = vpop.f32.mrb[0].mxu0
        %v1436 = vadd.f32 0.0, %v1435
        %v1437 = vpop.f32.mrb[0].mxu0
        %v1438 = vpop.f32.mrb[0].mxu0
        %v1439 = vpop.f32.mrb[0].mxu0
        %1440 = vdwg.mxu0
        %v1441 = vsel %vm1125, %v1386, -inf
        %1442 = vmax.xlane.f32.xlu0 %v1441
        %v1443 = vpop.xlane.xlu0 %1442
        %v1444 = vsel %vm1125, %v1436, -inf
        %1445 = vmax.xlane.f32.xlu0 %v1444
        %v1446 = vpop.xlane.xlu0 %1445
        %v1447 = vsub.f32 %v1386, %v1443
        %v1448 = vsub.f32 %v1436, %v1446
        %v1449 = vmul.f32 %v1447, 1.442695
        %v1450 = vpow.pop %v1449
        %v1451 = vmul.f32 %v1448, 1.442695
        %v1452 = vpow.pop %v1451
        %v1453 = vsel %vm1125, %v1450, 0.0
        %1454 = vadd.xlane.f32.xlu0 %v1453
        %v1455 = vpop.xlane.xlu0 %1454
        %v1456 = vsel %vm1125, %v1452, 0.0
        %1457 = vadd.xlane.f32.xlu0 %v1456
        %v1458 = vpop.xlane.xlu0 %1457
        %v1459 = vrcp.pop %v1455
        %v1460 = vrcp.pop %v1458
        %v1461 = vmul.f32 %v1450, %v1459
        %v1462 = vmul.f32 %v1452, %v1460
        %v1463 = vpack.c.bf16 %v1461, %v1461
        %v1464 = vpack.c.bf16 %v1462, %v1462
        %1465 = vrot.lane.b32.xlu0 %v1121, 56
        %v1466 = vpop.permute.xlu0 %1465
        %v1468 = vsel %vm1125, %v1463, 0
        %v1471 = vsel %vm1249, %v1466, 0
        %1473 = vmatprep.subr.bf16.mxu0 0
        %1474 = vmatpush1.bf16.msra.mxu0 %v1471
        %1475 = vmatprep.subr.bf16.mxu0 0
        %1476 = vmatpush1.bf16.msra.mxu0 0
        %1477 = vmatprep.subr.bf16.mxu0 0
        %1478 = vmatpush1.bf16.msra.mxu0 0
        %1479 = vmatprep.subr.bf16.mxu0 0
        %1480 = vmatpush1.bf16.msra.mxu0 0
        %1481 = vmatprep.subr.bf16.mxu0 0
        %1482 = vmatpush1.bf16.msra.mxu0 0
        %1483 = vmatprep.subr.bf16.mxu0 0
        %1484 = vmatpush1.bf16.msra.mxu0 0
        %1485 = vmatprep.subr.bf16.mxu0 0
        %1486 = vmatpush1.bf16.msra.mxu0 0
        %1487 = vmatprep.subr.bf16.mxu0 0
        %1488 = vmatpush1.bf16.msra.mxu0 0
        %1489 = vmatprep.subr.bf16.mxu0 0
        %1490 = vmatpush1.bf16.msra.mxu0 0
        %1491 = vmatprep.subr.bf16.mxu0 0
        %1492 = vmatpush1.bf16.msra.mxu0 0
        %1493 = vmatprep.subr.bf16.mxu0 0
        %1494 = vmatpush1.bf16.msra.mxu0 0
        %1495 = vmatprep.subr.bf16.mxu0 0
        %1496 = vmatpush1.bf16.msra.mxu0 0
        %1497 = vmatprep.subr.bf16.mxu0 0
        %1498 = vmatpush1.bf16.msra.mxu0 0
        %1499 = vmatprep.subr.bf16.mxu0 0
        %1500 = vmatpush1.bf16.msra.mxu0 0
        %1501 = vmatprep.subr.bf16.mxu0 0
        %1502 = vmatpush1.bf16.msra.mxu0 0
        %1503 = vmatprep.subr.bf16.mxu0 0
        %1504 = vmatpush1.bf16.msra.mxu0 0
        %1505 = vmatprep.mubr.bf16.mxu0 0
        %1506 = vmatmul.mubr.bf16.gmra.mrb[0].mxu0 %v1468
        %v1507 = vpop.f32.mrb[0].mxu0
        %v1508 = vadd.f32 0.0, %v1507
        %v1509 = vpop.f32.mrb[0].mxu0
        %v1510 = vpop.f32.mrb[0].mxu0
        %v1511 = vpop.f32.mrb[0].mxu0
        %1512 = vdwg.mxu0
        %1513 = vrot.lane.b32.xlu0 %v1122, 56
        %v1514 = vpop.permute.xlu0 %1513
        %v1516 = vsel %vm1125, %v1464, 0
        %v1519 = vsel %vm1249, %v1514, 0
        %1521 = vmatprep.subr.bf16.mxu0 0
        %1522 = vmatpush1.bf16.msra.mxu0 %v1519
        %1523 = vmatprep.subr.bf16.mxu0 0
        %1524 = vmatpush1.bf16.msra.mxu0 0
        %1525 = vmatprep.subr.bf16.mxu0 0
        %1526 = vmatpush1.bf16.msra.mxu0 0
        %1527 = vmatprep.subr.bf16.mxu0 0
        %1528 = vmatpush1.bf16.msra.mxu0 0
        %1529 = vmatprep.subr.bf16.mxu0 0
        %1530 = vmatpush1.bf16.msra.mxu0 0
        %1531 = vmatprep.subr.bf16.mxu0 0
        %1532 = vmatpush1.bf16.msra.mxu0 0
        %1533 = vmatprep.subr.bf16.mxu0 0
        %1534 = vmatpush1.bf16.msra.mxu0 0
        %1535 = vmatprep.subr.bf16.mxu0 0
        %1536 = vmatpush1.bf16.msra.mxu0 0
        %1537 = vmatprep.subr.bf16.mxu0 0
        %1538 = vmatpush1.bf16.msra.mxu0 0
        %1539 = vmatprep.subr.bf16.mxu0 0
        %1540 = vmatpush1.bf16.msra.mxu0 0
        %1541 = vmatprep.subr.bf16.mxu0 0
        %1542 = vmatpush1.bf16.msra.mxu0 0
        %1543 = vmatprep.subr.bf16.mxu0 0
        %1544 = vmatpush1.bf16.msra.mxu0 0
        %1545 = vmatprep.subr.bf16.mxu0 0
        %1546 = vmatpush1.bf16.msra.mxu0 0
        %1547 = vmatprep.subr.bf16.mxu0 0
        %1548 = vmatpush1.bf16.msra.mxu0 0
        %1549 = vmatprep.subr.bf16.mxu0 0
        %1550 = vmatpush1.bf16.msra.mxu0 0
        %1551 = vmatprep.subr.bf16.mxu0 0
        %1552 = vmatpush1.bf16.msra.mxu0 0
        %1553 = vmatprep.mubr.bf16.mxu0 0
        %1554 = vmatmul.mubr.bf16.gmra.mrb[0].mxu0 %v1516
        %v1555 = vpop.f32.mrb[0].mxu0
        %v1556 = vadd.f32 0.0, %v1555
        %v1557 = vpop.f32.mrb[0].mxu0
        %v1558 = vpop.f32.mrb[0].mxu0
        %v1559 = vpop.f32.mrb[0].mxu0
        %1560 = vdwg.mxu0
        %1561 = vrot.lane.b32.xlu0 %v1121, 112
        %v1562 = vpop.permute.xlu0 %1561
        %1563 = vrot.lane.b32.xlu0 %v1121, 80
        %v1564 = vpop.permute.xlu0 %1563
        %v1566 = vsel %vm1125, %v1562, 0
        %v1569 = vsel %vm1125, %v1564, 0
        %1571 = vmatprep.subr.bf16.mxu0 0
        %1572 = vmatpush1.bf16.xpose.msra.mxu0 %v1569
        %1573 = vmatprep.subr.bf16.mxu0 0
        %1574 = vmatpush1.bf16.xpose.msra.mxu0 0
        %1575 = vmatprep.subr.bf16.mxu0 0
        %1576 = vmatpush1.bf16.xpose.msra.mxu0 0
        %1577 = vmatprep.subr.bf16.mxu0 0
        %1578 = vmatpush1.bf16.xpose.msra.mxu0 0
        %1579 = vmatprep.subr.bf16.mxu0 0
        %1580 = vmatpush1.bf16.xpose.msra.mxu0 0
        %1581 = vmatprep.subr.bf16.mxu0 0
        %1582 = vmatpush1.bf16.xpose.msra.mxu0 0
        %1583 = vmatprep.subr.bf16.mxu0 0
        %1584 = vmatpush1.bf16.xpose.msra.mxu0 0
        %1585 = vmatprep.subr.bf16.mxu0 0
        %1586 = vmatpush1.bf16.xpose.msra.mxu0 0
        %1587 = vmatprep.subr.bf16.mxu0 0
        %1588 = vmatpush1.bf16.xpose.msra.mxu0 0
        %1589 = vmatprep.subr.bf16.mxu0 0
        %1590 = vmatpush1.bf16.xpose.msra.mxu0 0
        %1591 = vmatprep.subr.bf16.mxu0 0
        %1592 = vmatpush1.bf16.xpose.msra.mxu0 0
        %1593 = vmatprep.subr.bf16.mxu0 0
        %1594 = vmatpush1.bf16.xpose.msra.mxu0 0
        %1595 = vmatprep.subr.bf16.mxu0 0
        %1596 = vmatpush1.bf16.xpose.msra.mxu0 0
        %1597 = vmatprep.subr.bf16.mxu0 0
        %1598 = vmatpush1.bf16.xpose.msra.mxu0 0
        %1599 = vmatprep.subr.bf16.mxu0 0
        %1600 = vmatpush1.bf16.xpose.msra.mxu0 0
        %1601 = vmatprep.subr.bf16.mxu0 0
        %1602 = vmatpush1.bf16.xpose.msra.mxu0 0
        %1603 = vmatprep.mubr.bf16.mxu0 0
        %1604 = vmatmul.mubr.bf16.gmra.mrb[0].mxu0 %v1566
        %v1605 = vpop.f32.mrb[0].mxu0
        %v1606 = vadd.f32 0.0, %v1605
        %v1607 = vpop.f32.mrb[0].mxu0
        %v1608 = vpop.f32.mrb[0].mxu0
        %v1609 = vpop.f32.mrb[0].mxu0
        %1610 = vdwg.mxu0
        %1611 = vrot.lane.b32.xlu0 %v1122, 112
        %v1612 = vpop.permute.xlu0 %1611
        %1613 = vrot.lane.b32.xlu0 %v1122, 80
        %v1614 = vpop.permute.xlu0 %1613
        %v1616 = vsel %vm1125, %v1612, 0
        %v1619 = vsel %vm1125, %v1614, 0
        %1621 = vmatprep.subr.bf16.mxu0 0
        %1622 = vmatpush1.bf16.xpose.msra.mxu0 %v1619
        %1623 = vmatprep.subr.bf16.mxu0 0
        %1624 = vmatpush1.bf16.xpose.msra.mxu0 0
        %1625 = vmatprep.subr.bf16.mxu0 0
        %1626 = vmatpush1.bf16.xpose.msra.mxu0 0
        %1627 = vmatprep.subr.bf16.mxu0 0
        %1628 = vmatpush1.bf16.xpose.msra.mxu0 0
        %1629 = vmatprep.subr.bf16.mxu0 0
        %1630 = vmatpush1.bf16.xpose.msra.mxu0 0
        %1631 = vmatprep.subr.bf16.mxu0 0
        %1632 = vmatpush1.bf16.xpose.msra.mxu0 0
        %1633 = vmatprep.subr.bf16.mxu0 0
        %1634 = vmatpush1.bf16.xpose.msra.mxu0 0
        %1635 = vmatprep.subr.bf16.mxu0 0
        %1636 = vmatpush1.bf16.xpose.msra.mxu0 0
        %1637 = vmatprep.subr.bf16.mxu0 0
        %1638 = vmatpush1.bf16.xpose.msra.mxu0 0
        %1639 = vmatprep.subr.bf16.mxu0 0
        %1640 = vmatpush1.bf16.xpose.msra.mxu0 0
        %1641 = vmatprep.subr.bf16.mxu0 0
        %1642 = vmatpush1.bf16.xpose.msra.mxu0 0
        %1643 = vmatprep.subr.bf16.mxu0 0
        %1644 = vmatpush1.bf16.xpose.msra.mxu0 0
        %1645 = vmatprep.subr.bf16.mxu0 0
        %1646 = vmatpush1.bf16.xpose.msra.mxu0 0
        %1647 = vmatprep.subr.bf16.mxu0 0
        %1648 = vmatpush1.bf16.xpose.msra.mxu0 0
        %1649 = vmatprep.subr.bf16.mxu0 0
        %1650 = vmatpush1.bf16.xpose.msra.mxu0 0
        %1651 = vmatprep.subr.bf16.mxu0 0
        %1652 = vmatpush1.bf16.xpose.msra.mxu0 0
        %1653 = vmatprep.mubr.bf16.mxu0 0
        %1654 = vmatmul.mubr.bf16.gmra.mrb[0].mxu0 %v1616
        %v1655 = vpop.f32.mrb[0].mxu0
        %v1656 = vadd.f32 0.0, %v1655
        %v1657 = vpop.f32.mrb[0].mxu0
        %v1658 = vpop.f32.mrb[0].mxu0
        %v1659 = vpop.f32.mrb[0].mxu0
        %1660 = vdwg.mxu0
        %v1661 = vsel %vm1125, %v1606, -inf
        %1662 = vmax.xlane.f32.xlu0 %v1661
        %v1663 = vpop.xlane.xlu0 %1662
        %v1664 = vsel %vm1125, %v1656, -inf
        %1665 = vmax.xlane.f32.xlu0 %v1664
        %v1666 = vpop.xlane.xlu0 %1665
        %v1667 = vsub.f32 %v1606, %v1663
        %v1668 = vsub.f32 %v1656, %v1666
        %v1669 = vmul.f32 %v1667, 1.442695
        %v1670 = vpow.pop %v1669
        %v1671 = vmul.f32 %v1668, 1.442695
        %v1672 = vpow.pop %v1671
        %v1673 = vsel %vm1125, %v1670, 0.0
        %1674 = vadd.xlane.f32.xlu0 %v1673
        %v1675 = vpop.xlane.xlu0 %1674
        %v1676 = vsel %vm1125, %v1672, 0.0
        %1677 = vadd.xlane.f32.xlu0 %v1676
        %v1678 = vpop.xlane.xlu0 %1677
        %v1679 = vrcp.pop %v1675
        %v1680 = vrcp.pop %v1678
        %v1681 = vmul.f32 %v1670, %v1679
        %v1682 = vmul.f32 %v1672, %v1680
        %v1683 = vpack.c.bf16 %v1681, %v1681
        %v1684 = vpack.c.bf16 %v1682, %v1682
        %1685 = vrot.lane.b32.xlu0 %v1121, 48
        %v1686 = vpop.permute.xlu0 %1685
        %v1688 = vsel %vm1125, %v1683, 0
        %v1691 = vsel %vm1249, %v1686, 0
        %1693 = vmatprep.subr.bf16.mxu0 0
        %1694 = vmatpush1.bf16.msra.mxu0 %v1691
        %1695 = vmatprep.subr.bf16.mxu0 0
        %1696 = vmatpush1.bf16.msra.mxu0 0
        %1697 = vmatprep.subr.bf16.mxu0 0
        %1698 = vmatpush1.bf16.msra.mxu0 0
        %1699 = vmatprep.subr.bf16.mxu0 0
        %1700 = vmatpush1.bf16.msra.mxu0 0
        %1701 = vmatprep.subr.bf16.mxu0 0
        %1702 = vmatpush1.bf16.msra.mxu0 0
        %1703 = vmatprep.subr.bf16.mxu0 0
        %1704 = vmatpush1.bf16.msra.mxu0 0
        %1705 = vmatprep.subr.bf16.mxu0 0
        %1706 = vmatpush1.bf16.msra.mxu0 0
        %1707 = vmatprep.subr.bf16.mxu0 0
        %1708 = vmatpush1.bf16.msra.mxu0 0
        %1709 = vmatprep.subr.bf16.mxu0 0
        %1710 = vmatpush1.bf16.msra.mxu0 0
        %1711 = vmatprep.subr.bf16.mxu0 0
        %1712 = vmatpush1.bf16.msra.mxu0 0
        %1713 = vmatprep.subr.bf16.mxu0 0
        %1714 = vmatpush1.bf16.msra.mxu0 0
        %1715 = vmatprep.subr.bf16.mxu0 0
        %1716 = vmatpush1.bf16.msra.mxu0 0
        %1717 = vmatprep.subr.bf16.mxu0 0
        %1718 = vmatpush1.bf16.msra.mxu0 0
        %1719 = vmatprep.subr.bf16.mxu0 0
        %1720 = vmatpush1.bf16.msra.mxu0 0
        %1721 = vmatprep.subr.bf16.mxu0 0
        %1722 = vmatpush1.bf16.msra.mxu0 0
        %1723 = vmatprep.subr.bf16.mxu0 0
        %1724 = vmatpush1.bf16.msra.mxu0 0
        %1725 = vmatprep.mubr.bf16.mxu0 0
        %1726 = vmatmul.mubr.bf16.gmra.mrb[0].mxu0 %v1688
        %v1727 = vpop.f32.mrb[0].mxu0
        %v1728 = vadd.f32 0.0, %v1727
        %v1729 = vpop.f32.mrb[0].mxu0
        %v1730 = vpop.f32.mrb[0].mxu0
        %v1731 = vpop.f32.mrb[0].mxu0
        %1732 = vdwg.mxu0
        %1733 = vrot.lane.b32.xlu0 %v1122, 48
        %v1734 = vpop.permute.xlu0 %1733
        %v1736 = vsel %vm1125, %v1684, 0
        %v1739 = vsel %vm1249, %v1734, 0
        %1741 = vmatprep.subr.bf16.mxu0 0
        %1742 = vmatpush1.bf16.msra.mxu0 %v1739
        %1743 = vmatprep.subr.bf16.mxu0 0
        %1744 = vmatpush1.bf16.msra.mxu0 0
        %1745 = vmatprep.subr.bf16.mxu0 0
        %1746 = vmatpush1.bf16.msra.mxu0 0
        %1747 = vmatprep.subr.bf16.mxu0 0
        %1748 = vmatpush1.bf16.msra.mxu0 0
        %1749 = vmatprep.subr.bf16.mxu0 0
        %1750 = vmatpush1.bf16.msra.mxu0 0
        %1751 = vmatprep.subr.bf16.mxu0 0
        %1752 = vmatpush1.bf16.msra.mxu0 0
        %1753 = vmatprep.subr.bf16.mxu0 0
        %1754 = vmatpush1.bf16.msra.mxu0 0
        %1755 = vmatprep.subr.bf16.mxu0 0
        %1756 = vmatpush1.bf16.msra.mxu0 0
        %1757 = vmatprep.subr.bf16.mxu0 0
        %1758 = vmatpush1.bf16.msra.mxu0 0
        %1759 = vmatprep.subr.bf16.mxu0 0
        %1760 = vmatpush1.bf16.msra.mxu0 0
        %1761 = vmatprep.subr.bf16.mxu0 0
        %1762 = vmatpush1.bf16.msra.mxu0 0
        %1763 = vmatprep.subr.bf16.mxu0 0
        %1764 = vmatpush1.bf16.msra.mxu0 0
        %1765 = vmatprep.subr.bf16.mxu0 0
        %1766 = vmatpush1.bf16.msra.mxu0 0
        %1767 = vmatprep.subr.bf16.mxu0 0
        %1768 = vmatpush1.bf16.msra.mxu0 0
        %1769 = vmatprep.subr.bf16.mxu0 0
        %1770 = vmatpush1.bf16.msra.mxu0 0
        %1771 = vmatprep.subr.bf16.mxu0 0
        %1772 = vmatpush1.bf16.msra.mxu0 0
        %1773 = vmatprep.mubr.bf16.mxu0 0
        %1774 = vmatmul.mubr.bf16.gmra.mrb[0].mxu0 %v1736
        %v1775 = vpop.f32.mrb[0].mxu0
        %v1776 = vadd.f32 0.0, %v1775
        %v1777 = vpop.f32.mrb[0].mxu0
        %v1778 = vpop.f32.mrb[0].mxu0
        %v1779 = vpop.f32.mrb[0].mxu0
        %1780 = vdwg.mxu0
        %1781 = vrot.lane.b32.xlu0 %v1121, 104
        %v1782 = vpop.permute.xlu0 %1781
        %1783 = vrot.lane.b32.xlu0 %v1121, 72
        %v1784 = vpop.permute.xlu0 %1783
        %v1786 = vsel %vm1125, %v1782, 0
        %v1789 = vsel %vm1125, %v1784, 0
        %1791 = vmatprep.subr.bf16.mxu0 0
        %1792 = vmatpush1.bf16.xpose.msra.mxu0 %v1789
        %1793 = vmatprep.subr.bf16.mxu0 0
        %1794 = vmatpush1.bf16.xpose.msra.mxu0 0
        %1795 = vmatprep.subr.bf16.mxu0 0
        %1796 = vmatpush1.bf16.xpose.msra.mxu0 0
        %1797 = vmatprep.subr.bf16.mxu0 0
        %1798 = vmatpush1.bf16.xpose.msra.mxu0 0
        %1799 = vmatprep.subr.bf16.mxu0 0
        %1800 = vmatpush1.bf16.xpose.msra.mxu0 0
        %1801 = vmatprep.subr.bf16.mxu0 0
        %1802 = vmatpush1.bf16.xpose.msra.mxu0 0
        %1803 = vmatprep.subr.bf16.mxu0 0
        %1804 = vmatpush1.bf16.xpose.msra.mxu0 0
        %1805 = vmatprep.subr.bf16.mxu0 0
        %1806 = vmatpush1.bf16.xpose.msra.mxu0 0
        %1807 = vmatprep.subr.bf16.mxu0 0
        %1808 = vmatpush1.bf16.xpose.msra.mxu0 0
        %1809 = vmatprep.subr.bf16.mxu0 0
        %1810 = vmatpush1.bf16.xpose.msra.mxu0 0
        %1811 = vmatprep.subr.bf16.mxu0 0
        %1812 = vmatpush1.bf16.xpose.msra.mxu0 0
        %1813 = vmatprep.subr.bf16.mxu0 0
        %1814 = vmatpush1.bf16.xpose.msra.mxu0 0
        %1815 = vmatprep.subr.bf16.mxu0 0
        %1816 = vmatpush1.bf16.xpose.msra.mxu0 0
        %1817 = vmatprep.subr.bf16.mxu0 0
        %1818 = vmatpush1.bf16.xpose.msra.mxu0 0
        %1819 = vmatprep.subr.bf16.mxu0 0
        %1820 = vmatpush1.bf16.xpose.msra.mxu0 0
        %1821 = vmatprep.subr.bf16.mxu0 0
        %1822 = vmatpush1.bf16.xpose.msra.mxu0 0
        %1823 = vmatprep.mubr.bf16.mxu0 0
        %1824 = vmatmul.mubr.bf16.gmra.mrb[0].mxu0 %v1786
        %v1825 = vpop.f32.mrb[0].mxu0
        %v1826 = vadd.f32 0.0, %v1825
        %v1827 = vpop.f32.mrb[0].mxu0
        %v1828 = vpop.f32.mrb[0].mxu0
        %v1829 = vpop.f32.mrb[0].mxu0
        %1830 = vdwg.mxu0
        %1831 = vrot.lane.b32.xlu0 %v1122, 104
        %v1832 = vpop.permute.xlu0 %1831
        %1833 = vrot.lane.b32.xlu0 %v1122, 72
        %v1834 = vpop.permute.xlu0 %1833
        %v1836 = vsel %vm1125, %v1832, 0
        %v1839 = vsel %vm1125, %v1834, 0
        %1841 = vmatprep.subr.bf16.mxu0 0
        %1842 = vmatpush1.bf16.xpose.msra.mxu0 %v1839
        %1843 = vmatprep.subr.bf16.mxu0 0
        %1844 = vmatpush1.bf16.xpose.msra.mxu0 0
        %1845 = vmatprep.subr.bf16.mxu0 0
        %1846 = vmatpush1.bf16.xpose.msra.mxu0 0
        %1847 = vmatprep.subr.bf16.mxu0 0
        %1848 = vmatpush1.bf16.xpose.msra.mxu0 0
        %1849 = vmatprep.subr.bf16.mxu0 0
        %1850 = vmatpush1.bf16.xpose.msra.mxu0 0
        %1851 = vmatprep.subr.bf16.mxu0 0
        %1852 = vmatpush1.bf16.xpose.msra.mxu0 0
        %1853 = vmatprep.subr.bf16.mxu0 0
        %1854 = vmatpush1.bf16.xpose.msra.mxu0 0
        %1855 = vmatprep.subr.bf16.mxu0 0
        %1856 = vmatpush1.bf16.xpose.msra.mxu0 0
        %1857 = vmatprep.subr.bf16.mxu0 0
        %1858 = vmatpush1.bf16.xpose.msra.mxu0 0
        %1859 = vmatprep.subr.bf16.mxu0 0
        %1860 = vmatpush1.bf16.xpose.msra.mxu0 0
        %1861 = vmatprep.subr.bf16.mxu0 0
        %1862 = vmatpush1.bf16.xpose.msra.mxu0 0
        %1863 = vmatprep.subr.bf16.mxu0 0
        %1864 = vmatpush1.bf16.xpose.msra.mxu0 0
        %1865 = vmatprep.subr.bf16.mxu0 0
        %1866 = vmatpush1.bf16.xpose.msra.mxu0 0
        %1867 = vmatprep.subr.bf16.mxu0 0
        %1868 = vmatpush1.bf16.xpose.msra.mxu0 0
        %1869 = vmatprep.subr.bf16.mxu0 0
        %1870 = vmatpush1.bf16.xpose.msra.mxu0 0
        %1871 = vmatprep.subr.bf16.mxu0 0
        %1872 = vmatpush1.bf16.xpose.msra.mxu0 0
        %1873 = vmatprep.mubr.bf16.mxu0 0
        %1874 = vmatmul.mubr.bf16.gmra.mrb[0].mxu0 %v1836
        %v1875 = vpop.f32.mrb[0].mxu0
        %v1876 = vadd.f32 0.0, %v1875
        %v1877 = vpop.f32.mrb[0].mxu0
        %v1878 = vpop.f32.mrb[0].mxu0
        %v1879 = vpop.f32.mrb[0].mxu0
        %1880 = vdwg.mxu0
        %v1881 = vsel %vm1125, %v1826, -inf
        %1882 = vmax.xlane.f32.xlu0 %v1881
        %v1883 = vpop.xlane.xlu0 %1882
        %v1884 = vsel %vm1125, %v1876, -inf
        %1885 = vmax.xlane.f32.xlu0 %v1884
        %v1886 = vpop.xlane.xlu0 %1885
        %v1887 = vsub.f32 %v1826, %v1883
        %v1888 = vsub.f32 %v1876, %v1886
        %v1889 = vmul.f32 %v1887, 1.442695
        %v1890 = vpow.pop %v1889
        %v1891 = vmul.f32 %v1888, 1.442695
        %v1892 = vpow.pop %v1891
        %v1893 = vsel %vm1125, %v1890, 0.0
        %1894 = vadd.xlane.f32.xlu0 %v1893
        %v1895 = vpop.xlane.xlu0 %1894
        %v1896 = vsel %vm1125, %v1892, 0.0
        %1897 = vadd.xlane.f32.xlu0 %v1896
        %v1898 = vpop.xlane.xlu0 %1897
        %v1899 = vrcp.pop %v1895
        %v1900 = vrcp.pop %v1898
        %v1901 = vmul.f32 %v1890, %v1899
        %v1902 = vmul.f32 %v1892, %v1900
        %v1903 = vpack.c.bf16 %v1901, %v1901
        %v1904 = vpack.c.bf16 %v1902, %v1902
        %1905 = vrot.lane.b32.xlu0 %v1121, 40
        %v1906 = vpop.permute.xlu0 %1905
        %v1908 = vsel %vm1125, %v1903, 0
        %v1911 = vsel %vm1249, %v1906, 0
        %1913 = vmatprep.subr.bf16.mxu0 0
        %1914 = vmatpush1.bf16.msra.mxu0 %v1911
        %1915 = vmatprep.subr.bf16.mxu0 0
        %1916 = vmatpush1.bf16.msra.mxu0 0
        %1917 = vmatprep.subr.bf16.mxu0 0
        %1918 = vmatpush1.bf16.msra.mxu0 0
        %1919 = vmatprep.subr.bf16.mxu0 0
        %1920 = vmatpush1.bf16.msra.mxu0 0
        %1921 = vmatprep.subr.bf16.mxu0 0
        %1922 = vmatpush1.bf16.msra.mxu0 0
        %1923 = vmatprep.subr.bf16.mxu0 0
        %1924 = vmatpush1.bf16.msra.mxu0 0
        %1925 = vmatprep.subr.bf16.mxu0 0
        %1926 = vmatpush1.bf16.msra.mxu0 0
        %1927 = vmatprep.subr.bf16.mxu0 0
        %1928 = vmatpush1.bf16.msra.mxu0 0
        %1929 = vmatprep.subr.bf16.mxu0 0
        %1930 = vmatpush1.bf16.msra.mxu0 0
        %1931 = vmatprep.subr.bf16.mxu0 0
        %1932 = vmatpush1.bf16.msra.mxu0 0
        %1933 = vmatprep.subr.bf16.mxu0 0
        %1934 = vmatpush1.bf16.msra.mxu0 0
        %1935 = vmatprep.subr.bf16.mxu0 0
        %1936 = vmatpush1.bf16.msra.mxu0 0
        %1937 = vmatprep.subr.bf16.mxu0 0
        %1938 = vmatpush1.bf16.msra.mxu0 0
        %1939 = vmatprep.subr.bf16.mxu0 0
        %1940 = vmatpush1.bf16.msra.mxu0 0
        %1941 = vmatprep.subr.bf16.mxu0 0
        %1942 = vmatpush1.bf16.msra.mxu0 0
        %1943 = vmatprep.subr.bf16.mxu0 0
        %1944 = vmatpush1.bf16.msra.mxu0 0
        %1945 = vmatprep.mubr.bf16.mxu0 0
        %1946 = vmatmul.mubr.bf16.gmra.mrb[0].mxu0 %v1908
        %v1947 = vpop.f32.mrb[0].mxu0
        %v1948 = vadd.f32 0.0, %v1947
        %v1949 = vpop.f32.mrb[0].mxu0
        %v1950 = vpop.f32.mrb[0].mxu0
        %v1951 = vpop.f32.mrb[0].mxu0
        %1952 = vdwg.mxu0
        %1953 = vrot.lane.b32.xlu0 %v1122, 40
        %v1954 = vpop.permute.xlu0 %1953
        %v1956 = vsel %vm1125, %v1904, 0
        %v1959 = vsel %vm1249, %v1954, 0
        %1961 = vmatprep.subr.bf16.mxu0 0
        %1962 = vmatpush1.bf16.msra.mxu0 %v1959
        %1963 = vmatprep.subr.bf16.mxu0 0
        %1964 = vmatpush1.bf16.msra.mxu0 0
        %1965 = vmatprep.subr.bf16.mxu0 0
        %1966 = vmatpush1.bf16.msra.mxu0 0
        %1967 = vmatprep.subr.bf16.mxu0 0
        %1968 = vmatpush1.bf16.msra.mxu0 0
        %1969 = vmatprep.subr.bf16.mxu0 0
        %1970 = vmatpush1.bf16.msra.mxu0 0
        %1971 = vmatprep.subr.bf16.mxu0 0
        %1972 = vmatpush1.bf16.msra.mxu0 0
        %1973 = vmatprep.subr.bf16.mxu0 0
        %1974 = vmatpush1.bf16.msra.mxu0 0
        %1975 = vmatprep.subr.bf16.mxu0 0
        %1976 = vmatpush1.bf16.msra.mxu0 0
        %1977 = vmatprep.subr.bf16.mxu0 0
        %1978 = vmatpush1.bf16.msra.mxu0 0
        %1979 = vmatprep.subr.bf16.mxu0 0
        %1980 = vmatpush1.bf16.msra.mxu0 0
        %1981 = vmatprep.subr.bf16.mxu0 0
        %1982 = vmatpush1.bf16.msra.mxu0 0
        %1983 = vmatprep.subr.bf16.mxu0 0
        %1984 = vmatpush1.bf16.msra.mxu0 0
        %1985 = vmatprep.subr.bf16.mxu0 0
        %1986 = vmatpush1.bf16.msra.mxu0 0
        %1987 = vmatprep.subr.bf16.mxu0 0
        %1988 = vmatpush1.bf16.msra.mxu0 0
        %1989 = vmatprep.subr.bf16.mxu0 0
        %1990 = vmatpush1.bf16.msra.mxu0 0
        %1991 = vmatprep.subr.bf16.mxu0 0
        %1992 = vmatpush1.bf16.msra.mxu0 0
        %1993 = vmatprep.mubr.bf16.mxu0 0
        %1994 = vmatmul.mubr.bf16.gmra.mrb[0].mxu0 %v1956
        %v1995 = vpop.f32.mrb[0].mxu0
        %v1996 = vadd.f32 0.0, %v1995
        %v1997 = vpop.f32.mrb[0].mxu0
        %v1998 = vpop.f32.mrb[0].mxu0
        %v1999 = vpop.f32.mrb[0].mxu0
        %2000 = vdwg.mxu0
        %2003 = vrot.lane.b32.xlu0 %v1508, 8
        %v2004 = vpop.permute.xlu0 %2003
        %2005 = vrot.lane.b32.xlu0 %v1556, 8
        %v2006 = vpop.permute.xlu0 %2005
        %2011 = vrot.lane.b32.xlu0 %v1728, 16
        %v2012 = vpop.permute.xlu0 %2011
        %2013 = vrot.lane.b32.xlu0 %v1776, 16
        %v2014 = vpop.permute.xlu0 %2013
        %2019 = vrot.lane.b32.xlu0 %v1948, 24
        %v2020 = vpop.permute.xlu0 %2019
        %2021 = vrot.lane.b32.xlu0 %v1996, 24
        %v2022 = vpop.permute.xlu0 %2021
        %v2025 = vsel %vm1125, %v1288, %v2004
        %v2026 = vsel %vm1125, %v1336, %v2006
        %vm2027 = vcmask 130048
        %v2028 = vsel %vm2027, %v2025, %v2012
        %v2029 = vsel %vm2027, %v2026, %v2014
        %vm2030 = vcmask 195584
        %v2031 = vsel %vm2030, %v2028, %v2020
        %v2032 = vsel %vm2030, %v2029, %v2022
        %v2033 = vpack.c.bf16 %v2032, %v2031
        %v2034 = vld [vmem:[%s893] sm:$0xf]
        %v2035 = vld [vmem:[%s893 + $0x4] sm:$0xf]
        %v2036 = vld [vmem:[%s893 + $0x8] sm:$0xf]
        %v2037 = vld [vmem:[%s893 + $0xc] sm:$0xf]
        %v2038 = vld [vmem:[%s896] sm:$0x1]
        %v2040 = vlaneseq
        %v2041 = vshrl.u32 %v2040, 7
        %v2042 = vsub.s32 0, %v2041
        %v2043 = vrot.slane %v2038, %v2042
        %v2049 = vunpack.c.l.b16 %v2034
        %v2050 = vunpack.c.l.b16 %v2035
        %v2051 = vunpack.c.l.b16 %v2036
        %v2052 = vunpack.c.l.b16 %v2037
        %v2053 = vpack.c.b16 %v2050, %v2049
        %v2054 = vpack.c.b16 %v2052, %v2051
        %v2058 = vsel %vm1072, %v2033, 0
        %2060 = vmatprep.subr.bf16.mxu0 0
        %2061 = vmatpush1.bf16.msra.mxu0 %v2053
        %2062 = vmatprep.subr.bf16.mxu0 0
        %2063 = vmatpush1.bf16.msra.mxu0 %v2054
        %2064 = vmatprep.subr.bf16.mxu0 0
        %2065 = vmatpush1.bf16.msra.mxu0 0
        %2066 = vmatprep.subr.bf16.mxu0 0
        %2067 = vmatpush1.bf16.msra.mxu0 0
        %2068 = vmatprep.subr.bf16.mxu0 0
        %2069 = vmatpush1.bf16.msra.mxu0 0
        %2070 = vmatprep.subr.bf16.mxu0 0
        %2071 = vmatpush1.bf16.msra.mxu0 0
        %2072 = vmatprep.subr.bf16.mxu0 0
        %2073 = vmatpush1.bf16.msra.mxu0 0
        %2074 = vmatprep.subr.bf16.mxu0 0
        %2075 = vmatpush1.bf16.msra.mxu0 0
        %2076 = vmatprep.subr.bf16.mxu0 0
        %2077 = vmatpush1.bf16.msra.mxu0 0
        %2078 = vmatprep.subr.bf16.mxu0 0
        %2079 = vmatpush1.bf16.msra.mxu0 0
        %2080 = vmatprep.subr.bf16.mxu0 0
        %2081 = vmatpush1.bf16.msra.mxu0 0
        %2082 = vmatprep.subr.bf16.mxu0 0
        %2083 = vmatpush1.bf16.msra.mxu0 0
        %2084 = vmatprep.subr.bf16.mxu0 0
        %2085 = vmatpush1.bf16.msra.mxu0 0
        %2086 = vmatprep.subr.bf16.mxu0 0
        %2087 = vmatpush1.bf16.msra.mxu0 0
        %2088 = vmatprep.subr.bf16.mxu0 0
        %2089 = vmatpush1.bf16.msra.mxu0 0
        %2090 = vmatprep.subr.bf16.mxu0 0
        %2091 = vmatpush1.bf16.msra.mxu0 0
        %2092 = vmatprep.mubr.bf16.mxu0 0
        %2093 = vmatmul.mubr.bf16.gmra.mrb[0].mxu0 %v2058
        %v2094 = vpop.f32.mrb[0].mxu0
        %v2095 = vadd.f32 %v2043, %v2094
        %v2096 = vpop.f32.mrb[0].mxu0
        %v2097 = vpop.f32.mrb[0].mxu0
        %v2098 = vadd.f32 %v2043, %v2097
        %v2099 = vpop.f32.mrb[0].mxu0
        %2100 = vdwg.mxu0
        %v2101 = vadd.f32 %v1046, %v2095
        %v2102 = vadd.f32 %v1047, %v2098
        %v2103 = vld [vmem:[%s899] sm:$0x1]
        %v2104 = vld [vmem:[%s902] sm:$0x1]
        %v2105 = vsel %vm1072, %v2101, 0.0
        %2106 = vadd.xlane.f32.xlu0 %v2105
        %v2107 = vpop.xlane.xlu0 %2106
        %v2108 = vsel %vm1072, %v2102, 0.0
        %2109 = vadd.xlane.f32.xlu0 %v2108
        %v2110 = vpop.xlane.xlu0 %2109
        %v2111 = vrcp.pop 32.0
        %v2112 = vmul.f32 %v2107, %v2111
        %v2113 = vmul.f32 %v2110, %v2111
        %v2114 = vsub.f32 %v2101, %v2112
        %v2115 = vsub.f32 %v2102, %v2113
        %v2116 = vmul.f32 %v2114, %v2114
        %v2117 = vmul.f32 %v2115, %v2115
        %v2118 = vsel %vm1072, %v2116, 0.0
        %2119 = vadd.xlane.f32.xlu0 %v2118
        %v2120 = vpop.xlane.xlu0 %2119
        %v2121 = vsel %vm1072, %v2117, 0.0
        %2122 = vadd.xlane.f32.xlu0 %v2121
        %v2123 = vpop.xlane.xlu0 %2122
        %v2124 = vmul.f32 %v2120, %v2111
        %v2125 = vmul.f32 %v2123, %v2111
        %v2126 = vadd.f32 %v2124, 1e-05
        %v2127 = vadd.f32 %v2125, 1e-05
        %v2128 = vrsqrt.pop %v2126
        %v2129 = vrsqrt.pop %v2127
        %v2130 = vmul.f32 %v2114, %v2128
        %v2131 = vmul.f32 %v2115, %v2129
        %v2133 = vlaneseq
        %v2134 = vshrl.u32 %v2133, 7
        %v2135 = vsub.s32 0, %v2134
        %v2136 = vrot.slane %v2103, %v2135
        %v2138 = vmul.f32 %v2130, %v2136
        %v2139 = vmul.f32 %v2131, %v2136
        %v2141 = vlaneseq
        %v2142 = vshrl.u32 %v2141, 7
        %v2143 = vsub.s32 0, %v2142
        %v2144 = vrot.slane %v2104, %v2143
        %v2146 = vadd.f32 %v2138, %v2144
        %v2147 = vadd.f32 %v2139, %v2144
        %v2148 = vpack.c.bf16 %v2147, %v2146
        %v2149 = vld [vmem:[%s907] sm:$0xff]
        %v2150 = vld [vmem:[%s907 + $0x8] sm:$0xff]
        %v2151 = vld [vmem:[%s907 + $0x10] sm:$0xff]
        %v2152 = vld [vmem:[%s907 + $0x18] sm:$0xff]
        %v2153 = vld [vmem:[%s907 + $0x20] sm:$0xff]
        %v2154 = vld [vmem:[%s907 + $0x28] sm:$0xff]
        %v2155 = vld [vmem:[%s907 + $0x30] sm:$0xff]
        %v2156 = vld [vmem:[%s907 + $0x38] sm:$0xff]
        %v2157 = vld [vmem:[%s907 + $0x40] sm:$0xff]
        %v2158 = vld [vmem:[%s907 + $0x48] sm:$0xff]
        %v2159 = vld [vmem:[%s907 + $0x50] sm:$0xff]
        %v2160 = vld [vmem:[%s907 + $0x58] sm:$0xff]
        %v2161 = vld [vmem:[%s907 + $0x60] sm:$0xff]
        %v2162 = vld [vmem:[%s907 + $0x68] sm:$0xff]
        %v2163 = vld [vmem:[%s907 + $0x70] sm:$0xff]
        %v2164 = vld [vmem:[%s907 + $0x78] sm:$0xff]
        %v2165 = vld [vmem:[%s907 + $0x80] sm:$0xff]
        %v2166 = vld [vmem:[%s907 + $0x88] sm:$0xff]
        %v2167 = vld [vmem:[%s907 + $0x90] sm:$0xff]
        %v2168 = vld [vmem:[%s907 + $0x98] sm:$0xff]
        %v2169 = vld [vmem:[%s907 + $0xa0] sm:$0xff]
        %v2170 = vld [vmem:[%s907 + $0xa8] sm:$0xff]
        %v2171 = vld [vmem:[%s907 + $0xb0] sm:$0xff]
        %v2172 = vld [vmem:[%s907 + $0xb8] sm:$0xff]
        %v2173 = vld [vmem:[%s907 + $0xc0] sm:$0xff]
        %v2174 = vld [vmem:[%s907 + $0xc8] sm:$0xff]
        %v2175 = vld [vmem:[%s907 + $0xd0] sm:$0xff]
        %v2176 = vld [vmem:[%s907 + $0xd8] sm:$0xff]
        %v2177 = vld [vmem:[%s907 + $0xe0] sm:$0xff]
        %v2178 = vld [vmem:[%s907 + $0xe8] sm:$0xff]
        %v2179 = vld [vmem:[%s907 + $0xf0] sm:$0xff]
        %v2180 = vld [vmem:[%s907 + $0xf8] sm:$0xff]
        %v2181 = vld [vmem:[%s911] sm:$0xff]
        %v2182 = vld [vmem:[%s911 + $0x8] sm:$0xff]
        %v2185 = vlaneseq
        %v2186 = vshrl.u32 %v2185, 7
        %v2187 = vsub.s32 0, %v2186
        %v2188 = vrot.slane %v2181, %v2187
        %v2189 = vlaneseq
        %v2190 = vshrl.u32 %v2189, 7
        %v2191 = vsub.s32 1, %v2190
        %v2192 = vrot.slane %v2181, %v2191
        %v2193 = vlaneseq
        %v2194 = vshrl.u32 %v2193, 7
        %v2195 = vsub.s32 2, %v2194
        %v2196 = vrot.slane %v2181, %v2195
        %v2197 = vlaneseq
        %v2198 = vshrl.u32 %v2197, 7
        %v2199 = vsub.s32 3, %v2198
        %v2200 = vrot.slane %v2181, %v2199
        %v2201 = vlaneseq
        %v2202 = vshrl.u32 %v2201, 7
        %v2203 = vsub.s32 4, %v2202
        %v2204 = vrot.slane %v2181, %v2203
        %v2205 = vlaneseq
        %v2206 = vshrl.u32 %v2205, 7
        %v2207 = vsub.s32 5, %v2206
        %v2208 = vrot.slane %v2181, %v2207
        %v2209 = vlaneseq
        %v2210 = vshrl.u32 %v2209, 7
        %v2211 = vsub.s32 6, %v2210
        %v2212 = vrot.slane %v2181, %v2211
        %v2213 = vlaneseq
        %v2214 = vshrl.u32 %v2213, 7
        %v2215 = vsub.s32 7, %v2214
        %v2216 = vrot.slane %v2181, %v2215
        %v2217 = vlaneseq
        %v2218 = vshrl.u32 %v2217, 7
        %v2219 = vsub.s32 0, %v2218
        %v2220 = vrot.slane %v2182, %v2219
        %v2221 = vlaneseq
        %v2222 = vshrl.u32 %v2221, 7
        %v2223 = vsub.s32 1, %v2222
        %v2224 = vrot.slane %v2182, %v2223
        %v2225 = vlaneseq
        %v2226 = vshrl.u32 %v2225, 7
        %v2227 = vsub.s32 2, %v2226
        %v2228 = vrot.slane %v2182, %v2227
        %v2229 = vlaneseq
        %v2230 = vshrl.u32 %v2229, 7
        %v2231 = vsub.s32 3, %v2230
        %v2232 = vrot.slane %v2182, %v2231
        %v2233 = vlaneseq
        %v2234 = vshrl.u32 %v2233, 7
        %v2235 = vsub.s32 4, %v2234
        %v2236 = vrot.slane %v2182, %v2235
        %v2237 = vlaneseq
        %v2238 = vshrl.u32 %v2237, 7
        %v2239 = vsub.s32 5, %v2238
        %v2240 = vrot.slane %v2182, %v2239
        %v2241 = vlaneseq
        %v2242 = vshrl.u32 %v2241, 7
        %v2243 = vsub.s32 6, %v2242
        %v2244 = vrot.slane %v2182, %v2243
        %v2245 = vlaneseq
        %v2246 = vshrl.u32 %v2245, 7
        %v2247 = vsub.s32 7, %v2246
        %v2248 = vrot.slane %v2182, %v2247
        %v2297 = vunpack.c.l.b16 %v2149
        %v2298 = vunpack.c.h.b16 %v2149
        %v2299 = vunpack.c.l.b16 %v2150
        %v2300 = vunpack.c.h.b16 %v2150
        %v2301 = vunpack.c.l.b16 %v2151
        %v2302 = vunpack.c.h.b16 %v2151
        %v2303 = vunpack.c.l.b16 %v2152
        %v2304 = vunpack.c.h.b16 %v2152
        %v2305 = vunpack.c.l.b16 %v2153
        %v2306 = vunpack.c.h.b16 %v2153
        %v2307 = vunpack.c.l.b16 %v2154
        %v2308 = vunpack.c.h.b16 %v2154
        %v2309 = vunpack.c.l.b16 %v2155
        %v2310 = vunpack.c.h.b16 %v2155
        %v2311 = vunpack.c.l.b16 %v2156
        %v2312 = vunpack.c.h.b16 %v2156
        %v2313 = vunpack.c.l.b16 %v2157
        %v2314 = vunpack.c.h.b16 %v2157
        %v2315 = vunpack.c.l.b16 %v2158
        %v2316 = vunpack.c.h.b16 %v2158
        %v2317 = vunpack.c.l.b16 %v2159
        %v2318 = vunpack.c.h.b16 %v2159
        %v2319 = vunpack.c.l.b16 %v2160
        %v2320 = vunpack.c.h.b16 %v2160
        %v2321 = vunpack.c.l.b16 %v2161
        %v2322 = vunpack.c.h.b16 %v2161
        %v2323 = vunpack.c.l.b16 %v2162
        %v2324 = vunpack.c.h.b16 %v2162
        %v2325 = vunpack.c.l.b16 %v2163
        %v2326 = vunpack.c.h.b16 %v2163
        %v2327 = vunpack.c.l.b16 %v2164
        %v2328 = vunpack.c.h.b16 %v2164
        %v2329 = vunpack.c.l.b16 %v2165
        %v2330 = vunpack.c.h.b16 %v2165
        %v2331 = vunpack.c.l.b16 %v2166
        %v2332 = vunpack.c.h.b16 %v2166
        %v2333 = vunpack.c.l.b16 %v2167
        %v2334 = vunpack.c.h.b16 %v2167
        %v2335 = vunpack.c.l.b16 %v2168
        %v2336 = vunpack.c.h.b16 %v2168
        %v2337 = vunpack.c.l.b16 %v2169
        %v2338 = vunpack.c.h.b16 %v2169
        %v2339 = vunpack.c.l.b16 %v2170
        %v2340 = vunpack.c.h.b16 %v2170
        %v2341 = vunpack.c.l.b16 %v2171
        %v2342 = vunpack.c.h.b16 %v2171
        %v2343 = vunpack.c.l.b16 %v2172
        %v2344 = vunpack.c.h.b16 %v2172
        %v2345 = vunpack.c.l.b16 %v2173
        %v2346 = vunpack.c.h.b16 %v2173
        %v2347 = vunpack.c.l.b16 %v2174
        %v2348 = vunpack.c.h.b16 %v2174
        %v2349 = vunpack.c.l.b16 %v2175
        %v2350 = vunpack.c.h.b16 %v2175
        %v2351 = vunpack.c.l.b16 %v2176
        %v2352 = vunpack.c.h.b16 %v2176
        %v2353 = vunpack.c.l.b16 %v2177
        %v2354 = vunpack.c.h.b16 %v2177
        %v2355 = vunpack.c.l.b16 %v2178
        %v2356 = vunpack.c.h.b16 %v2178
        %v2357 = vunpack.c.l.b16 %v2179
        %v2358 = vunpack.c.h.b16 %v2179
        %v2359 = vunpack.c.l.b16 %v2180
        %v2360 = vunpack.c.h.b16 %v2180
        %v2361 = vpack.c.b16 %v2313, %v2297
        %v2362 = vpack.c.b16 %v2314, %v2298
        %v2363 = vpack.c.b16 %v2315, %v2299
        %v2364 = vpack.c.b16 %v2316, %v2300
        %v2365 = vpack.c.b16 %v2317, %v2301
        %v2366 = vpack.c.b16 %v2318, %v2302
        %v2367 = vpack.c.b16 %v2319, %v2303
        %v2368 = vpack.c.b16 %v2320, %v2304
        %v2369 = vpack.c.b16 %v2321, %v2305
        %v2370 = vpack.c.b16 %v2322, %v2306
        %v2371 = vpack.c.b16 %v2323, %v2307
        %v2372 = vpack.c.b16 %v2324, %v2308
        %v2373 = vpack.c.b16 %v2325, %v2309
        %v2374 = vpack.c.b16 %v2326, %v2310
        %v2375 = vpack.c.b16 %v2327, %v2311
        %v2376 = vpack.c.b16 %v2328, %v2312
        %v2377 = vpack.c.b16 %v2345, %v2329
        %v2378 = vpack.c.b16 %v2346, %v2330
        %v2379 = vpack.c.b16 %v2347, %v2331
        %v2380 = vpack.c.b16 %v2348, %v2332
        %v2381 = vpack.c.b16 %v2349, %v2333
        %v2382 = vpack.c.b16 %v2350, %v2334
        %v2383 = vpack.c.b16 %v2351, %v2335
        %v2384 = vpack.c.b16 %v2352, %v2336
        %v2385 = vpack.c.b16 %v2353, %v2337
        %v2386 = vpack.c.b16 %v2354, %v2338
        %v2387 = vpack.c.b16 %v2355, %v2339
        %v2388 = vpack.c.b16 %v2356, %v2340
        %v2389 = vpack.c.b16 %v2357, %v2341
        %v2390 = vpack.c.b16 %v2358, %v2342
        %v2391 = vpack.c.b16 %v2359, %v2343
        %v2392 = vpack.c.b16 %v2360, %v2344
        %v2426 = vsel %vm1072, %v2148, 0
        %2428 = vmatprep.subr.bf16.mxu0 %v2362
        %2429 = vmatpush1.bf16.msra.mxu0 %v2361
        %2430 = vmatprep.subr.bf16.mxu0 %v2378
        %2431 = vmatpush1.bf16.msra.mxu0 %v2377
        %2432 = vmatprep.subr.bf16.mxu0 0
        %2433 = vmatpush1.bf16.msra.mxu0 0
        %2434 = vmatprep.subr.bf16.mxu0 0
        %2435 = vmatpush1.bf16.msra.mxu0 0
        %2436 = vmatprep.subr.bf16.mxu0 0
        %2437 = vmatpush1.bf16.msra.mxu0 0
        %2438 = vmatprep.subr.bf16.mxu0 0
        %2439 = vmatpush1.bf16.msra.mxu0 0
        %2440 = vmatprep.subr.bf16.mxu0 0
        %2441 = vmatpush1.bf16.msra.mxu0 0
        %2442 = vmatprep.subr.bf16.mxu0 0
        %2443 = vmatpush1.bf16.msra.mxu0 0
        %2444 = vmatprep.subr.bf16.mxu0 0
        %2445 = vmatpush1.bf16.msra.mxu0 0
        %2446 = vmatprep.subr.bf16.mxu0 0
        %2447 = vmatpush1.bf16.msra.mxu0 0
        %2448 = vmatprep.subr.bf16.mxu0 0
        %2449 = vmatpush1.bf16.msra.mxu0 0
        %2450 = vmatprep.subr.bf16.mxu0 0
        %2451 = vmatpush1.bf16.msra.mxu0 0
        %2452 = vmatprep.subr.bf16.mxu0 0
        %2453 = vmatpush1.bf16.msra.mxu0 0
        %2454 = vmatprep.subr.bf16.mxu0 0
        %2455 = vmatpush1.bf16.msra.mxu0 0
        %2456 = vmatprep.subr.bf16.mxu0 0
        %2457 = vmatpush1.bf16.msra.mxu0 0
        %2458 = vmatprep.subr.bf16.mxu0 0
        %2459 = vmatpush1.bf16.msra.mxu0 0
        %2460 = vmatprep.mubr.bf16.mxu0 0
        %2461 = vmatmul.mubr.bf16.gmra.mrb[0].mxu0 %v2426
        %v2462 = vpop.f32.mrb[0].mxu0
        %v2463 = vadd.f32 %v2188, %v2462
        %v2464 = vpop.f32.mrb[0].mxu0
        %v2465 = vadd.f32 %v2192, %v2464
        %v2466 = vpop.f32.mrb[0].mxu0
        %v2467 = vadd.f32 %v2188, %v2466
        %v2468 = vpop.f32.mrb[0].mxu0
        %v2469 = vadd.f32 %v2192, %v2468
        %2470 = vdwg.mxu0
        %2471 = vmatprep.subr.bf16.mxu0 %v2364
        %2472 = vmatpush1.bf16.msra.mxu0 %v2363
        %2473 = vmatprep.subr.bf16.mxu0 %v2380
        %2474 = vmatpush1.bf16.msra.mxu0 %v2379
        %2475 = vmatprep.subr.bf16.mxu0 0
        %2476 = vmatpush1.bf16.msra.mxu0 0
        %2477 = vmatprep.subr.bf16.mxu0 0
        %2478 = vmatpush1.bf16.msra.mxu0 0
        %2479 = vmatprep.subr.bf16.mxu0 0
        %2480 = vmatpush1.bf16.msra.mxu0 0
        %2481 = vmatprep.subr.bf16.mxu0 0
        %2482 = vmatpush1.bf16.msra.mxu0 0
        %2483 = vmatprep.subr.bf16.mxu0 0
        %2484 = vmatpush1.bf16.msra.mxu0 0
        %2485 = vmatprep.subr.bf16.mxu0 0
        %2486 = vmatpush1.bf16.msra.mxu0 0
        %2487 = vmatprep.subr.bf16.mxu0 0
        %2488 = vmatpush1.bf16.msra.mxu0 0
        %2489 = vmatprep.subr.bf16.mxu0 0
        %2490 = vmatpush1.bf16.msra.mxu0 0
        %2491 = vmatprep.subr.bf16.mxu0 0
        %2492 = vmatpush1.bf16.msra.mxu0 0
        %2493 = vmatprep.subr.bf16.mxu0 0
        %2494 = vmatpush1.bf16.msra.mxu0 0
        %2495 = vmatprep.subr.bf16.mxu0 0
        %2496 = vmatpush1.bf16.msra.mxu0 0
        %2497 = vmatprep.subr.bf16.mxu0 0
        %2498 = vmatpush1.bf16.msra.mxu0 0
        %2499 = vmatprep.subr.bf16.mxu0 0
        %2500 = vmatpush1.bf16.msra.mxu0 0
        %2501 = vmatprep.subr.bf16.mxu0 0
        %2502 = vmatpush1.bf16.msra.mxu0 0
        %2503 = vmatprep.mubr.bf16.mxu0 0
        %2504 = vmatmul.mubr.bf16.gmra.mrb[0].mxu0 %v2426
        %v2505 = vpop.f32.mrb[0].mxu0
        %v2506 = vadd.f32 %v2196, %v2505
        %v2507 = vpop.f32.mrb[0].mxu0
        %v2508 = vadd.f32 %v2200, %v2507
        %v2509 = vpop.f32.mrb[0].mxu0
        %v2510 = vadd.f32 %v2196, %v2509
        %v2511 = vpop.f32.mrb[0].mxu0
        %v2512 = vadd.f32 %v2200, %v2511
        %2513 = vdwg.mxu0
        %2514 = vmatprep.subr.bf16.mxu0 %v2366
        %2515 = vmatpush1.bf16.msra.mxu0 %v2365
        %2516 = vmatprep.subr.bf16.mxu0 %v2382
        %2517 = vmatpush1.bf16.msra.mxu0 %v2381
        %2518 = vmatprep.subr.bf16.mxu0 0
        %2519 = vmatpush1.bf16.msra.mxu0 0
        %2520 = vmatprep.subr.bf16.mxu0 0
        %2521 = vmatpush1.bf16.msra.mxu0 0
        %2522 = vmatprep.subr.bf16.mxu0 0
        %2523 = vmatpush1.bf16.msra.mxu0 0
        %2524 = vmatprep.subr.bf16.mxu0 0
        %2525 = vmatpush1.bf16.msra.mxu0 0
        %2526 = vmatprep.subr.bf16.mxu0 0
        %2527 = vmatpush1.bf16.msra.mxu0 0
        %2528 = vmatprep.subr.bf16.mxu0 0
        %2529 = vmatpush1.bf16.msra.mxu0 0
        %2530 = vmatprep.subr.bf16.mxu0 0
        %2531 = vmatpush1.bf16.msra.mxu0 0
        %2532 = vmatprep.subr.bf16.mxu0 0
        %2533 = vmatpush1.bf16.msra.mxu0 0
        %2534 = vmatprep.subr.bf16.mxu0 0
        %2535 = vmatpush1.bf16.msra.mxu0 0
        %2536 = vmatprep.subr.bf16.mxu0 0
        %2537 = vmatpush1.bf16.msra.mxu0 0
        %2538 = vmatprep.subr.bf16.mxu0 0
        %2539 = vmatpush1.bf16.msra.mxu0 0
        %2540 = vmatprep.subr.bf16.mxu0 0
        %2541 = vmatpush1.bf16.msra.mxu0 0
        %2542 = vmatprep.subr.bf16.mxu0 0
        %2543 = vmatpush1.bf16.msra.mxu0 0
        %2544 = vmatprep.subr.bf16.mxu0 0
        %2545 = vmatpush1.bf16.msra.mxu0 0
        %2546 = vmatprep.mubr.bf16.mxu0 0
        %2547 = vmatmul.mubr.bf16.gmra.mrb[0].mxu0 %v2426
        %v2548 = vpop.f32.mrb[0].mxu0
        %v2549 = vadd.f32 %v2204, %v2548
        %v2550 = vpop.f32.mrb[0].mxu0
        %v2551 = vadd.f32 %v2208, %v2550
        %v2552 = vpop.f32.mrb[0].mxu0
        %v2553 = vadd.f32 %v2204, %v2552
        %v2554 = vpop.f32.mrb[0].mxu0
        %v2555 = vadd.f32 %v2208, %v2554
        %2556 = vdwg.mxu0
        %2557 = vmatprep.subr.bf16.mxu0 %v2368
        %2558 = vmatpush1.bf16.msra.mxu0 %v2367
        %2559 = vmatprep.subr.bf16.mxu0 %v2384
        %2560 = vmatpush1.bf16.msra.mxu0 %v2383
        %2561 = vmatprep.subr.bf16.mxu0 0
        %2562 = vmatpush1.bf16.msra.mxu0 0
        %2563 = vmatprep.subr.bf16.mxu0 0
        %2564 = vmatpush1.bf16.msra.mxu0 0
        %2565 = vmatprep.subr.bf16.mxu0 0
        %2566 = vmatpush1.bf16.msra.mxu0 0
        %2567 = vmatprep.subr.bf16.mxu0 0
        %2568 = vmatpush1.bf16.msra.mxu0 0
        %2569 = vmatprep.subr.bf16.mxu0 0
        %2570 = vmatpush1.bf16.msra.mxu0 0
        %2571 = vmatprep.subr.bf16.mxu0 0
        %2572 = vmatpush1.bf16.msra.mxu0 0
        %2573 = vmatprep.subr.bf16.mxu0 0
        %2574 = vmatpush1.bf16.msra.mxu0 0
        %2575 = vmatprep.subr.bf16.mxu0 0
        %2576 = vmatpush1.bf16.msra.mxu0 0
        %2577 = vmatprep.subr.bf16.mxu0 0
        %2578 = vmatpush1.bf16.msra.mxu0 0
        %2579 = vmatprep.subr.bf16.mxu0 0
        %2580 = vmatpush1.bf16.msra.mxu0 0
        %2581 = vmatprep.subr.bf16.mxu0 0
        %2582 = vmatpush1.bf16.msra.mxu0 0
        %2583 = vmatprep.subr.bf16.mxu0 0
        %2584 = vmatpush1.bf16.msra.mxu0 0
        %2585 = vmatprep.subr.bf16.mxu0 0
        %2586 = vmatpush1.bf16.msra.mxu0 0
        %2587 = vmatprep.subr.bf16.mxu0 0
        %2588 = vmatpush1.bf16.msra.mxu0 0
        %2589 = vmatprep.mubr.bf16.mxu0 0
        %2590 = vmatmul.mubr.bf16.gmra.mrb[0].mxu0 %v2426
        %v2591 = vpop.f32.mrb[0].mxu0
        %v2592 = vadd.f32 %v2212, %v2591
        %v2593 = vpop.f32.mrb[0].mxu0
        %v2594 = vadd.f32 %v2216, %v2593
        %v2595 = vpop.f32.mrb[0].mxu0
        %v2596 = vadd.f32 %v2212, %v2595
        %v2597 = vpop.f32.mrb[0].mxu0
        %v2598 = vadd.f32 %v2216, %v2597
        %2599 = vdwg.mxu0
        %2600 = vmatprep.subr.bf16.mxu0 %v2370
        %2601 = vmatpush1.bf16.msra.mxu0 %v2369
        %2602 = vmatprep.subr.bf16.mxu0 %v2386
        %2603 = vmatpush1.bf16.msra.mxu0 %v2385
        %2604 = vmatprep.subr.bf16.mxu0 0
        %2605 = vmatpush1.bf16.msra.mxu0 0
        %2606 = vmatprep.subr.bf16.mxu0 0
        %2607 = vmatpush1.bf16.msra.mxu0 0
        %2608 = vmatprep.subr.bf16.mxu0 0
        %2609 = vmatpush1.bf16.msra.mxu0 0
        %2610 = vmatprep.subr.bf16.mxu0 0
        %2611 = vmatpush1.bf16.msra.mxu0 0
        %2612 = vmatprep.subr.bf16.mxu0 0
        %2613 = vmatpush1.bf16.msra.mxu0 0
        %2614 = vmatprep.subr.bf16.mxu0 0
        %2615 = vmatpush1.bf16.msra.mxu0 0
        %2616 = vmatprep.subr.bf16.mxu0 0
        %2617 = vmatpush1.bf16.msra.mxu0 0
        %2618 = vmatprep.subr.bf16.mxu0 0
        %2619 = vmatpush1.bf16.msra.mxu0 0
        %2620 = vmatprep.subr.bf16.mxu0 0
        %2621 = vmatpush1.bf16.msra.mxu0 0
        %2622 = vmatprep.subr.bf16.mxu0 0
        %2623 = vmatpush1.bf16.msra.mxu0 0
        %2624 = vmatprep.subr.bf16.mxu0 0
        %2625 = vmatpush1.bf16.msra.mxu0 0
        %2626 = vmatprep.subr.bf16.mxu0 0
        %2627 = vmatpush1.bf16.msra.mxu0 0
        %2628 = vmatprep.subr.bf16.mxu0 0
        %2629 = vmatpush1.bf16.msra.mxu0 0
        %2630 = vmatprep.subr.bf16.mxu0 0
        %2631 = vmatpush1.bf16.msra.mxu0 0
        %2632 = vmatprep.mubr.bf16.mxu0 0
        %2633 = vmatmul.mubr.bf16.gmra.mrb[0].mxu0 %v2426
        %v2634 = vpop.f32.mrb[0].mxu0
        %v2635 = vadd.f32 %v2220, %v2634
        %v2636 = vpop.f32.mrb[0].mxu0
        %v2637 = vadd.f32 %v2224, %v2636
        %v2638 = vpop.f32.mrb[0].mxu0
        %v2639 = vadd.f32 %v2220, %v2638
        %v2640 = vpop.f32.mrb[0].mxu0
        %v2641 = vadd.f32 %v2224, %v2640
        %2642 = vdwg.mxu0
        %2643 = vmatprep.subr.bf16.mxu0 %v2372
        %2644 = vmatpush1.bf16.msra.mxu0 %v2371
        %2645 = vmatprep.subr.bf16.mxu0 %v2388
        %2646 = vmatpush1.bf16.msra.mxu0 %v2387
        %2647 = vmatprep.subr.bf16.mxu0 0
        %2648 = vmatpush1.bf16.msra.mxu0 0
        %2649 = vmatprep.subr.bf16.mxu0 0
        %2650 = vmatpush1.bf16.msra.mxu0 0
        %2651 = vmatprep.subr.bf16.mxu0 0
        %2652 = vmatpush1.bf16.msra.mxu0 0
        %2653 = vmatprep.subr.bf16.mxu0 0
        %2654 = vmatpush1.bf16.msra.mxu0 0
        %2655 = vmatprep.subr.bf16.mxu0 0
        %2656 = vmatpush1.bf16.msra.mxu0 0
        %2657 = vmatprep.subr.bf16.mxu0 0
        %2658 = vmatpush1.bf16.msra.mxu0 0
        %2659 = vmatprep.subr.bf16.mxu0 0
        %2660 = vmatpush1.bf16.msra.mxu0 0
        %2661 = vmatprep.subr.bf16.mxu0 0
        %2662 = vmatpush1.bf16.msra.mxu0 0
        %2663 = vmatprep.subr.bf16.mxu0 0
        %2664 = vmatpush1.bf16.msra.mxu0 0
        %2665 = vmatprep.subr.bf16.mxu0 0
        %2666 = vmatpush1.bf16.msra.mxu0 0
        %2667 = vmatprep.subr.bf16.mxu0 0
        %2668 = vmatpush1.bf16.msra.mxu0 0
        %2669 = vmatprep.subr.bf16.mxu0 0
        %2670 = vmatpush1.bf16.msra.mxu0 0
        %2671 = vmatprep.subr.bf16.mxu0 0
        %2672 = vmatpush1.bf16.msra.mxu0 0
        %2673 = vmatprep.subr.bf16.mxu0 0
        %2674 = vmatpush1.bf16.msra.mxu0 0
        %2675 = vmatprep.mubr.bf16.mxu0 0
        %2676 = vmatmul.mubr.bf16.gmra.mrb[0].mxu0 %v2426
        %v2677 = vpop.f32.mrb[0].mxu0
        %v2678 = vadd.f32 %v2228, %v2677
        %v2679 = vpop.f32.mrb[0].mxu0
        %v2680 = vadd.f32 %v2232, %v2679
        %v2681 = vpop.f32.mrb[0].mxu0
        %v2682 = vadd.f32 %v2228, %v2681
        %v2683 = vpop.f32.mrb[0].mxu0
        %v2684 = vadd.f32 %v2232, %v2683
        %2685 = vdwg.mxu0
        %2686 = vmatprep.subr.bf16.mxu0 %v2374
        %2687 = vmatpush1.bf16.msra.mxu0 %v2373
        %2688 = vmatprep.subr.bf16.mxu0 %v2390
        %2689 = vmatpush1.bf16.msra.mxu0 %v2389
        %2690 = vmatprep.subr.bf16.mxu0 0
        %2691 = vmatpush1.bf16.msra.mxu0 0
        %2692 = vmatprep.subr.bf16.mxu0 0
        %2693 = vmatpush1.bf16.msra.mxu0 0
        %2694 = vmatprep.subr.bf16.mxu0 0
        %2695 = vmatpush1.bf16.msra.mxu0 0
        %2696 = vmatprep.subr.bf16.mxu0 0
        %2697 = vmatpush1.bf16.msra.mxu0 0
        %2698 = vmatprep.subr.bf16.mxu0 0
        %2699 = vmatpush1.bf16.msra.mxu0 0
        %2700 = vmatprep.subr.bf16.mxu0 0
        %2701 = vmatpush1.bf16.msra.mxu0 0
        %2702 = vmatprep.subr.bf16.mxu0 0
        %2703 = vmatpush1.bf16.msra.mxu0 0
        %2704 = vmatprep.subr.bf16.mxu0 0
        %2705 = vmatpush1.bf16.msra.mxu0 0
        %2706 = vmatprep.subr.bf16.mxu0 0
        %2707 = vmatpush1.bf16.msra.mxu0 0
        %2708 = vmatprep.subr.bf16.mxu0 0
        %2709 = vmatpush1.bf16.msra.mxu0 0
        %2710 = vmatprep.subr.bf16.mxu0 0
        %2711 = vmatpush1.bf16.msra.mxu0 0
        %2712 = vmatprep.subr.bf16.mxu0 0
        %2713 = vmatpush1.bf16.msra.mxu0 0
        %2714 = vmatprep.subr.bf16.mxu0 0
        %2715 = vmatpush1.bf16.msra.mxu0 0
        %2716 = vmatprep.subr.bf16.mxu0 0
        %2717 = vmatpush1.bf16.msra.mxu0 0
        %2718 = vmatprep.mubr.bf16.mxu0 0
        %2719 = vmatmul.mubr.bf16.gmra.mrb[0].mxu0 %v2426
        %v2720 = vpop.f32.mrb[0].mxu0
        %v2721 = vadd.f32 %v2236, %v2720
        %v2722 = vpop.f32.mrb[0].mxu0
        %v2723 = vadd.f32 %v2240, %v2722
        %v2724 = vpop.f32.mrb[0].mxu0
        %v2725 = vadd.f32 %v2236, %v2724
        %v2726 = vpop.f32.mrb[0].mxu0
        %v2727 = vadd.f32 %v2240, %v2726
        %2728 = vdwg.mxu0
        %2729 = vmatprep.subr.bf16.mxu0 %v2376
        %2730 = vmatpush1.bf16.msra.mxu0 %v2375
        %2731 = vmatprep.subr.bf16.mxu0 %v2392
        %2732 = vmatpush1.bf16.msra.mxu0 %v2391
        %2733 = vmatprep.subr.bf16.mxu0 0
        %2734 = vmatpush1.bf16.msra.mxu0 0
        %2735 = vmatprep.subr.bf16.mxu0 0
        %2736 = vmatpush1.bf16.msra.mxu0 0
        %2737 = vmatprep.subr.bf16.mxu0 0
        %2738 = vmatpush1.bf16.msra.mxu0 0
        %2739 = vmatprep.subr.bf16.mxu0 0
        %2740 = vmatpush1.bf16.msra.mxu0 0
        %2741 = vmatprep.subr.bf16.mxu0 0
        %2742 = vmatpush1.bf16.msra.mxu0 0
        %2743 = vmatprep.subr.bf16.mxu0 0
        %2744 = vmatpush1.bf16.msra.mxu0 0
        %2745 = vmatprep.subr.bf16.mxu0 0
        %2746 = vmatpush1.bf16.msra.mxu0 0
        %2747 = vmatprep.subr.bf16.mxu0 0
        %2748 = vmatpush1.bf16.msra.mxu0 0
        %2749 = vmatprep.subr.bf16.mxu0 0
        %2750 = vmatpush1.bf16.msra.mxu0 0
        %2751 = vmatprep.subr.bf16.mxu0 0
        %2752 = vmatpush1.bf16.msra.mxu0 0
        %2753 = vmatprep.subr.bf16.mxu0 0
        %2754 = vmatpush1.bf16.msra.mxu0 0
        %2755 = vmatprep.subr.bf16.mxu0 0
        %2756 = vmatpush1.bf16.msra.mxu0 0
        %2757 = vmatprep.subr.bf16.mxu0 0
        %2758 = vmatpush1.bf16.msra.mxu0 0
        %2759 = vmatprep.subr.bf16.mxu0 0
        %2760 = vmatpush1.bf16.msra.mxu0 0
        %2761 = vmatprep.mubr.bf16.mxu0 0
        %2762 = vmatmul.mubr.bf16.gmra.mrb[0].mxu0 %v2426
        %v2763 = vpop.f32.mrb[0].mxu0
        %v2764 = vadd.f32 %v2244, %v2763
        %v2765 = vpop.f32.mrb[0].mxu0
        %v2766 = vadd.f32 %v2248, %v2765
        %v2767 = vpop.f32.mrb[0].mxu0
        %v2768 = vadd.f32 %v2244, %v2767
        %v2769 = vpop.f32.mrb[0].mxu0
        %v2770 = vadd.f32 %v2248, %v2769
        %2771 = vdwg.mxu0
        %v2772 = vmax.f32 %v2463, 0.0
        %v2773 = vmax.f32 %v2465, 0.0
        %v2774 = vmax.f32 %v2506, 0.0
        %v2775 = vmax.f32 %v2508, 0.0
        %v2776 = vmax.f32 %v2549, 0.0
        %v2777 = vmax.f32 %v2551, 0.0
        %v2778 = vmax.f32 %v2592, 0.0
        %v2779 = vmax.f32 %v2594, 0.0
        %v2780 = vmax.f32 %v2635, 0.0
        %v2781 = vmax.f32 %v2637, 0.0
        %v2782 = vmax.f32 %v2678, 0.0
        %v2783 = vmax.f32 %v2680, 0.0
        %v2784 = vmax.f32 %v2721, 0.0
        %v2785 = vmax.f32 %v2723, 0.0
        %v2786 = vmax.f32 %v2764, 0.0
        %v2787 = vmax.f32 %v2766, 0.0
        %v2788 = vmax.f32 %v2467, 0.0
        %v2789 = vmax.f32 %v2469, 0.0
        %v2790 = vmax.f32 %v2510, 0.0
        %v2791 = vmax.f32 %v2512, 0.0
        %v2792 = vmax.f32 %v2553, 0.0
        %v2793 = vmax.f32 %v2555, 0.0
        %v2794 = vmax.f32 %v2596, 0.0
        %v2795 = vmax.f32 %v2598, 0.0
        %v2796 = vmax.f32 %v2639, 0.0
        %v2797 = vmax.f32 %v2641, 0.0
        %v2798 = vmax.f32 %v2682, 0.0
        %v2799 = vmax.f32 %v2684, 0.0
        %v2800 = vmax.f32 %v2725, 0.0
        %v2801 = vmax.f32 %v2727, 0.0
        %v2802 = vmax.f32 %v2768, 0.0
        %v2803 = vmax.f32 %v2770, 0.0
        %v2804 = vpack.c.bf16 %v2788, %v2772
        %v2805 = vpack.c.bf16 %v2789, %v2773
        %v2806 = vpack.c.bf16 %v2790, %v2774
        %v2807 = vpack.c.bf16 %v2791, %v2775
        %v2808 = vpack.c.bf16 %v2792, %v2776
        %v2809 = vpack.c.bf16 %v2793, %v2777
        %v2810 = vpack.c.bf16 %v2794, %v2778
        %v2811 = vpack.c.bf16 %v2795, %v2779
        %v2812 = vpack.c.bf16 %v2796, %v2780
        %v2813 = vpack.c.bf16 %v2797, %v2781
        %v2814 = vpack.c.bf16 %v2798, %v2782
        %v2815 = vpack.c.bf16 %v2799, %v2783
        %v2816 = vpack.c.bf16 %v2800, %v2784
        %v2817 = vpack.c.bf16 %v2801, %v2785
        %v2818 = vpack.c.bf16 %v2802, %v2786
        %v2819 = vpack.c.bf16 %v2803, %v2787
        %v2820 = vld [vmem:[%s916] sm:$0xf]
        %v2821 = vld [vmem:[%s916 + $0x4] sm:$0xf]
        %v2822 = vld [vmem:[%s916 + $0x8] sm:$0xf]
        %v2823 = vld [vmem:[%s916 + $0xc] sm:$0xf]
        %v2824 = vld [vmem:[%s916 + $0x10] sm:$0xf]
        %v2825 = vld [vmem:[%s916 + $0x14] sm:$0xf]
        %v2826 = vld [vmem:[%s916 + $0x18] sm:$0xf]
        %v2827 = vld [vmem:[%s916 + $0x1c] sm:$0xf]
        %v2828 = vld [vmem:[%s916 + $0x20] sm:$0xf]
        %v2829 = vld [vmem:[%s916 + $0x24] sm:$0xf]
        %v2830 = vld [vmem:[%s916 + $0x28] sm:$0xf]
        %v2831 = vld [vmem:[%s916 + $0x2c] sm:$0xf]
        %v2832 = vld [vmem:[%s916 + $0x30] sm:$0xf]
        %v2833 = vld [vmem:[%s916 + $0x34] sm:$0xf]
        %v2834 = vld [vmem:[%s916 + $0x38] sm:$0xf]
        %v2835 = vld [vmem:[%s916 + $0x3c] sm:$0xf]
        %v2836 = vld [vmem:[%s916 + $0x40] sm:$0xf]
        %v2837 = vld [vmem:[%s916 + $0x44] sm:$0xf]
        %v2838 = vld [vmem:[%s916 + $0x48] sm:$0xf]
        %v2839 = vld [vmem:[%s916 + $0x4c] sm:$0xf]
        %v2840 = vld [vmem:[%s916 + $0x50] sm:$0xf]
        %v2841 = vld [vmem:[%s916 + $0x54] sm:$0xf]
        %v2842 = vld [vmem:[%s916 + $0x58] sm:$0xf]
        %v2843 = vld [vmem:[%s916 + $0x5c] sm:$0xf]
        %v2844 = vld [vmem:[%s916 + $0x60] sm:$0xf]
        %v2845 = vld [vmem:[%s916 + $0x64] sm:$0xf]
        %v2846 = vld [vmem:[%s916 + $0x68] sm:$0xf]
        %v2847 = vld [vmem:[%s916 + $0x6c] sm:$0xf]
        %v2848 = vld [vmem:[%s916 + $0x70] sm:$0xf]
        %v2849 = vld [vmem:[%s916 + $0x74] sm:$0xf]
        %v2850 = vld [vmem:[%s916 + $0x78] sm:$0xf]
        %v2851 = vld [vmem:[%s916 + $0x7c] sm:$0xf]
        %v2852 = vld [vmem:[%s916 + $0x80] sm:$0xf]
        %v2853 = vld [vmem:[%s916 + $0x84] sm:$0xf]
        %v2854 = vld [vmem:[%s916 + $0x88] sm:$0xf]
        %v2855 = vld [vmem:[%s916 + $0x8c] sm:$0xf]
        %v2856 = vld [vmem:[%s916 + $0x90] sm:$0xf]
        %v2857 = vld [vmem:[%s916 + $0x94] sm:$0xf]
        %v2858 = vld [vmem:[%s916 + $0x98] sm:$0xf]
        %v2859 = vld [vmem:[%s916 + $0x9c] sm:$0xf]
        %v2860 = vld [vmem:[%s916 + $0xa0] sm:$0xf]
        %v2861 = vld [vmem:[%s916 + $0xa4] sm:$0xf]
        %v2862 = vld [vmem:[%s916 + $0xa8] sm:$0xf]
        %v2863 = vld [vmem:[%s916 + $0xac] sm:$0xf]
        %v2864 = vld [vmem:[%s916 + $0xb0] sm:$0xf]
        %v2865 = vld [vmem:[%s916 + $0xb4] sm:$0xf]
        %v2866 = vld [vmem:[%s916 + $0xb8] sm:$0xf]
        %v2867 = vld [vmem:[%s916 + $0xbc] sm:$0xf]
        %v2868 = vld [vmem:[%s916 + $0xc0] sm:$0xf]
        %v2869 = vld [vmem:[%s916 + $0xc4] sm:$0xf]
        %v2870 = vld [vmem:[%s916 + $0xc8] sm:$0xf]
        %v2871 = vld [vmem:[%s916 + $0xcc] sm:$0xf]
        %v2872 = vld [vmem:[%s916 + $0xd0] sm:$0xf]
        %v2873 = vld [vmem:[%s916 + $0xd4] sm:$0xf]
        %v2874 = vld [vmem:[%s916 + $0xd8] sm:$0xf]
        %v2875 = vld [vmem:[%s916 + $0xdc] sm:$0xf]
        %v2876 = vld [vmem:[%s916 + $0xe0] sm:$0xf]
        %v2877 = vld [vmem:[%s916 + $0xe4] sm:$0xf]
        %v2878 = vld [vmem:[%s916 + $0xe8] sm:$0xf]
        %v2879 = vld [vmem:[%s916 + $0xec] sm:$0xf]
        %v2880 = vld [vmem:[%s916 + $0xf0] sm:$0xf]
        %v2881 = vld [vmem:[%s916 + $0xf4] sm:$0xf]
        %v2882 = vld [vmem:[%s916 + $0xf8] sm:$0xf]
        %v2883 = vld [vmem:[%s916 + $0xfc] sm:$0xf]
        %v2884 = vld [vmem:[%s916 + $0x100] sm:$0xf]
        %v2885 = vld [vmem:[%s916 + $0x104] sm:$0xf]
        %v2886 = vld [vmem:[%s916 + $0x108] sm:$0xf]
        %v2887 = vld [vmem:[%s916 + $0x10c] sm:$0xf]
        %v2888 = vld [vmem:[%s916 + $0x110] sm:$0xf]
        %v2889 = vld [vmem:[%s916 + $0x114] sm:$0xf]
        %v2890 = vld [vmem:[%s916 + $0x118] sm:$0xf]
        %v2891 = vld [vmem:[%s916 + $0x11c] sm:$0xf]
        %v2892 = vld [vmem:[%s916 + $0x120] sm:$0xf]
        %v2893 = vld [vmem:[%s916 + $0x124] sm:$0xf]
        %v2894 = vld [vmem:[%s916 + $0x128] sm:$0xf]
        %v2895 = vld [vmem:[%s916 + $0x12c] sm:$0xf]
        %v2896 = vld [vmem:[%s916 + $0x130] sm:$0xf]
        %v2897 = vld [vmem:[%s916 + $0x134] sm:$0xf]
        %v2898 = vld [vmem:[%s916 + $0x138] sm:$0xf]
        %v2899 = vld [vmem:[%s916 + $0x13c] sm:$0xf]
        %v2900 = vld [vmem:[%s916 + $0x140] sm:$0xf]
        %v2901 = vld [vmem:[%s916 + $0x144] sm:$0xf]
        %v2902 = vld [vmem:[%s916 + $0x148] sm:$0xf]
        %v2903 = vld [vmem:[%s916 + $0x14c] sm:$0xf]
        %v2904 = vld [vmem:[%s916 + $0x150] sm:$0xf]
        %v2905 = vld [vmem:[%s916 + $0x154] sm:$0xf]
        %v2906 = vld [vmem:[%s916 + $0x158] sm:$0xf]
        %v2907 = vld [vmem:[%s916 + $0x15c] sm:$0xf]
        %v2908 = vld [vmem:[%s916 + $0x160] sm:$0xf]
        %v2909 = vld [vmem:[%s916 + $0x164] sm:$0xf]
        %v2910 = vld [vmem:[%s916 + $0x168] sm:$0xf]
        %v2911 = vld [vmem:[%s916 + $0x16c] sm:$0xf]
        %v2912 = vld [vmem:[%s916 + $0x170] sm:$0xf]
        %v2913 = vld [vmem:[%s916 + $0x174] sm:$0xf]
        %v2914 = vld [vmem:[%s916 + $0x178] sm:$0xf]
        %v2915 = vld [vmem:[%s916 + $0x17c] sm:$0xf]
        %v2916 = vld [vmem:[%s916 + $0x180] sm:$0xf]
        %v2917 = vld [vmem:[%s916 + $0x184] sm:$0xf]
        %v2918 = vld [vmem:[%s916 + $0x188] sm:$0xf]
        %v2919 = vld [vmem:[%s916 + $0x18c] sm:$0xf]
        %v2920 = vld [vmem:[%s916 + $0x190] sm:$0xf]
        %v2921 = vld [vmem:[%s916 + $0x194] sm:$0xf]
        %v2922 = vld [vmem:[%s916 + $0x198] sm:$0xf]
        %v2923 = vld [vmem:[%s916 + $0x19c] sm:$0xf]
        %v2924 = vld [vmem:[%s916 + $0x1a0] sm:$0xf]
        %v2925 = vld [vmem:[%s916 + $0x1a4] sm:$0xf]
        %v2926 = vld [vmem:[%s916 + $0x1a8] sm:$0xf]
        %v2927 = vld [vmem:[%s916 + $0x1ac] sm:$0xf]
        %v2928 = vld [vmem:[%s916 + $0x1b0] sm:$0xf]
        %v2929 = vld [vmem:[%s916 + $0x1b4] sm:$0xf]
        %v2930 = vld [vmem:[%s916 + $0x1b8] sm:$0xf]
        %v2931 = vld [vmem:[%s916 + $0x1bc] sm:$0xf]
        %v2932 = vld [vmem:[%s916 + $0x1c0] sm:$0xf]
        %v2933 = vld [vmem:[%s916 + $0x1c4] sm:$0xf]
        %v2934 = vld [vmem:[%s916 + $0x1c8] sm:$0xf]
        %v2935 = vld [vmem:[%s916 + $0x1cc] sm:$0xf]
        %v2936 = vld [vmem:[%s916 + $0x1d0] sm:$0xf]
        %v2937 = vld [vmem:[%s916 + $0x1d4] sm:$0xf]
        %v2938 = vld [vmem:[%s916 + $0x1d8] sm:$0xf]
        %v2939 = vld [vmem:[%s916 + $0x1dc] sm:$0xf]
        %v2940 = vld [vmem:[%s916 + $0x1e0] sm:$0xf]
        %v2941 = vld [vmem:[%s916 + $0x1e4] sm:$0xf]
        %v2942 = vld [vmem:[%s916 + $0x1e8] sm:$0xf]
        %v2943 = vld [vmem:[%s916 + $0x1ec] sm:$0xf]
        %v2944 = vld [vmem:[%s916 + $0x1f0] sm:$0xf]
        %v2945 = vld [vmem:[%s916 + $0x1f4] sm:$0xf]
        %v2946 = vld [vmem:[%s916 + $0x1f8] sm:$0xf]
        %v2947 = vld [vmem:[%s916 + $0x1fc] sm:$0xf]
        %v2948 = vld [vmem:[%s916 + $0x200] sm:$0xf]
        %v2949 = vld [vmem:[%s916 + $0x204] sm:$0xf]
        %v2950 = vld [vmem:[%s916 + $0x208] sm:$0xf]
        %v2951 = vld [vmem:[%s916 + $0x20c] sm:$0xf]
        %v2952 = vld [vmem:[%s916 + $0x210] sm:$0xf]
        %v2953 = vld [vmem:[%s916 + $0x214] sm:$0xf]
        %v2954 = vld [vmem:[%s916 + $0x218] sm:$0xf]
        %v2955 = vld [vmem:[%s916 + $0x21c] sm:$0xf]
        %v2956 = vld [vmem:[%s916 + $0x220] sm:$0xf]
        %v2957 = vld [vmem:[%s916 + $0x224] sm:$0xf]
        %v2958 = vld [vmem:[%s916 + $0x228] sm:$0xf]
        %v2959 = vld [vmem:[%s916 + $0x22c] sm:$0xf]
        %v2960 = vld [vmem:[%s916 + $0x230] sm:$0xf]
        %v2961 = vld [vmem:[%s916 + $0x234] sm:$0xf]
        %v2962 = vld [vmem:[%s916 + $0x238] sm:$0xf]
        %v2963 = vld [vmem:[%s916 + $0x23c] sm:$0xf]
        %v2964 = vld [vmem:[%s916 + $0x240] sm:$0xf]
        %v2965 = vld [vmem:[%s916 + $0x244] sm:$0xf]
        %v2966 = vld [vmem:[%s916 + $0x248] sm:$0xf]
        %v2967 = vld [vmem:[%s916 + $0x24c] sm:$0xf]
        %v2968 = vld [vmem:[%s916 + $0x250] sm:$0xf]
        %v2969 = vld [vmem:[%s916 + $0x254] sm:$0xf]
        %v2970 = vld [vmem:[%s916 + $0x258] sm:$0xf]
        %v2971 = vld [vmem:[%s916 + $0x25c] sm:$0xf]
        %v2972 = vld [vmem:[%s916 + $0x260] sm:$0xf]
        %v2973 = vld [vmem:[%s916 + $0x264] sm:$0xf]
        %v2974 = vld [vmem:[%s916 + $0x268] sm:$0xf]
        %v2975 = vld [vmem:[%s916 + $0x26c] sm:$0xf]
        %v2976 = vld [vmem:[%s916 + $0x270] sm:$0xf]
        %v2977 = vld [vmem:[%s916 + $0x274] sm:$0xf]
        %v2978 = vld [vmem:[%s916 + $0x278] sm:$0xf]
        %v2979 = vld [vmem:[%s916 + $0x27c] sm:$0xf]
        %v2980 = vld [vmem:[%s916 + $0x280] sm:$0xf]
        %v2981 = vld [vmem:[%s916 + $0x284] sm:$0xf]
        %v2982 = vld [vmem:[%s916 + $0x288] sm:$0xf]
        %v2983 = vld [vmem:[%s916 + $0x28c] sm:$0xf]
        %v2984 = vld [vmem:[%s916 + $0x290] sm:$0xf]
        %v2985 = vld [vmem:[%s916 + $0x294] sm:$0xf]
        %v2986 = vld [vmem:[%s916 + $0x298] sm:$0xf]
        %v2987 = vld [vmem:[%s916 + $0x29c] sm:$0xf]
        %v2988 = vld [vmem:[%s916 + $0x2a0] sm:$0xf]
        %v2989 = vld [vmem:[%s916 + $0x2a4] sm:$0xf]
        %v2990 = vld [vmem:[%s916 + $0x2a8] sm:$0xf]
        %v2991 = vld [vmem:[%s916 + $0x2ac] sm:$0xf]
        %v2992 = vld [vmem:[%s916 + $0x2b0] sm:$0xf]
        %v2993 = vld [vmem:[%s916 + $0x2b4] sm:$0xf]
        %v2994 = vld [vmem:[%s916 + $0x2b8] sm:$0xf]
        %v2995 = vld [vmem:[%s916 + $0x2bc] sm:$0xf]
        %v2996 = vld [vmem:[%s916 + $0x2c0] sm:$0xf]
        %v2997 = vld [vmem:[%s916 + $0x2c4] sm:$0xf]
        %v2998 = vld [vmem:[%s916 + $0x2c8] sm:$0xf]
        %v2999 = vld [vmem:[%s916 + $0x2cc] sm:$0xf]
        %v3000 = vld [vmem:[%s916 + $0x2d0] sm:$0xf]
        %v3001 = vld [vmem:[%s916 + $0x2d4] sm:$0xf]
        %v3002 = vld [vmem:[%s916 + $0x2d8] sm:$0xf]
        %v3003 = vld [vmem:[%s916 + $0x2dc] sm:$0xf]
        %v3004 = vld [vmem:[%s916 + $0x2e0] sm:$0xf]
        %v3005 = vld [vmem:[%s916 + $0x2e4] sm:$0xf]
        %v3006 = vld [vmem:[%s916 + $0x2e8] sm:$0xf]
        %v3007 = vld [vmem:[%s916 + $0x2ec] sm:$0xf]
        %v3008 = vld [vmem:[%s916 + $0x2f0] sm:$0xf]
        %v3009 = vld [vmem:[%s916 + $0x2f4] sm:$0xf]
        %v3010 = vld [vmem:[%s916 + $0x2f8] sm:$0xf]
        %v3011 = vld [vmem:[%s916 + $0x2fc] sm:$0xf]
        %v3012 = vld [vmem:[%s916 + $0x300] sm:$0xf]
        %v3013 = vld [vmem:[%s916 + $0x304] sm:$0xf]
        %v3014 = vld [vmem:[%s916 + $0x308] sm:$0xf]
        %v3015 = vld [vmem:[%s916 + $0x30c] sm:$0xf]
        %v3016 = vld [vmem:[%s916 + $0x310] sm:$0xf]
        %v3017 = vld [vmem:[%s916 + $0x314] sm:$0xf]
        %v3018 = vld [vmem:[%s916 + $0x318] sm:$0xf]
        %v3019 = vld [vmem:[%s916 + $0x31c] sm:$0xf]
        %v3020 = vld [vmem:[%s916 + $0x320] sm:$0xf]
        %v3021 = vld [vmem:[%s916 + $0x324] sm:$0xf]
        %v3022 = vld [vmem:[%s916 + $0x328] sm:$0xf]
        %v3023 = vld [vmem:[%s916 + $0x32c] sm:$0xf]
        %v3024 = vld [vmem:[%s916 + $0x330] sm:$0xf]
        %v3025 = vld [vmem:[%s916 + $0x334] sm:$0xf]
        %v3026 = vld [vmem:[%s916 + $0x338] sm:$0xf]
        %v3027 = vld [vmem:[%s916 + $0x33c] sm:$0xf]
        %v3028 = vld [vmem:[%s916 + $0x340] sm:$0xf]
        %v3029 = vld [vmem:[%s916 + $0x344] sm:$0xf]
        %v3030 = vld [vmem:[%s916 + $0x348] sm:$0xf]
        %v3031 = vld [vmem:[%s916 + $0x34c] sm:$0xf]
        %v3032 = vld [vmem:[%s916 + $0x350] sm:$0xf]
        %v3033 = vld [vmem:[%s916 + $0x354] sm:$0xf]
        %v3034 = vld [vmem:[%s916 + $0x358] sm:$0xf]
        %v3035 = vld [vmem:[%s916 + $0x35c] sm:$0xf]
        %v3036 = vld [vmem:[%s916 + $0x360] sm:$0xf]
        %v3037 = vld [vmem:[%s916 + $0x364] sm:$0xf]
        %v3038 = vld [vmem:[%s916 + $0x368] sm:$0xf]
        %v3039 = vld [vmem:[%s916 + $0x36c] sm:$0xf]
        %v3040 = vld [vmem:[%s916 + $0x370] sm:$0xf]
        %v3041 = vld [vmem:[%s916 + $0x374] sm:$0xf]
        %v3042 = vld [vmem:[%s916 + $0x378] sm:$0xf]
        %v3043 = vld [vmem:[%s916 + $0x37c] sm:$0xf]
        %v3044 = vld [vmem:[%s916 + $0x380] sm:$0xf]
        %v3045 = vld [vmem:[%s916 + $0x384] sm:$0xf]
        %v3046 = vld [vmem:[%s916 + $0x388] sm:$0xf]
        %v3047 = vld [vmem:[%s916 + $0x38c] sm:$0xf]
        %v3048 = vld [vmem:[%s916 + $0x390] sm:$0xf]
        %v3049 = vld [vmem:[%s916 + $0x394] sm:$0xf]
        %v3050 = vld [vmem:[%s916 + $0x398] sm:$0xf]
        %v3051 = vld [vmem:[%s916 + $0x39c] sm:$0xf]
        %v3052 = vld [vmem:[%s916 + $0x3a0] sm:$0xf]
        %v3053 = vld [vmem:[%s916 + $0x3a4] sm:$0xf]
        %v3054 = vld [vmem:[%s916 + $0x3a8] sm:$0xf]
        %v3055 = vld [vmem:[%s916 + $0x3ac] sm:$0xf]
        %v3056 = vld [vmem:[%s916 + $0x3b0] sm:$0xf]
        %v3057 = vld [vmem:[%s916 + $0x3b4] sm:$0xf]
        %v3058 = vld [vmem:[%s916 + $0x3b8] sm:$0xf]
        %v3059 = vld [vmem:[%s916 + $0x3bc] sm:$0xf]
        %v3060 = vld [vmem:[%s916 + $0x3c0] sm:$0xf]
        %v3061 = vld [vmem:[%s916 + $0x3c4] sm:$0xf]
        %v3062 = vld [vmem:[%s916 + $0x3c8] sm:$0xf]
        %v3063 = vld [vmem:[%s916 + $0x3cc] sm:$0xf]
        %v3064 = vld [vmem:[%s916 + $0x3d0] sm:$0xf]
        %v3065 = vld [vmem:[%s916 + $0x3d4] sm:$0xf]
        %v3066 = vld [vmem:[%s916 + $0x3d8] sm:$0xf]
        %v3067 = vld [vmem:[%s916 + $0x3dc] sm:$0xf]
        %v3068 = vld [vmem:[%s916 + $0x3e0] sm:$0xf]
        %v3069 = vld [vmem:[%s916 + $0x3e4] sm:$0xf]
        %v3070 = vld [vmem:[%s916 + $0x3e8] sm:$0xf]
        %v3071 = vld [vmem:[%s916 + $0x3ec] sm:$0xf]
        %v3072 = vld [vmem:[%s916 + $0x3f0] sm:$0xf]
        %v3073 = vld [vmem:[%s916 + $0x3f4] sm:$0xf]
        %v3074 = vld [vmem:[%s916 + $0x3f8] sm:$0xf]
        %v3075 = vld [vmem:[%s916 + $0x3fc] sm:$0xf]
        %v3076 = vld [vmem:[%s919] sm:$0x1]
        %v3078 = vlaneseq
        %v3079 = vshrl.u32 %v3078, 7
        %v3080 = vsub.s32 0, %v3079
        %v3081 = vrot.slane %v3076, %v3080
        %v3339 = vunpack.c.l.b16 %v2820
        %v3340 = vunpack.c.l.b16 %v2821
        %v3341 = vunpack.c.l.b16 %v2822
        %v3342 = vunpack.c.l.b16 %v2823
        %v3343 = vunpack.c.l.b16 %v2824
        %v3344 = vunpack.c.l.b16 %v2825
        %v3345 = vunpack.c.l.b16 %v2826
        %v3346 = vunpack.c.l.b16 %v2827
        %v3347 = vunpack.c.l.b16 %v2828
        %v3348 = vunpack.c.l.b16 %v2829
        %v3349 = vunpack.c.l.b16 %v2830
        %v3350 = vunpack.c.l.b16 %v2831
        %v3351 = vunpack.c.l.b16 %v2832
        %v3352 = vunpack.c.l.b16 %v2833
        %v3353 = vunpack.c.l.b16 %v2834
        %v3354 = vunpack.c.l.b16 %v2835
        %v3355 = vunpack.c.l.b16 %v2836
        %v3356 = vunpack.c.l.b16 %v2837
        %v3357 = vunpack.c.l.b16 %v2838
        %v3358 = vunpack.c.l.b16 %v2839
        %v3359 = vunpack.c.l.b16 %v2840
        %v3360 = vunpack.c.l.b16 %v2841
        %v3361 = vunpack.c.l.b16 %v2842
        %v3362 = vunpack.c.l.b16 %v2843
        %v3363 = vunpack.c.l.b16 %v2844
        %v3364 = vunpack.c.l.b16 %v2845
        %v3365 = vunpack.c.l.b16 %v2846
        %v3366 = vunpack.c.l.b16 %v2847
        %v3367 = vunpack.c.l.b16 %v2848
        %v3368 = vunpack.c.l.b16 %v2849
        %v3369 = vunpack.c.l.b16 %v2850
        %v3370 = vunpack.c.l.b16 %v2851
        %v3371 = vunpack.c.l.b16 %v2852
        %v3372 = vunpack.c.l.b16 %v2853
        %v3373 = vunpack.c.l.b16 %v2854
        %v3374 = vunpack.c.l.b16 %v2855
        %v3375 = vunpack.c.l.b16 %v2856
        %v3376 = vunpack.c.l.b16 %v2857
        %v3377 = vunpack.c.l.b16 %v2858
        %v3378 = vunpack.c.l.b16 %v2859
        %v3379 = vunpack.c.l.b16 %v2860
        %v3380 = vunpack.c.l.b16 %v2861
        %v3381 = vunpack.c.l.b16 %v2862
        %v3382 = vunpack.c.l.b16 %v2863
        %v3383 = vunpack.c.l.b16 %v2864
        %v3384 = vunpack.c.l.b16 %v2865
        %v3385 = vunpack.c.l.b16 %v2866
        %v3386 = vunpack.c.l.b16 %v2867
        %v3387 = vunpack.c.l.b16 %v2868
        %v3388 = vunpack.c.l.b16 %v2869
        %v3389 = vunpack.c.l.b16 %v2870
        %v3390 = vunpack.c.l.b16 %v2871
        %v3391 = vunpack.c.l.b16 %v2872
        %v3392 = vunpack.c.l.b16 %v2873
        %v3393 = vunpack.c.l.b16 %v2874
        %v3394 = vunpack.c.l.b16 %v2875
        %v3395 = vunpack.c.l.b16 %v2876
        %v3396 = vunpack.c.l.b16 %v2877
        %v3397 = vunpack.c.l.b16 %v2878
        %v3398 = vunpack.c.l.b16 %v2879
        %v3399 = vunpack.c.l.b16 %v2880
        %v3400 = vunpack.c.l.b16 %v2881
        %v3401 = vunpack.c.l.b16 %v2882
        %v3402 = vunpack.c.l.b16 %v2883
        %v3403 = vunpack.c.l.b16 %v2884
        %v3404 = vunpack.c.l.b16 %v2885
        %v3405 = vunpack.c.l.b16 %v2886
        %v3406 = vunpack.c.l.b16 %v2887
        %v3407 = vunpack.c.l.b16 %v2888
        %v3408 = vunpack.c.l.b16 %v2889
        %v3409 = vunpack.c.l.b16 %v2890
        %v3410 = vunpack.c.l.b16 %v2891
        %v3411 = vunpack.c.l.b16 %v2892
        %v3412 = vunpack.c.l.b16 %v2893
        %v3413 = vunpack.c.l.b16 %v2894
        %v3414 = vunpack.c.l.b16 %v2895
        %v3415 = vunpack.c.l.b16 %v2896
        %v3416 = vunpack.c.l.b16 %v2897
        %v3417 = vunpack.c.l.b16 %v2898
        %v3418 = vunpack.c.l.b16 %v2899
        %v3419 = vunpack.c.l.b16 %v2900
        %v3420 = vunpack.c.l.b16 %v2901
        %v3421 = vunpack.c.l.b16 %v2902
        %v3422 = vunpack.c.l.b16 %v2903
        %v3423 = vunpack.c.l.b16 %v2904
        %v3424 = vunpack.c.l.b16 %v2905
        %v3425 = vunpack.c.l.b16 %v2906
        %v3426 = vunpack.c.l.b16 %v2907
        %v3427 = vunpack.c.l.b16 %v2908
        %v3428 = vunpack.c.l.b16 %v2909
        %v3429 = vunpack.c.l.b16 %v2910
        %v3430 = vunpack.c.l.b16 %v2911
        %v3431 = vunpack.c.l.b16 %v2912
        %v3432 = vunpack.c.l.b16 %v2913
        %v3433 = vunpack.c.l.b16 %v2914
        %v3434 = vunpack.c.l.b16 %v2915
        %v3435 = vunpack.c.l.b16 %v2916
        %v3436 = vunpack.c.l.b16 %v2917
        %v3437 = vunpack.c.l.b16 %v2918
        %v3438 = vunpack.c.l.b16 %v2919
        %v3439 = vunpack.c.l.b16 %v2920
        %v3440 = vunpack.c.l.b16 %v2921
        %v3441 = vunpack.c.l.b16 %v2922
        %v3442 = vunpack.c.l.b16 %v2923
        %v3443 = vunpack.c.l.b16 %v2924
        %v3444 = vunpack.c.l.b16 %v2925
        %v3445 = vunpack.c.l.b16 %v2926
        %v3446 = vunpack.c.l.b16 %v2927
        %v3447 = vunpack.c.l.b16 %v2928
        %v3448 = vunpack.c.l.b16 %v2929
        %v3449 = vunpack.c.l.b16 %v2930
        %v3450 = vunpack.c.l.b16 %v2931
        %v3451 = vunpack.c.l.b16 %v2932
        %v3452 = vunpack.c.l.b16 %v2933
        %v3453 = vunpack.c.l.b16 %v2934
        %v3454 = vunpack.c.l.b16 %v2935
        %v3455 = vunpack.c.l.b16 %v2936
        %v3456 = vunpack.c.l.b16 %v2937
        %v3457 = vunpack.c.l.b16 %v2938
        %v3458 = vunpack.c.l.b16 %v2939
        %v3459 = vunpack.c.l.b16 %v2940
        %v3460 = vunpack.c.l.b16 %v2941
        %v3461 = vunpack.c.l.b16 %v2942
        %v3462 = vunpack.c.l.b16 %v2943
        %v3463 = vunpack.c.l.b16 %v2944
        %v3464 = vunpack.c.l.b16 %v2945
        %v3465 = vunpack.c.l.b16 %v2946
        %v3466 = vunpack.c.l.b16 %v2947
        %v3467 = vunpack.c.l.b16 %v2948
        %v3468 = vunpack.c.l.b16 %v2949
        %v3469 = vunpack.c.l.b16 %v2950
        %v3470 = vunpack.c.l.b16 %v2951
        %v3471 = vunpack.c.l.b16 %v2952
        %v3472 = vunpack.c.l.b16 %v2953
        %v3473 = vunpack.c.l.b16 %v2954
        %v3474 = vunpack.c.l.b16 %v2955
        %v3475 = vunpack.c.l.b16 %v2956
        %v3476 = vunpack.c.l.b16 %v2957
        %v3477 = vunpack.c.l.b16 %v2958
        %v3478 = vunpack.c.l.b16 %v2959
        %v3479 = vunpack.c.l.b16 %v2960
        %v3480 = vunpack.c.l.b16 %v2961
        %v3481 = vunpack.c.l.b16 %v2962
        %v3482 = vunpack.c.l.b16 %v2963
        %v3483 = vunpack.c.l.b16 %v2964
        %v3484 = vunpack.c.l.b16 %v2965
        %v3485 = vunpack.c.l.b16 %v2966
        %v3486 = vunpack.c.l.b16 %v2967
        %v3487 = vunpack.c.l.b16 %v2968
        %v3488 = vunpack.c.l.b16 %v2969
        %v3489 = vunpack.c.l.b16 %v2970
        %v3490 = vunpack.c.l.b16 %v2971
        %v3491 = vunpack.c.l.b16 %v2972
        %v3492 = vunpack.c.l.b16 %v2973
        %v3493 = vunpack.c.l.b16 %v2974
        %v3494 = vunpack.c.l.b16 %v2975
        %v3495 = vunpack.c.l.b16 %v2976
        %v3496 = vunpack.c.l.b16 %v2977
        %v3497 = vunpack.c.l.b16 %v2978
        %v3498 = vunpack.c.l.b16 %v2979
        %v3499 = vunpack.c.l.b16 %v2980
        %v3500 = vunpack.c.l.b16 %v2981
        %v3501 = vunpack.c.l.b16 %v2982
        %v3502 = vunpack.c.l.b16 %v2983
        %v3503 = vunpack.c.l.b16 %v2984
        %v3504 = vunpack.c.l.b16 %v2985
        %v3505 = vunpack.c.l.b16 %v2986
        %v3506 = vunpack.c.l.b16 %v2987
        %v3507 = vunpack.c.l.b16 %v2988
        %v3508 = vunpack.c.l.b16 %v2989
        %v3509 = vunpack.c.l.b16 %v2990
        %v3510 = vunpack.c.l.b16 %v2991
        %v3511 = vunpack.c.l.b16 %v2992
        %v3512 = vunpack.c.l.b16 %v2993
        %v3513 = vunpack.c.l.b16 %v2994
        %v3514 = vunpack.c.l.b16 %v2995
        %v3515 = vunpack.c.l.b16 %v2996
        %v3516 = vunpack.c.l.b16 %v2997
        %v3517 = vunpack.c.l.b16 %v2998
        %v3518 = vunpack.c.l.b16 %v2999
        %v3519 = vunpack.c.l.b16 %v3000
        %v3520 = vunpack.c.l.b16 %v3001
        %v3521 = vunpack.c.l.b16 %v3002
        %v3522 = vunpack.c.l.b16 %v3003
        %v3523 = vunpack.c.l.b16 %v3004
        %v3524 = vunpack.c.l.b16 %v3005
        %v3525 = vunpack.c.l.b16 %v3006
        %v3526 = vunpack.c.l.b16 %v3007
        %v3527 = vunpack.c.l.b16 %v3008
        %v3528 = vunpack.c.l.b16 %v3009
        %v3529 = vunpack.c.l.b16 %v3010
        %v3530 = vunpack.c.l.b16 %v3011
        %v3531 = vunpack.c.l.b16 %v3012
        %v3532 = vunpack.c.l.b16 %v3013
        %v3533 = vunpack.c.l.b16 %v3014
        %v3534 = vunpack.c.l.b16 %v3015
        %v3535 = vunpack.c.l.b16 %v3016
        %v3536 = vunpack.c.l.b16 %v3017
        %v3537 = vunpack.c.l.b16 %v3018
        %v3538 = vunpack.c.l.b16 %v3019
        %v3539 = vunpack.c.l.b16 %v3020
        %v3540 = vunpack.c.l.b16 %v3021
        %v3541 = vunpack.c.l.b16 %v3022
        %v3542 = vunpack.c.l.b16 %v3023
        %v3543 = vunpack.c.l.b16 %v3024
        %v3544 = vunpack.c.l.b16 %v3025
        %v3545 = vunpack.c.l.b16 %v3026
        %v3546 = vunpack.c.l.b16 %v3027
        %v3547 = vunpack.c.l.b16 %v3028
        %v3548 = vunpack.c.l.b16 %v3029
        %v3549 = vunpack.c.l.b16 %v3030
        %v3550 = vunpack.c.l.b16 %v3031
        %v3551 = vunpack.c.l.b16 %v3032
        %v3552 = vunpack.c.l.b16 %v3033
        %v3553 = vunpack.c.l.b16 %v3034
        %v3554 = vunpack.c.l.b16 %v3035
        %v3555 = vunpack.c.l.b16 %v3036
        %v3556 = vunpack.c.l.b16 %v3037
        %v3557 = vunpack.c.l.b16 %v3038
        %v3558 = vunpack.c.l.b16 %v3039
        %v3559 = vunpack.c.l.b16 %v3040
        %v3560 = vunpack.c.l.b16 %v3041
        %v3561 = vunpack.c.l.b16 %v3042
        %v3562 = vunpack.c.l.b16 %v3043
        %v3563 = vunpack.c.l.b16 %v3044
        %v3564 = vunpack.c.l.b16 %v3045
        %v3565 = vunpack.c.l.b16 %v3046
        %v3566 = vunpack.c.l.b16 %v3047
        %v3567 = vunpack.c.l.b16 %v3048
        %v3568 = vunpack.c.l.b16 %v3049
        %v3569 = vunpack.c.l.b16 %v3050
        %v3570 = vunpack.c.l.b16 %v3051
        %v3571 = vunpack.c.l.b16 %v3052
        %v3572 = vunpack.c.l.b16 %v3053
        %v3573 = vunpack.c.l.b16 %v3054
        %v3574 = vunpack.c.l.b16 %v3055
        %v3575 = vunpack.c.l.b16 %v3056
        %v3576 = vunpack.c.l.b16 %v3057
        %v3577 = vunpack.c.l.b16 %v3058
        %v3578 = vunpack.c.l.b16 %v3059
        %v3579 = vunpack.c.l.b16 %v3060
        %v3580 = vunpack.c.l.b16 %v3061
        %v3581 = vunpack.c.l.b16 %v3062
        %v3582 = vunpack.c.l.b16 %v3063
        %v3583 = vunpack.c.l.b16 %v3064
        %v3584 = vunpack.c.l.b16 %v3065
        %v3585 = vunpack.c.l.b16 %v3066
        %v3586 = vunpack.c.l.b16 %v3067
        %v3587 = vunpack.c.l.b16 %v3068
        %v3588 = vunpack.c.l.b16 %v3069
        %v3589 = vunpack.c.l.b16 %v3070
        %v3590 = vunpack.c.l.b16 %v3071
        %v3591 = vunpack.c.l.b16 %v3072
        %v3592 = vunpack.c.l.b16 %v3073
        %v3593 = vunpack.c.l.b16 %v3074
        %v3594 = vunpack.c.l.b16 %v3075
        %v3595 = vpack.c.b16 %v3340, %v3339
        %v3596 = vpack.c.b16 %v3342, %v3341
        %v3597 = vpack.c.b16 %v3344, %v3343
        %v3598 = vpack.c.b16 %v3346, %v3345
        %v3599 = vpack.c.b16 %v3348, %v3347
        %v3600 = vpack.c.b16 %v3350, %v3349
        %v3601 = vpack.c.b16 %v3352, %v3351
        %v3602 = vpack.c.b16 %v3354, %v3353
        %v3603 = vpack.c.b16 %v3356, %v3355
        %v3604 = vpack.c.b16 %v3358, %v3357
        %v3605 = vpack.c.b16 %v3360, %v3359
        %v3606 = vpack.c.b16 %v3362, %v3361
        %v3607 = vpack.c.b16 %v3364, %v3363
        %v3608 = vpack.c.b16 %v3366, %v3365
        %v3609 = vpack.c.b16 %v3368, %v3367
        %v3610 = vpack.c.b16 %v3370, %v3369
        %v3611 = vpack.c.b16 %v3372, %v3371
        %v3612 = vpack.c.b16 %v3374, %v3373
        %v3613 = vpack.c.b16 %v3376, %v3375
        %v3614 = vpack.c.b16 %v3378, %v3377
        %v3615 = vpack.c.b16 %v3380, %v3379
        %v3616 = vpack.c.b16 %v3382, %v3381
        %v3617 = vpack.c.b16 %v3384, %v3383
        %v3618 = vpack.c.b16 %v3386, %v3385
        %v3619 = vpack.c.b16 %v3388, %v3387
        %v3620 = vpack.c.b16 %v3390, %v3389
        %v3621 = vpack.c.b16 %v3392, %v3391
        %v3622 = vpack.c.b16 %v3394, %v3393
        %v3623 = vpack.c.b16 %v3396, %v3395
        %v3624 = vpack.c.b16 %v3398, %v3397
        %v3625 = vpack.c.b16 %v3400, %v3399
        %v3626 = vpack.c.b16 %v3402, %v3401
        %v3627 = vpack.c.b16 %v3404, %v3403
        %v3628 = vpack.c.b16 %v3406, %v3405
        %v3629 = vpack.c.b16 %v3408, %v3407
        %v3630 = vpack.c.b16 %v3410, %v3409
        %v3631 = vpack.c.b16 %v3412, %v3411
        %v3632 = vpack.c.b16 %v3414, %v3413
        %v3633 = vpack.c.b16 %v3416, %v3415
        %v3634 = vpack.c.b16 %v3418, %v3417
        %v3635 = vpack.c.b16 %v3420, %v3419
        %v3636 = vpack.c.b16 %v3422, %v3421
        %v3637 = vpack.c.b16 %v3424, %v3423
        %v3638 = vpack.c.b16 %v3426, %v3425
        %v3639 = vpack.c.b16 %v3428, %v3427
        %v3640 = vpack.c.b16 %v3430, %v3429
        %v3641 = vpack.c.b16 %v3432, %v3431
        %v3642 = vpack.c.b16 %v3434, %v3433
        %v3643 = vpack.c.b16 %v3436, %v3435
        %v3644 = vpack.c.b16 %v3438, %v3437
        %v3645 = vpack.c.b16 %v3440, %v3439
        %v3646 = vpack.c.b16 %v3442, %v3441
        %v3647 = vpack.c.b16 %v3444, %v3443
        %v3648 = vpack.c.b16 %v3446, %v3445
        %v3649 = vpack.c.b16 %v3448, %v3447
        %v3650 = vpack.c.b16 %v3450, %v3449
        %v3651 = vpack.c.b16 %v3452, %v3451
        %v3652 = vpack.c.b16 %v3454, %v3453
        %v3653 = vpack.c.b16 %v3456, %v3455
        %v3654 = vpack.c.b16 %v3458, %v3457
        %v3655 = vpack.c.b16 %v3460, %v3459
        %v3656 = vpack.c.b16 %v3462, %v3461
        %v3657 = vpack.c.b16 %v3464, %v3463
        %v3658 = vpack.c.b16 %v3466, %v3465
        %v3659 = vpack.c.b16 %v3468, %v3467
        %v3660 = vpack.c.b16 %v3470, %v3469
        %v3661 = vpack.c.b16 %v3472, %v3471
        %v3662 = vpack.c.b16 %v3474, %v3473
        %v3663 = vpack.c.b16 %v3476, %v3475
        %v3664 = vpack.c.b16 %v3478, %v3477
        %v3665 = vpack.c.b16 %v3480, %v3479
        %v3666 = vpack.c.b16 %v3482, %v3481
        %v3667 = vpack.c.b16 %v3484, %v3483
        %v3668 = vpack.c.b16 %v3486, %v3485
        %v3669 = vpack.c.b16 %v3488, %v3487
        %v3670 = vpack.c.b16 %v3490, %v3489
        %v3671 = vpack.c.b16 %v3492, %v3491
        %v3672 = vpack.c.b16 %v3494, %v3493
        %v3673 = vpack.c.b16 %v3496, %v3495
        %v3674 = vpack.c.b16 %v3498, %v3497
        %v3675 = vpack.c.b16 %v3500, %v3499
        %v3676 = vpack.c.b16 %v3502, %v3501
        %v3677 = vpack.c.b16 %v3504, %v3503
        %v3678 = vpack.c.b16 %v3506, %v3505
        %v3679 = vpack.c.b16 %v3508, %v3507
        %v3680 = vpack.c.b16 %v3510, %v3509
        %v3681 = vpack.c.b16 %v3512, %v3511
        %v3682 = vpack.c.b16 %v3514, %v3513
        %v3683 = vpack.c.b16 %v3516, %v3515
        %v3684 = vpack.c.b16 %v3518, %v3517
        %v3685 = vpack.c.b16 %v3520, %v3519
        %v3686 = vpack.c.b16 %v3522, %v3521
        %v3687 = vpack.c.b16 %v3524, %v3523
        %v3688 = vpack.c.b16 %v3526, %v3525
        %v3689 = vpack.c.b16 %v3528, %v3527
        %v3690 = vpack.c.b16 %v3530, %v3529
        %v3691 = vpack.c.b16 %v3532, %v3531
        %v3692 = vpack.c.b16 %v3534, %v3533
        %v3693 = vpack.c.b16 %v3536, %v3535
        %v3694 = vpack.c.b16 %v3538, %v3537
        %v3695 = vpack.c.b16 %v3540, %v3539
        %v3696 = vpack.c.b16 %v3542, %v3541
        %v3697 = vpack.c.b16 %v3544, %v3543
        %v3698 = vpack.c.b16 %v3546, %v3545
        %v3699 = vpack.c.b16 %v3548, %v3547
        %v3700 = vpack.c.b16 %v3550, %v3549
        %v3701 = vpack.c.b16 %v3552, %v3551
        %v3702 = vpack.c.b16 %v3554, %v3553
        %v3703 = vpack.c.b16 %v3556, %v3555
        %v3704 = vpack.c.b16 %v3558, %v3557
        %v3705 = vpack.c.b16 %v3560, %v3559
        %v3706 = vpack.c.b16 %v3562, %v3561
        %v3707 = vpack.c.b16 %v3564, %v3563
        %v3708 = vpack.c.b16 %v3566, %v3565
        %v3709 = vpack.c.b16 %v3568, %v3567
        %v3710 = vpack.c.b16 %v3570, %v3569
        %v3711 = vpack.c.b16 %v3572, %v3571
        %v3712 = vpack.c.b16 %v3574, %v3573
        %v3713 = vpack.c.b16 %v3576, %v3575
        %v3714 = vpack.c.b16 %v3578, %v3577
        %v3715 = vpack.c.b16 %v3580, %v3579
        %v3716 = vpack.c.b16 %v3582, %v3581
        %v3717 = vpack.c.b16 %v3584, %v3583
        %v3718 = vpack.c.b16 %v3586, %v3585
        %v3719 = vpack.c.b16 %v3588, %v3587
        %v3720 = vpack.c.b16 %v3590, %v3589
        %v3721 = vpack.c.b16 %v3592, %v3591
        %v3722 = vpack.c.b16 %v3594, %v3593
        %3851 = vmatprep.subr.bf16.mxu0 0
        %3852 = vmatpush1.bf16.msra.mxu0 %v3595
        %3853 = vmatprep.subr.bf16.mxu0 0
        %3854 = vmatpush1.bf16.msra.mxu0 %v3596
        %3855 = vmatprep.subr.bf16.mxu0 0
        %3856 = vmatpush1.bf16.msra.mxu0 %v3597
        %3857 = vmatprep.subr.bf16.mxu0 0
        %3858 = vmatpush1.bf16.msra.mxu0 %v3598
        %3859 = vmatprep.subr.bf16.mxu0 0
        %3860 = vmatpush1.bf16.msra.mxu0 %v3599
        %3861 = vmatprep.subr.bf16.mxu0 0
        %3862 = vmatpush1.bf16.msra.mxu0 %v3600
        %3863 = vmatprep.subr.bf16.mxu0 0
        %3864 = vmatpush1.bf16.msra.mxu0 %v3601
        %3865 = vmatprep.subr.bf16.mxu0 0
        %3866 = vmatpush1.bf16.msra.mxu0 %v3602
        %3867 = vmatprep.subr.bf16.mxu0 0
        %3868 = vmatpush1.bf16.msra.mxu0 %v3603
        %3869 = vmatprep.subr.bf16.mxu0 0
        %3870 = vmatpush1.bf16.msra.mxu0 %v3604
        %3871 = vmatprep.subr.bf16.mxu0 0
        %3872 = vmatpush1.bf16.msra.mxu0 %v3605
        %3873 = vmatprep.subr.bf16.mxu0 0
        %3874 = vmatpush1.bf16.msra.mxu0 %v3606
        %3875 = vmatprep.subr.bf16.mxu0 0
        %3876 = vmatpush1.bf16.msra.mxu0 %v3607
        %3877 = vmatprep.subr.bf16.mxu0 0
        %3878 = vmatpush1.bf16.msra.mxu0 %v3608
        %3879 = vmatprep.subr.bf16.mxu0 0
        %3880 = vmatpush1.bf16.msra.mxu0 %v3609
        %3881 = vmatprep.subr.bf16.mxu0 0
        %3882 = vmatpush1.bf16.msra.mxu0 %v3610
        %3883 = vmatprep.mubr.bf16.mxu0 %v2805
        %3884 = vmatmul.mubr.bf16.gmra.mrb[0].mxu0 %v2804
        %v3885 = vpop.f32.mrb[0].mxu0
        %v3886 = vadd.f32 %v3081, %v3885
        %v3887 = vpop.f32.mrb[0].mxu0
        %v3888 = vpop.f32.mrb[0].mxu0
        %v3889 = vadd.f32 %v3081, %v3888
        %v3890 = vpop.f32.mrb[0].mxu0
        %3891 = vdwg.mxu0
        %3892 = vmatprep.subr.bf16.mxu0 0
        %3893 = vmatpush1.bf16.msra.mxu0 %v3611
        %3894 = vmatprep.subr.bf16.mxu0 0
        %3895 = vmatpush1.bf16.msra.mxu0 %v3612
        %3896 = vmatprep.subr.bf16.mxu0 0
        %3897 = vmatpush1.bf16.msra.mxu0 %v3613
        %3898 = vmatprep.subr.bf16.mxu0 0
        %3899 = vmatpush1.bf16.msra.mxu0 %v3614
        %3900 = vmatprep.subr.bf16.mxu0 0
        %3901 = vmatpush1.bf16.msra.mxu0 %v3615
        %3902 = vmatprep.subr.bf16.mxu0 0
        %3903 = vmatpush1.bf16.msra.mxu0 %v3616
        %3904 = vmatprep.subr.bf16.mxu0 0
        %3905 = vmatpush1.bf16.msra.mxu0 %v3617
        %3906 = vmatprep.subr.bf16.mxu0 0
        %3907 = vmatpush1.bf16.msra.mxu0 %v3618
        %3908 = vmatprep.subr.bf16.mxu0 0
        %3909 = vmatpush1.bf16.msra.mxu0 %v3619
        %3910 = vmatprep.subr.bf16.mxu0 0
        %3911 = vmatpush1.bf16.msra.mxu0 %v3620
        %3912 = vmatprep.subr.bf16.mxu0 0
        %3913 = vmatpush1.bf16.msra.mxu0 %v3621
        %3914 = vmatprep.subr.bf16.mxu0 0
        %3915 = vmatpush1.bf16.msra.mxu0 %v3622
        %3916 = vmatprep.subr.bf16.mxu0 0
        %3917 = vmatpush1.bf16.msra.mxu0 %v3623
        %3918 = vmatprep.subr.bf16.mxu0 0
        %3919 = vmatpush1.bf16.msra.mxu0 %v3624
        %3920 = vmatprep.subr.bf16.mxu0 0
        %3921 = vmatpush1.bf16.msra.mxu0 %v3625
        %3922 = vmatprep.subr.bf16.mxu0 0
        %3923 = vmatpush1.bf16.msra.mxu0 %v3626
        %3924 = vmatprep.mubr.bf16.mxu0 %v2807
        %3925 = vmatmul.mubr.bf16.gmra.mrb[0].mxu0 %v2806
        %v3926 = vpop.f32.mrb[0].mxu0
        %v3927 = vadd.f32 %v3886, %v3926
        %v3928 = vpop.f32.mrb[0].mxu0
        %v3929 = vpop.f32.mrb[0].mxu0
        %v3930 = vadd.f32 %v3889, %v3929
        %v3931 = vpop.f32.mrb[0].mxu0
        %3932 = vdwg.mxu0
        %3933 = vmatprep.subr.bf16.mxu0 0
        %3934 = vmatpush1.bf16.msra.mxu0 %v3627
        %3935 = vmatprep.subr.bf16.mxu0 0
        %3936 = vmatpush1.bf16.msra.mxu0 %v3628
        %3937 = vmatprep.subr.bf16.mxu0 0
        %3938 = vmatpush1.bf16.msra.mxu0 %v3629
        %3939 = vmatprep.subr.bf16.mxu0 0
        %3940 = vmatpush1.bf16.msra.mxu0 %v3630
        %3941 = vmatprep.subr.bf16.mxu0 0
        %3942 = vmatpush1.bf16.msra.mxu0 %v3631
        %3943 = vmatprep.subr.bf16.mxu0 0
        %3944 = vmatpush1.bf16.msra.mxu0 %v3632
        %3945 = vmatprep.subr.bf16.mxu0 0
        %3946 = vmatpush1.bf16.msra.mxu0 %v3633
        %3947 = vmatprep.subr.bf16.mxu0 0
        %3948 = vmatpush1.bf16.msra.mxu0 %v3634
        %3949 = vmatprep.subr.bf16.mxu0 0
        %3950 = vmatpush1.bf16.msra.mxu0 %v3635
        %3951 = vmatprep.subr.bf16.mxu0 0
        %3952 = vmatpush1.bf16.msra.mxu0 %v3636
        %3953 = vmatprep.subr.bf16.mxu0 0
        %3954 = vmatpush1.bf16.msra.mxu0 %v3637
        %3955 = vmatprep.subr.bf16.mxu0 0
        %3956 = vmatpush1.bf16.msra.mxu0 %v3638
        %3957 = vmatprep.subr.bf16.mxu0 0
        %3958 = vmatpush1.bf16.msra.mxu0 %v3639
        %3959 = vmatprep.subr.bf16.mxu0 0
        %3960 = vmatpush1.bf16.msra.mxu0 %v3640
        %3961 = vmatprep.subr.bf16.mxu0 0
        %3962 = vmatpush1.bf16.msra.mxu0 %v3641
        %3963 = vmatprep.subr.bf16.mxu0 0
        %3964 = vmatpush1.bf16.msra.mxu0 %v3642
        %3965 = vmatprep.mubr.bf16.mxu0 %v2809
        %3966 = vmatmul.mubr.bf16.gmra.mrb[0].mxu0 %v2808
        %v3967 = vpop.f32.mrb[0].mxu0
        %v3968 = vadd.f32 %v3927, %v3967
        %v3969 = vpop.f32.mrb[0].mxu0
        %v3970 = vpop.f32.mrb[0].mxu0
        %v3971 = vadd.f32 %v3930, %v3970
        %v3972 = vpop.f32.mrb[0].mxu0
        %3973 = vdwg.mxu0
        %3974 = vmatprep.subr.bf16.mxu0 0
        %3975 = vmatpush1.bf16.msra.mxu0 %v3643
        %3976 = vmatprep.subr.bf16.mxu0 0
        %3977 = vmatpush1.bf16.msra.mxu0 %v3644
        %3978 = vmatprep.subr.bf16.mxu0 0
        %3979 = vmatpush1.bf16.msra.mxu0 %v3645
        %3980 = vmatprep.subr.bf16.mxu0 0
        %3981 = vmatpush1.bf16.msra.mxu0 %v3646
        %3982 = vmatprep.subr.bf16.mxu0 0
        %3983 = vmatpush1.bf16.msra.mxu0 %v3647
        %3984 = vmatprep.subr.bf16.mxu0 0
        %3985 = vmatpush1.bf16.msra.mxu0 %v3648
        %3986 = vmatprep.subr.bf16.mxu0 0
        %3987 = vmatpush1.bf16.msra.mxu0 %v3649
        %3988 = vmatprep.subr.bf16.mxu0 0
        %3989 = vmatpush1.bf16.msra.mxu0 %v3650
        %3990 = vmatprep.subr.bf16.mxu0 0
        %3991 = vmatpush1.bf16.msra.mxu0 %v3651
        %3992 = vmatprep.subr.bf16.mxu0 0
        %3993 = vmatpush1.bf16.msra.mxu0 %v3652
        %3994 = vmatprep.subr.bf16.mxu0 0
        %3995 = vmatpush1.bf16.msra.mxu0 %v3653
        %3996 = vmatprep.subr.bf16.mxu0 0
        %3997 = vmatpush1.bf16.msra.mxu0 %v3654
        %3998 = vmatprep.subr.bf16.mxu0 0
        %3999 = vmatpush1.bf16.msra.mxu0 %v3655
        %4000 = vmatprep.subr.bf16.mxu0 0
        %4001 = vmatpush1.bf16.msra.mxu0 %v3656
        %4002 = vmatprep.subr.bf16.mxu0 0
        %4003 = vmatpush1.bf16.msra.mxu0 %v3657
        %4004 = vmatprep.subr.bf16.mxu0 0
        %4005 = vmatpush1.bf16.msra.mxu0 %v3658
        %4006 = vmatprep.mubr.bf16.mxu0 %v2811
        %4007 = vmatmul.mubr.bf16.gmra.mrb[0].mxu0 %v2810
        %v4008 = vpop.f32.mrb[0].mxu0
        %v4009 = vadd.f32 %v3968, %v4008
        %v4010 = vpop.f32.mrb[0].mxu0
        %v4011 = vpop.f32.mrb[0].mxu0
        %v4012 = vadd.f32 %v3971, %v4011
        %v4013 = vpop.f32.mrb[0].mxu0
        %4014 = vdwg.mxu0
        %4015 = vmatprep.subr.bf16.mxu0 0
        %4016 = vmatpush1.bf16.msra.mxu0 %v3659
        %4017 = vmatprep.subr.bf16.mxu0 0
        %4018 = vmatpush1.bf16.msra.mxu0 %v3660
        %4019 = vmatprep.subr.bf16.mxu0 0
        %4020 = vmatpush1.bf16.msra.mxu0 %v3661
        %4021 = vmatprep.subr.bf16.mxu0 0
        %4022 = vmatpush1.bf16.msra.mxu0 %v3662
        %4023 = vmatprep.subr.bf16.mxu0 0
        %4024 = vmatpush1.bf16.msra.mxu0 %v3663
        %4025 = vmatprep.subr.bf16.mxu0 0
        %4026 = vmatpush1.bf16.msra.mxu0 %v3664
        %4027 = vmatprep.subr.bf16.mxu0 0
        %4028 = vmatpush1.bf16.msra.mxu0 %v3665
        %4029 = vmatprep.subr.bf16.mxu0 0
        %4030 = vmatpush1.bf16.msra.mxu0 %v3666
        %4031 = vmatprep.subr.bf16.mxu0 0
        %4032 = vmatpush1.bf16.msra.mxu0 %v3667
        %4033 = vmatprep.subr.bf16.mxu0 0
        %4034 = vmatpush1.bf16.msra.mxu0 %v3668
        %4035 = vmatprep.subr.bf16.mxu0 0
        %4036 = vmatpush1.bf16.msra.mxu0 %v3669
        %4037 = vmatprep.subr.bf16.mxu0 0
        %4038 = vmatpush1.bf16.msra.mxu0 %v3670
        %4039 = vmatprep.subr.bf16.mxu0 0
        %4040 = vmatpush1.bf16.msra.mxu0 %v3671
        %4041 = vmatprep.subr.bf16.mxu0 0
        %4042 = vmatpush1.bf16.msra.mxu0 %v3672
        %4043 = vmatprep.subr.bf16.mxu0 0
        %4044 = vmatpush1.bf16.msra.mxu0 %v3673
        %4045 = vmatprep.subr.bf16.mxu0 0
        %4046 = vmatpush1.bf16.msra.mxu0 %v3674
        %4047 = vmatprep.mubr.bf16.mxu0 %v2813
        %4048 = vmatmul.mubr.bf16.gmra.mrb[0].mxu0 %v2812
        %v4049 = vpop.f32.mrb[0].mxu0
        %v4050 = vadd.f32 %v4009, %v4049
        %v4051 = vpop.f32.mrb[0].mxu0
        %v4052 = vpop.f32.mrb[0].mxu0
        %v4053 = vadd.f32 %v4012, %v4052
        %v4054 = vpop.f32.mrb[0].mxu0
        %4055 = vdwg.mxu0
        %4056 = vmatprep.subr.bf16.mxu0 0
        %4057 = vmatpush1.bf16.msra.mxu0 %v3675
        %4058 = vmatprep.subr.bf16.mxu0 0
        %4059 = vmatpush1.bf16.msra.mxu0 %v3676
        %4060 = vmatprep.subr.bf16.mxu0 0
        %4061 = vmatpush1.bf16.msra.mxu0 %v3677
        %4062 = vmatprep.subr.bf16.mxu0 0
        %4063 = vmatpush1.bf16.msra.mxu0 %v3678
        %4064 = vmatprep.subr.bf16.mxu0 0
        %4065 = vmatpush1.bf16.msra.mxu0 %v3679
        %4066 = vmatprep.subr.bf16.mxu0 0
        %4067 = vmatpush1.bf16.msra.mxu0 %v3680
        %4068 = vmatprep.subr.bf16.mxu0 0
        %4069 = vmatpush1.bf16.msra.mxu0 %v3681
        %4070 = vmatprep.subr.bf16.mxu0 0
        %4071 = vmatpush1.bf16.msra.mxu0 %v3682
        %4072 = vmatprep.subr.bf16.mxu0 0
        %4073 = vmatpush1.bf16.msra.mxu0 %v3683
        %4074 = vmatprep.subr.bf16.mxu0 0
        %4075 = vmatpush1.bf16.msra.mxu0 %v3684
        %4076 = vmatprep.subr.bf16.mxu0 0
        %4077 = vmatpush1.bf16.msra.mxu0 %v3685
        %4078 = vmatprep.subr.bf16.mxu0 0
        %4079 = vmatpush1.bf16.msra.mxu0 %v3686
        %4080 = vmatprep.subr.bf16.mxu0 0
        %4081 = vmatpush1.bf16.msra.mxu0 %v3687
        %4082 = vmatprep.subr.bf16.mxu0 0
        %4083 = vmatpush1.bf16.msra.mxu0 %v3688
        %4084 = vmatprep.subr.bf16.mxu0 0
        %4085 = vmatpush1.bf16.msra.mxu0 %v3689
        %4086 = vmatprep.subr.bf16.mxu0 0
        %4087 = vmatpush1.bf16.msra.mxu0 %v3690
        %4088 = vmatprep.mubr.bf16.mxu0 %v2815
        %4089 = vmatmul.mubr.bf16.gmra.mrb[0].mxu0 %v2814
        %v4090 = vpop.f32.mrb[0].mxu0
        %v4091 = vadd.f32 %v4050, %v4090
        %v4092 = vpop.f32.mrb[0].mxu0
        %v4093 = vpop.f32.mrb[0].mxu0
        %v4094 = vadd.f32 %v4053, %v4093
        %v4095 = vpop.f32.mrb[0].mxu0
        %4096 = vdwg.mxu0
        %4097 = vmatprep.subr.bf16.mxu0 0
        %4098 = vmatpush1.bf16.msra.mxu0 %v3691
        %4099 = vmatprep.subr.bf16.mxu0 0
        %4100 = vmatpush1.bf16.msra.mxu0 %v3692
        %4101 = vmatprep.subr.bf16.mxu0 0
        %4102 = vmatpush1.bf16.msra.mxu0 %v3693
        %4103 = vmatprep.subr.bf16.mxu0 0
        %4104 = vmatpush1.bf16.msra.mxu0 %v3694
        %4105 = vmatprep.subr.bf16.mxu0 0
        %4106 = vmatpush1.bf16.msra.mxu0 %v3695
        %4107 = vmatprep.subr.bf16.mxu0 0
        %4108 = vmatpush1.bf16.msra.mxu0 %v3696
        %4109 = vmatprep.subr.bf16.mxu0 0
        %4110 = vmatpush1.bf16.msra.mxu0 %v3697
        %4111 = vmatprep.subr.bf16.mxu0 0
        %4112 = vmatpush1.bf16.msra.mxu0 %v3698
        %4113 = vmatprep.subr.bf16.mxu0 0
        %4114 = vmatpush1.bf16.msra.mxu0 %v3699
        %4115 = vmatprep.subr.bf16.mxu0 0
        %4116 = vmatpush1.bf16.msra.mxu0 %v3700
        %4117 = vmatprep.subr.bf16.mxu0 0
        %4118 = vmatpush1.bf16.msra.mxu0 %v3701
        %4119 = vmatprep.subr.bf16.mxu0 0
        %4120 = vmatpush1.bf16.msra.mxu0 %v3702
        %4121 = vmatprep.subr.bf16.mxu0 0
        %4122 = vmatpush1.bf16.msra.mxu0 %v3703
        %4123 = vmatprep.subr.bf16.mxu0 0
        %4124 = vmatpush1.bf16.msra.mxu0 %v3704
        %4125 = vmatprep.subr.bf16.mxu0 0
        %4126 = vmatpush1.bf16.msra.mxu0 %v3705
        %4127 = vmatprep.subr.bf16.mxu0 0
        %4128 = vmatpush1.bf16.msra.mxu0 %v3706
        %4129 = vmatprep.mubr.bf16.mxu0 %v2817
        %4130 = vmatmul.mubr.bf16.gmra.mrb[0].mxu0 %v2816
        %v4131 = vpop.f32.mrb[0].mxu0
        %v4132 = vadd.f32 %v4091, %v4131
        %v4133 = vpop.f32.mrb[0].mxu0
        %v4134 = vpop.f32.mrb[0].mxu0
        %v4135 = vadd.f32 %v4094, %v4134
        %v4136 = vpop.f32.mrb[0].mxu0
        %4137 = vdwg.mxu0
        %4138 = vmatprep.subr.bf16.mxu0 0
        %4139 = vmatpush1.bf16.msra.mxu0 %v3707
        %4140 = vmatprep.subr.bf16.mxu0 0
        %4141 = vmatpush1.bf16.msra.mxu0 %v3708
        %4142 = vmatprep.subr.bf16.mxu0 0
        %4143 = vmatpush1.bf16.msra.mxu0 %v3709
        %4144 = vmatprep.subr.bf16.mxu0 0
        %4145 = vmatpush1.bf16.msra.mxu0 %v3710
        %4146 = vmatprep.subr.bf16.mxu0 0
        %4147 = vmatpush1.bf16.msra.mxu0 %v3711
        %4148 = vmatprep.subr.bf16.mxu0 0
        %4149 = vmatpush1.bf16.msra.mxu0 %v3712
        %4150 = vmatprep.subr.bf16.mxu0 0
        %4151 = vmatpush1.bf16.msra.mxu0 %v3713
        %4152 = vmatprep.subr.bf16.mxu0 0
        %4153 = vmatpush1.bf16.msra.mxu0 %v3714
        %4154 = vmatprep.subr.bf16.mxu0 0
        %4155 = vmatpush1.bf16.msra.mxu0 %v3715
        %4156 = vmatprep.subr.bf16.mxu0 0
        %4157 = vmatpush1.bf16.msra.mxu0 %v3716
        %4158 = vmatprep.subr.bf16.mxu0 0
        %4159 = vmatpush1.bf16.msra.mxu0 %v3717
        %4160 = vmatprep.subr.bf16.mxu0 0
        %4161 = vmatpush1.bf16.msra.mxu0 %v3718
        %4162 = vmatprep.subr.bf16.mxu0 0
        %4163 = vmatpush1.bf16.msra.mxu0 %v3719
        %4164 = vmatprep.subr.bf16.mxu0 0
        %4165 = vmatpush1.bf16.msra.mxu0 %v3720
        %4166 = vmatprep.subr.bf16.mxu0 0
        %4167 = vmatpush1.bf16.msra.mxu0 %v3721
        %4168 = vmatprep.subr.bf16.mxu0 0
        %4169 = vmatpush1.bf16.msra.mxu0 %v3722
        %4170 = vmatprep.mubr.bf16.mxu0 %v2819
        %4171 = vmatmul.mubr.bf16.gmra.mrb[0].mxu0 %v2818
        %v4172 = vpop.f32.mrb[0].mxu0
        %v4173 = vadd.f32 %v4132, %v4172
        %v4174 = vpop.f32.mrb[0].mxu0
        %v4175 = vpop.f32.mrb[0].mxu0
        %v4176 = vadd.f32 %v4135, %v4175
        %v4177 = vpop.f32.mrb[0].mxu0
        %4178 = vdwg.mxu0
        %v4179 = vadd.f32 %v2146, %v4173
        %v4180 = vadd.f32 %v2147, %v4176
        %v4181 = vld [vmem:[%s922] sm:$0x1]
        %v4182 = vld [vmem:[%s925] sm:$0x1]
        %v4183 = vsel %vm1072, %v4179, 0.0
        %4184 = vadd.xlane.f32.xlu0 %v4183
        %v4185 = vpop.xlane.xlu0 %4184
        %v4186 = vsel %vm1072, %v4180, 0.0
        %4187 = vadd.xlane.f32.xlu0 %v4186
        %v4188 = vpop.xlane.xlu0 %4187
        %v4189 = vmul.f32 %v4185, %v2111
        %v4190 = vmul.f32 %v4188, %v2111
        %v4191 = vsub.f32 %v4179, %v4189
        %v4192 = vsub.f32 %v4180, %v4190
        %v4193 = vmul.f32 %v4191, %v4191
        %v4194 = vmul.f32 %v4192, %v4192
        %v4195 = vsel %vm1072, %v4193, 0.0
        %4196 = vadd.xlane.f32.xlu0 %v4195
        %v4197 = vpop.xlane.xlu0 %4196
        %v4198 = vsel %vm1072, %v4194, 0.0
        %4199 = vadd.xlane.f32.xlu0 %v4198
        %v4200 = vpop.xlane.xlu0 %4199
        %v4201 = vmul.f32 %v4197, %v2111
        %v4202 = vmul.f32 %v4200, %v2111
        %v4203 = vadd.f32 %v4201, 1e-05
        %v4204 = vadd.f32 %v4202, 1e-05
        %v4205 = vrsqrt.pop %v4203
        %v4206 = vrsqrt.pop %v4204
        %v4207 = vmul.f32 %v4191, %v4205
        %v4208 = vmul.f32 %v4192, %v4206
        %v4210 = vlaneseq
        %v4211 = vshrl.u32 %v4210, 7
        %v4212 = vsub.s32 0, %v4211
        %v4213 = vrot.slane %v4181, %v4212
        %v4215 = vmul.f32 %v4207, %v4213
        %v4216 = vmul.f32 %v4208, %v4213
        %v4218 = vlaneseq
        %v4219 = vshrl.u32 %v4218, 7
        %v4220 = vsub.s32 0, %v4219
        %v4221 = vrot.slane %v4182, %v4220
        %v4223 = vadd.f32 %v4215, %v4221
        %v4224 = vadd.f32 %v4216, %v4221
        %4225 = vst.msk [vmem:[#allocation2] sm:$0xff] %vm1072, %v4223
        %4226 = vst.msk [vmem:[#allocation2 + $0x8] sm:$0xff] %vm1072, %v4224
        %p4227 = scmp.eq.s32.totalorder %s37, 1
        // Predicated region
        $region125: #{tpu_custom_call.1} parent=119 // pred_check
          %p4228 = pneg %p4227
        $region126: #{tpu_custom_call.1} parent=119 // pred_check_branch
          %4230 = sbr.rel (%p4228) target = $region128
        $region127: #{tpu_custom_call.1} parent=119 // pred_region
          %v4231 = vpack.c.bf16 %v4223, %v4223
          %v4232 = vpack.c.bf16 %v4224, %v4224
          %v4233 = vld [vmem:[%s15] sm:$0xf]
          %v4234 = vld [vmem:[%s15 + $0x4] sm:$0xf]
          %v4235 = vld [vmem:[%s15 + $0x8] sm:$0xf]
          %v4236 = vld [vmem:[%s15 + $0xc] sm:$0xf]
          %v4237 = vld [vmem:[%s16] sm:$0x1]
          %v4239 = vlaneseq
          %v4240 = vshrl.u32 %v4239, 7
          %v4241 = vsub.s32 0, %v4240
          %v4242 = vrot.slane %v4237, %v4241
          %v4246 = vunpack.c.l.b16 %v4231
          %v4247 = vunpack.c.l.b16 %v4232
          %v4248 = vrot.slane %v4247, 7
          %vm4249 = vcmask 1041409
          %v4250 = vsel %vm4249, %v4248, %v4246
          %v4251 = vpack.c.b16 %v4250, %v4250
          %v4256 = vunpack.c.l.b16 %v4233
          %v4257 = vunpack.c.l.b16 %v4234
          %v4258 = vunpack.c.l.b16 %v4235
          %v4259 = vunpack.c.l.b16 %v4236
          %v4260 = vpack.c.b16 %v4257, %v4256
          %v4261 = vpack.c.b16 %v4259, %v4258
          %v4265 = vsel %vm1072, %v4251, 0
          %4267 = vmatprep.subr.bf16.mxu0 0
          %4268 = vmatpush1.bf16.msra.mxu0 %v4260
          %4269 = vmatprep.subr.bf16.mxu0 0
          %4270 = vmatpush1.bf16.msra.mxu0 %v4261
          %4271 = vmatprep.subr.bf16.mxu0 0
          %4272 = vmatpush1.bf16.msra.mxu0 0
          %4273 = vmatprep.subr.bf16.mxu0 0
          %4274 = vmatpush1.bf16.msra.mxu0 0
          %4275 = vmatprep.subr.bf16.mxu0 0
          %4276 = vmatpush1.bf16.msra.mxu0 0
          %4277 = vmatprep.subr.bf16.mxu0 0
          %4278 = vmatpush1.bf16.msra.mxu0 0
          %4279 = vmatprep.subr.bf16.mxu0 0
          %4280 = vmatpush1.bf16.msra.mxu0 0
          %4281 = vmatprep.subr.bf16.mxu0 0
          %4282 = vmatpush1.bf16.msra.mxu0 0
          %4283 = vmatprep.subr.bf16.mxu0 0
          %4284 = vmatpush1.bf16.msra.mxu0 0
          %4285 = vmatprep.subr.bf16.mxu0 0
          %4286 = vmatpush1.bf16.msra.mxu0 0
          %4287 = vmatprep.subr.bf16.mxu0 0
          %4288 = vmatpush1.bf16.msra.mxu0 0
          %4289 = vmatprep.subr.bf16.mxu0 0
          %4290 = vmatpush1.bf16.msra.mxu0 0
          %4291 = vmatprep.subr.bf16.mxu0 0
          %4292 = vmatpush1.bf16.msra.mxu0 0
          %4293 = vmatprep.subr.bf16.mxu0 0
          %4294 = vmatpush1.bf16.msra.mxu0 0
          %4295 = vmatprep.subr.bf16.mxu0 0
          %4296 = vmatpush1.bf16.msra.mxu0 0
          %4297 = vmatprep.subr.bf16.mxu0 0
          %4298 = vmatpush1.bf16.msra.mxu0 0
          %4299 = vmatprep.mubr.bf16.mxu0 0
          %4300 = vmatmul.mubr.bf16.gmra.mrb[0].mxu0 %v4265
          %v4301 = vpop.f32.mrb[0].mxu0
          %v4302 = vadd.f32 %v4242, %v4301
          %v4303 = vpop.f32.mrb[0].mxu0
          %v4304 = vpop.f32.mrb[0].mxu0
          %v4305 = vpop.f32.mrb[0].mxu0
          %4306 = vdwg.mxu0
          %v4307 = vld [vmem:[%s17] sm:$0x1]
          %v4308 = vld [vmem:[%s18] sm:$0x1]
          %vm4309 = vcmask 123904
          %v4310 = vsel %vm4309, %v4302, 0.0
          %4311 = vadd.xlane.f32.xlu0 %v4310
          %v4312 = vpop.xlane.xlu0 %4311
          %v4313 = vrcp.pop 16.0
          %v4314 = vmul.f32 %v4312, %v4313
          %v4315 = vsub.f32 %v4302, %v4314
          %v4316 = vmul.f32 %v4315, %v4315
          %v4317 = vsel %vm4309, %v4316, 0.0
          %4318 = vadd.xlane.f32.xlu0 %v4317
          %v4319 = vpop.xlane.xlu0 %4318
          %v4320 = vmul.f32 %v4319, %v4313
          %v4321 = vadd.f32 %v4320, 1e-05
          %v4322 = vrsqrt.pop %v4321
          %v4323 = vmul.f32 %v4315, %v4322
          %v4325 = vlaneseq
          %v4326 = vshrl.u32 %v4325, 7
          %v4327 = vsub.s32 0, %v4326
          %v4328 = vrot.slane %v4307, %v4327
          %v4330 = vmul.f32 %v4323, %v4328
          %v4332 = vlaneseq
          %v4333 = vshrl.u32 %v4332, 7
          %v4334 = vsub.s32 0, %v4333
          %v4335 = vrot.slane %v4308, %v4334
          %v4337 = vadd.f32 %v4330, %v4335
          %vm4338 = vcmp.ge.f32.partialorder %v4337, 0.0
          %v4339 = vmul.f32 %v4337, 0.01
          %v4340 = vsel %vm4338, %v4337, %v4339
          %v4341 = vpack.c.bf16 %v4340, %v4340
          %v4342 = vld [vmem:[%s19] sm:$0xf]
          %v4343 = vld [vmem:[%s19 + $0x4] sm:$0xf]
          %v4344 = vld [vmem:[%s20] sm:$0x1]
          %v4346 = vlaneseq
          %v4347 = vshrl.u32 %v4346, 7
          %v4348 = vsub.s32 0, %v4347
          %v4349 = vrot.slane %v4344, %v4348
          %v4353 = vunpack.c.l.b16 %v4342
          %v4354 = vunpack.c.l.b16 %v4343
          %v4355 = vpack.c.b16 %v4354, %v4353
          %v4358 = vsel %vm2027, %v4341, 0
          %4360 = vmatprep.subr.bf16.mxu0 0
          %4361 = vmatpush1.bf16.msra.mxu0 %v4355
          %4362 = vmatprep.subr.bf16.mxu0 0
          %4363 = vmatpush1.bf16.msra.mxu0 0
          %4364 = vmatprep.subr.bf16.mxu0 0
          %4365 = vmatpush1.bf16.msra.mxu0 0
          %4366 = vmatprep.subr.bf16.mxu0 0
          %4367 = vmatpush1.bf16.msra.mxu0 0
          %4368 = vmatprep.subr.bf16.mxu0 0
          %4369 = vmatpush1.bf16.msra.mxu0 0
          %4370 = vmatprep.subr.bf16.mxu0 0
          %4371 = vmatpush1.bf16.msra.mxu0 0
          %4372 = vmatprep.subr.bf16.mxu0 0
          %4373 = vmatpush1.bf16.msra.mxu0 0
          %4374 = vmatprep.subr.bf16.mxu0 0
          %4375 = vmatpush1.bf16.msra.mxu0 0
          %4376 = vmatprep.subr.bf16.mxu0 0
          %4377 = vmatpush1.bf16.msra.mxu0 0
          %4378 = vmatprep.subr.bf16.mxu0 0
          %4379 = vmatpush1.bf16.msra.mxu0 0
          %4380 = vmatprep.subr.bf16.mxu0 0
          %4381 = vmatpush1.bf16.msra.mxu0 0
          %4382 = vmatprep.subr.bf16.mxu0 0
          %4383 = vmatpush1.bf16.msra.mxu0 0
          %4384 = vmatprep.subr.bf16.mxu0 0
          %4385 = vmatpush1.bf16.msra.mxu0 0
          %4386 = vmatprep.subr.bf16.mxu0 0
          %4387 = vmatpush1.bf16.msra.mxu0 0
          %4388 = vmatprep.subr.bf16.mxu0 0
          %4389 = vmatpush1.bf16.msra.mxu0 0
          %4390 = vmatprep.subr.bf16.mxu0 0
          %4391 = vmatpush1.bf16.msra.mxu0 0
          %4392 = vmatprep.mubr.bf16.mxu0 0
          %4393 = vmatmul.mubr.bf16.gmra.mrb[0].mxu0 %v4358
          %v4394 = vpop.f32.mrb[0].mxu0
          %v4395 = vadd.f32 %v4349, %v4394
          %v4396 = vpop.f32.mrb[0].mxu0
          %v4397 = vpop.f32.mrb[0].mxu0
          %v4398 = vpop.f32.mrb[0].mxu0
          %4399 = vdwg.mxu0
          %v4400 = vld [vmem:[%s21] sm:$0x1]
          %v4401 = vld [vmem:[%s22] sm:$0x1]
          %vm4402 = vcmask 91136
          %v4403 = vsel %vm4402, %v4395, 0.0
          %4404 = vadd.xlane.f32.xlu0 %v4403
          %v4405 = vpop.xlane.xlu0 %4404
          %v4406 = vrcp.pop 12.0
          %v4407 = vmul.f32 %v4405, %v4406
          %v4408 = vsub.f32 %v4395, %v4407
          %v4409 = vmul.f32 %v4408, %v4408
          %v4410 = vsel %vm4402, %v4409, 0.0
          %4411 = vadd.xlane.f32.xlu0 %v4410
          %v4412 = vpop.xlane.xlu0 %4411
          %v4413 = vmul.f32 %v4412, %v4406
          %v4414 = vadd.f32 %v4413, 1e-05
          %v4415 = vrsqrt.pop %v4414
          %v4416 = vmul.f32 %v4408, %v4415
          %v4418 = vlaneseq
          %v4419 = vshrl.u32 %v4418, 7
          %v4420 = vsub.s32 0, %v4419
          %v4421 = vrot.slane %v4400, %v4420
          %v4423 = vmul.f32 %v4416, %v4421
          %v4425 = vlaneseq
          %v4426 = vshrl.u32 %v4425, 7
          %v4427 = vsub.s32 0, %v4426
          %v4428 = vrot.slane %v4401, %v4427
          %v4430 = vadd.f32 %v4423, %v4428
          %vm4431 = vcmp.ge.f32.partialorder %v4430, 0.0
          %v4432 = vmul.f32 %v4430, 0.01
          %v4433 = vsel %vm4431, %v4430, %v4432
          %v4434 = vpack.c.bf16 %v4433, %v4433
          %v4435 = vld [vmem:[%s23] sm:$0xf]
          %v4436 = vld [vmem:[%s23 + $0x4] sm:$0x3]
          %v4437 = vld [vmem:[%s24] sm:$0x1]
          %v4439 = vlaneseq
          %v4440 = vshrl.u32 %v4439, 7
          %v4441 = vsub.s32 0, %v4440
          %v4442 = vrot.slane %v4437, %v4441
          %v4446 = vunpack.c.l.b16 %v4435
          %v4447 = vunpack.c.l.b16 %v4436
          %v4448 = vpack.c.b16 %v4447, %v4446
          %vm4449 = vcmask 97280
          %v4451 = vsel %vm4449, %v4434, 0
          %vm4453 = vcmask 1045504
          %v4455 = vsel %vm4453, %v4448, 0
          %4457 = vmatprep.subr.bf16.mxu0 0
          %4458 = vmatpush1.bf16.msra.mxu0 %v4455
          %4459 = vmatprep.subr.bf16.mxu0 0
          %4460 = vmatpush1.bf16.msra.mxu0 0
          %4461 = vmatprep.subr.bf16.mxu0 0
          %4462 = vmatpush1.bf16.msra.mxu0 0
          %4463 = vmatprep.subr.bf16.mxu0 0
          %4464 = vmatpush1.bf16.msra.mxu0 0
          %4465 = vmatprep.subr.bf16.mxu0 0
          %4466 = vmatpush1.bf16.msra.mxu0 0
          %4467 = vmatprep.subr.bf16.mxu0 0
          %4468 = vmatpush1.bf16.msra.mxu0 0
          %4469 = vmatprep.subr.bf16.mxu0 0
          %4470 = vmatpush1.bf16.msra.mxu0 0
          %4471 = vmatprep.subr.bf16.mxu0 0
          %4472 = vmatpush1.bf16.msra.mxu0 0
          %4473 = vmatprep.subr.bf16.mxu0 0
          %4474 = vmatpush1.bf16.msra.mxu0 0
          %4475 = vmatprep.subr.bf16.mxu0 0
          %4476 = vmatpush1.bf16.msra.mxu0 0
          %4477 = vmatprep.subr.bf16.mxu0 0
          %4478 = vmatpush1.bf16.msra.mxu0 0
          %4479 = vmatprep.subr.bf16.mxu0 0
          %4480 = vmatpush1.bf16.msra.mxu0 0
          %4481 = vmatprep.subr.bf16.mxu0 0
          %4482 = vmatpush1.bf16.msra.mxu0 0
          %4483 = vmatprep.subr.bf16.mxu0 0
          %4484 = vmatpush1.bf16.msra.mxu0 0
          %4485 = vmatprep.subr.bf16.mxu0 0
          %4486 = vmatpush1.bf16.msra.mxu0 0
          %4487 = vmatprep.subr.bf16.mxu0 0
          %4488 = vmatpush1.bf16.msra.mxu0 0
          %4489 = vmatprep.mubr.bf16.mxu0 0
          %4490 = vmatmul.mubr.bf16.gmra.mrb[0].mxu0 %v4451
          %v4491 = vpop.f32.mrb[0].mxu0
          %v4492 = vadd.f32 %v4442, %v4491
          %v4493 = vpop.f32.mrb[0].mxu0
          %v4494 = vpop.f32.mrb[0].mxu0
          %v4495 = vpop.f32.mrb[0].mxu0
          %4496 = vdwg.mxu0
          %vm4497 = vcmask 41984
          %4498 = vst.msk [vmem:[#allocation3] sm:$0x3] %vm4497, %v4492
        $region128: #{tpu_custom_call.1} parent=119 // pred_fallthru
          _
        // Predicated region
        $region129: #{tpu_custom_call.1} parent=119 // pred_check
          %p4499 = pneg %p635
        $region130: #{tpu_custom_call.1} parent=119 // pred_check_branch
          %4501 = sbr.rel (%p4499) target = $region132
        $region131: #{tpu_custom_call.1} parent=119 // pred_region
          %s4503 = ssub.s32 32, 32
          %4504 = vsyncadd [#allocation4], %s4503
          %s4506 = sshll.u32 [#allocation3], 4
          %s4507 = int_to_ptr.vmem [resolvable:$true] %s4506
          %4509 = dma.vmem_to_hbm [thread:$0]  %s4507, 32, %s25, [#allocation4]
        $region132: #{tpu_custom_call.1} parent=119 // pred_fallthru
          _
        // Predicated region
        $region133: #{tpu_custom_call.1} parent=119 // pred_check
          %p4510 = pneg %p635
        $region134: #{tpu_custom_call.1} parent=119 // pred_check_branch
          %4512 = sbr.rel (%p4510) target = $region136
        $region135: #{tpu_custom_call.1} parent=119 // pred_region
          %4513 = dma.done [#allocation4], 32
        $region136: #{tpu_custom_call.1} parent=119 // pred_fallthru
          _
      $region120: #{tpu_custom_call.1} parent=5 // pred_fallthru
        _
      %p4514 = scmp.le.s32.totalorder 2, %s32
      // Predicated region
      $region137: #{tpu_custom_call.1} parent=5 // pred_check
        %p4515 = pneg %p4514
      $region138: #{tpu_custom_call.1} parent=5 // pred_check_branch
        %4517 = sbr.rel (%p4515) target = $region140
      $region139: #{tpu_custom_call.1} parent=5 // pred_region
        %s4518 = ssub.s32 %s32, 2
      $region140: #{tpu_custom_call.1} parent=5 // pred_fallthru
        _
    $region6: #{tpu_custom_call.1} parent=1 // loop_footer
      %s36 = sadd.s32 1, %s32
    $region7: #{tpu_custom_call.1} parent=1 // loop_footer_branch
      %31 = sbr.rel target = $region3
    $region8: #{tpu_custom_call.1} parent=1 // loop_exit
      _
    %4519 = vsyncpa [#allocation4], 1
    %s4520 = scalar_lea.sflag [#allocation4], 1
    %4521 = vsyncpa %s4520, 1

</llo_original>
